<compile_context>
chip_gen: v5e
topology: v5e:2x2
jax: 0.10.0
libtpu: 0.0.40
codegen_flags: <defaults>
</compile_context>

<pallas_src>
import jax
import jax.numpy as jnp
from jax.experimental import pallas as pl
from jax.experimental.pallas import tpu as pltpu


def word2vec_cbow_forward(context_word, emb_table, weight, bias, *, tv=512):
    """Forward pass of Word2VecCBOW.

    context_word: (B, C) integer indices
    emb_table:    (V, E) nn.Embedding.weight
    weight:       (V, E) nn.Linear.weight (PyTorch layout)
    bias:         (V,)   nn.Linear.bias
    returns:      (B, V) float32 scores
    """
    B, C = context_word.shape
    V, E = emb_table.shape
    BC = B * C

    # Lane-dense vocab tiling: TV a multiple of 128, vocab padded up to Vp.
    TV = max(128, ((min(tv, V) + 127) // 128) * 128)
    Vp = pl.cdiv(V, TV) * TV
    num_tiles = Vp // TV

    # Wrapper-side layout plumbing: W^T (E, Vp) so V sits on the lane axis,
    # bias as a (1, Vp) row.  Padding columns are zero (sliced off at the end).
    w_t = jnp.zeros((E, Vp), jnp.float32).at[:, :V].set(
        weight.astype(jnp.float32).T)
    bias2d = jnp.zeros((1, Vp), jnp.float32).at[:, :V].set(
        bias.astype(jnp.float32).reshape(1, V))
    ctx_flat = context_word.reshape(BC).astype(jnp.int32)
    emb_f32 = emb_table.astype(jnp.float32)

    inv_c = 1.0 / C

    def kernel(ctx_ref, emb_hbm, wt_ref, b_ref, out_ref, mean_ref, gbuf, gsem):
        j = pl.program_id(0)

        # Grid step 0: gather only the B*C needed embedding rows from HBM and
        # compute the context mean into a VMEM scratch that persists across
        # all vocab tiles.
        @pl.when(j == 0)
        def _():
            # TODO(synk): PyTorch nn.Embedding raises on out-of-range indices;
            # manual DMA has no bounds check, so we clamp instead.
            for i in range(BC):                       # static, fully unrolled
                idx = jnp.clip(ctx_ref[i], 0, V - 1)
                pltpu.make_async_copy(emb_hbm.at[pl.ds(idx, 1), :],
                                      gbuf.at[pl.ds(i, 1), :],
                                      gsem.at[i]).start()
            for i in range(BC):
                pltpu.make_async_copy(emb_hbm.at[pl.ds(0, 1), :],
                                      gbuf.at[pl.ds(i, 1), :],
                                      gsem.at[i]).wait()
            mean_ref[...] = gbuf[...].reshape(B, C, E).sum(axis=1) * inv_c

        # Every grid step: (B, E) @ (E, TV) on the MXU, bias folded into the
        # per-tile epilogue (lane-dense unmasked store).
        out_ref[...] = (
            jnp.dot(mean_ref[...], wt_ref[...],
                    preferred_element_type=jnp.float32)
            + b_ref[...])

    cost = pl.CostEstimate(
        flops=2 * B * E * Vp + BC * E,
        transcendentals=0,
        bytes_accessed=4 * (E * Vp + Vp + B * Vp + BC * E + BC))

    out_padded = pl.pallas_call(
        kernel,
        out_shape=jax.ShapeDtypeStruct((B, Vp), jnp.float32),
        grid_spec=pltpu.PrefetchScalarGridSpec(
            num_scalar_prefetch=1,                      # ctx indices -> SMEM
            grid=(num_tiles,),                          # stream vocab tiles
            in_specs=[
                pl.BlockSpec(memory_space=pl.ANY),          # emb table in HBM
                pl.BlockSpec((E, TV), lambda j, ctx: (0, j)),   # W^T tile
                pl.BlockSpec((1, TV), lambda j, ctx: (0, j)),   # bias tile
            ],
            out_specs=pl.BlockSpec((B, TV), lambda j, ctx: (0, j)),
            scratch_shapes=[
                pltpu.VMEM((B, E), jnp.float32),     # context mean (resident)
                pltpu.VMEM((BC, E), jnp.float32),    # gathered rows (step 0)
                pltpu.SemaphoreType.DMA((BC,)),
            ]),
        compiler_params=pltpu.CompilerParams(
            # step-0 gather + resident mean scratch => keep vocab axis
            # sequential; safe on v5e/v6e/v7x.
            dimension_semantics=("arbitrary",)),
        cost_estimate=cost,
    )(ctx_flat, emb_f32, w_t, bias2d)

    return out_padded if Vp == V else out_padded[:, :V]


if __name__ == "__main__":
    # Small shapes consistent with the module: batch 8, context window 4,
    # vocab 512, embedding 128 (lane-dense per the perf guidance).
    B, C = 8, 4
    V, E = 512, 128

    key = jax.random.PRNGKey(0)
    k_ctx, k_emb, k_w, k_b = jax.random.split(key, 4)

    context_word = jax.random.randint(k_ctx, (B, C), 0, V, dtype=jnp.int32)
    emb_table = jax.random.normal(k_emb, (V, E), dtype=jnp.float32)
    weight = jax.random.normal(k_w, (V, E), dtype=jnp.float32) * (1.0 / jnp.sqrt(E))
    bias = jax.random.normal(k_b, (V,), dtype=jnp.float32) * 0.01

    out = word2vec_cbow_forward(context_word, emb_table, weight, bias, tv=128)
    out = jax.block_until_ready(out)

    # Pure-JAX reference (high-precision matmul).  Tolerance leaves room for
    # MXU f32-via-bf16-pass differences at these magnitudes.
    mean_emb = emb_table[context_word].mean(axis=1)
    ref = jax.lax.dot_general(mean_emb, weight, (((1,), (1,)), ((), ())),
                              precision=jax.lax.Precision.HIGHEST) + bias
    assert out.shape == (B, V) and out.dtype == jnp.float32
    assert jnp.allclose(out, ref, atol=2e-2, rtol=1e-2), "mismatch vs reference"

    print("KERNEL_OK")
</pallas_src>

<mosaic_0001>
module attributes {stable_mosaic.version = 11 : i64} {
  func.func @kernel(%arg0: i32, %arg1: memref<32xi32, #tpu.memory_space<smem>>, %arg2: memref<512x128xf32, #tpu.memory_space<any>>, %arg3: memref<128x128xf32, #tpu.memory_space<vmem>>, %arg4: memref<1x128xf32, #tpu.memory_space<vmem>>, %arg5: memref<8x128xf32, #tpu.memory_space<vmem>>, %arg6: memref<8x128xf32, #tpu.memory_space<vmem>>, %arg7: memref<32x128xf32, #tpu.memory_space<vmem>>, %arg8: memref<32x!tpu.dma_semaphore, #tpu.memory_space<semaphore_mem>>) attributes {dimension_semantics = [#tpu.dimension_semantics<arbitrary>], iteration_bounds = array<i64: 4>, scalar_prefetch = 1 : i64, scratch_operands = 3 : i64, tpu.core_type = #tpu.core_type<tc>, window_params = [{}, {transform_indices = @transform_1, window_bounds = array<i64: 128, 128>}, {transform_indices = @transform_2, window_bounds = array<i64: 1, 128>}, {transform_indices = @transform_3, window_bounds = array<i64: 8, 128>}]} {
    %c0_i32 = arith.constant 0 : i32
    %0 = arith.cmpi eq, %arg0, %c0_i32 : i32
    %1 = arith.extui %0 : i1 to i32
    %c0_i32_0 = arith.constant 0 : i32
    %2 = arith.cmpi ne, %1, %c0_i32_0 : i32
    scf.if %2 {
      %c0_8 = arith.constant 0 : index
      %10 = memref.load %arg1[%c0_8] : memref<32xi32, #tpu.memory_space<smem>>
      %c0_i32_9 = arith.constant 0 : i32
      %c511_i32 = arith.constant 511 : i32
      %11 = arith.maxsi %c0_i32_9, %10 : i32
      %12 = arith.minsi %c511_i32, %11 : i32
      %c0_i32_10 = arith.constant 0 : i32
      %c0_i32_11 = arith.constant 0 : i32
      %13 = tpu.memref_slice %arg2[%12, %c0_i32_11] : memref<512x128xf32, #tpu.memory_space<any>> -> memref<1x128xf32, #tpu.memory_space<any>>
      %c0_i32_12 = arith.constant 0 : i32
      %c0_i32_13 = arith.constant 0 : i32
      %14 = tpu.memref_slice %arg7[%c0_i32_12, %c0_i32_13] : memref<32x128xf32, #tpu.memory_space<vmem>> -> memref<1x128xf32, #tpu.memory_space<vmem>>
      %15 = tpu.memref_slice %arg8[%c0_i32_10] : memref<32x!tpu.dma_semaphore, #tpu.memory_space<semaphore_mem>> -> memref<1x!tpu.dma_semaphore, #tpu.memory_space<semaphore_mem>>
      %16 = tpu.memref_squeeze %15 : memref<1x!tpu.dma_semaphore, #tpu.memory_space<semaphore_mem>> -> memref<!tpu.dma_semaphore, #tpu.memory_space<semaphore_mem>>
      tpu.enqueue_dma source(%13 : memref<1x128xf32, #tpu.memory_space<any>>) target(%14 : memref<1x128xf32, #tpu.memory_space<vmem>>) target_semaphore(%16 : memref<!tpu.dma_semaphore, #tpu.memory_space<semaphore_mem>>)
      %c1 = arith.constant 1 : index
      %17 = memref.load %arg1[%c1] : memref<32xi32, #tpu.memory_space<smem>>
      %c0_i32_14 = arith.constant 0 : i32
      %c511_i32_15 = arith.constant 511 : i32
      %18 = arith.maxsi %c0_i32_14, %17 : i32
      %19 = arith.minsi %c511_i32_15, %18 : i32
      %c1_i32 = arith.constant 1 : i32
      %c0_i32_16 = arith.constant 0 : i32
      %20 = tpu.memref_slice %arg2[%19, %c0_i32_16] : memref<512x128xf32, #tpu.memory_space<any>> -> memref<1x128xf32, #tpu.memory_space<any>>
      %c1_i32_17 = arith.constant 1 : i32
      %c0_i32_18 = arith.constant 0 : i32
      %21 = tpu.memref_slice %arg7[%c1_i32_17, %c0_i32_18] : memref<32x128xf32, #tpu.memory_space<vmem>> -> memref<1x128xf32, #tpu.memory_space<vmem>>
      %22 = tpu.memref_slice %arg8[%c1_i32] : memref<32x!tpu.dma_semaphore, #tpu.memory_space<semaphore_mem>> -> memref<1x!tpu.dma_semaphore, #tpu.memory_space<semaphore_mem>>
      %23 = tpu.memref_squeeze %22 : memref<1x!tpu.dma_semaphore, #tpu.memory_space<semaphore_mem>> -> memref<!tpu.dma_semaphore, #tpu.memory_space<semaphore_mem>>
      tpu.enqueue_dma source(%20 : memref<1x128xf32, #tpu.memory_space<any>>) target(%21 : memref<1x128xf32, #tpu.memory_space<vmem>>) target_semaphore(%23 : memref<!tpu.dma_semaphore, #tpu.memory_space<semaphore_mem>>)
      %c2 = arith.constant 2 : index
      %24 = memref.load %arg1[%c2] : memref<32xi32, #tpu.memory_space<smem>>
      %c0_i32_19 = arith.constant 0 : i32
      %c511_i32_20 = arith.constant 511 : i32
      %25 = arith.maxsi %c0_i32_19, %24 : i32
      %26 = arith.minsi %c511_i32_20, %25 : i32
      %c2_i32 = arith.constant 2 : i32
      %c0_i32_21 = arith.constant 0 : i32
      %27 = tpu.memref_slice %arg2[%26, %c0_i32_21] : memref<512x128xf32, #tpu.memory_space<any>> -> memref<1x128xf32, #tpu.memory_space<any>>
      %c2_i32_22 = arith.constant 2 : i32
      %c0_i32_23 = arith.constant 0 : i32
      %28 = tpu.memref_slice %arg7[%c2_i32_22, %c0_i32_23] : memref<32x128xf32, #tpu.memory_space<vmem>> -> memref<1x128xf32, #tpu.memory_space<vmem>>
      %29 = tpu.memref_slice %arg8[%c2_i32] : memref<32x!tpu.dma_semaphore, #tpu.memory_space<semaphore_mem>> -> memref<1x!tpu.dma_semaphore, #tpu.memory_space<semaphore_mem>>
      %30 = tpu.memref_squeeze %29 : memref<1x!tpu.dma_semaphore, #tpu.memory_space<semaphore_mem>> -> memref<!tpu.dma_semaphore, #tpu.memory_space<semaphore_mem>>
      tpu.enqueue_dma source(%27 : memref<1x128xf32, #tpu.memory_space<any>>) target(%28 : memref<1x128xf32, #tpu.memory_space<vmem>>) target_semaphore(%30 : memref<!tpu.dma_semaphore, #tpu.memory_space<semaphore_mem>>)
      %c3 = arith.constant 3 : index
      %31 = memref.load %arg1[%c3] : memref<32xi32, #tpu.memory_space<smem>>
      %c0_i32_24 = arith.constant 0 : i32
      %c511_i32_25 = arith.constant 511 : i32
      %32 = arith.maxsi %c0_i32_24, %31 : i32
      %33 = arith.minsi %c511_i32_25, %32 : i32
      %c3_i32 = arith.constant 3 : i32
      %c0_i32_26 = arith.constant 0 : i32
      %34 = tpu.memref_slice %arg2[%33, %c0_i32_26] : memref<512x128xf32, #tpu.memory_space<any>> -> memref<1x128xf32, #tpu.memory_space<any>>
      %c3_i32_27 = arith.constant 3 : i32
      %c0_i32_28 = arith.constant 0 : i32
      %35 = tpu.memref_slice %arg7[%c3_i32_27, %c0_i32_28] : memref<32x128xf32, #tpu.memory_space<vmem>> -> memref<1x128xf32, #tpu.memory_space<vmem>>
      %36 = tpu.memref_slice %arg8[%c3_i32] : memref<32x!tpu.dma_semaphore, #tpu.memory_space<semaphore_mem>> -> memref<1x!tpu.dma_semaphore, #tpu.memory_space<semaphore_mem>>
      %37 = tpu.memref_squeeze %36 : memref<1x!tpu.dma_semaphore, #tpu.memory_space<semaphore_mem>> -> memref<!tpu.dma_semaphore, #tpu.memory_space<semaphore_mem>>
      tpu.enqueue_dma source(%34 : memref<1x128xf32, #tpu.memory_space<any>>) target(%35 : memref<1x128xf32, #tpu.memory_space<vmem>>) target_semaphore(%37 : memref<!tpu.dma_semaphore, #tpu.memory_space<semaphore_mem>>)
      %c4 = arith.constant 4 : index
      %38 = memref.load %arg1[%c4] : memref<32xi32, #tpu.memory_space<smem>>
      %c0_i32_29 = arith.constant 0 : i32
      %c511_i32_30 = arith.constant 511 : i32
      %39 = arith.maxsi %c0_i32_29, %38 : i32
      %40 = arith.minsi %c511_i32_30, %39 : i32
      %c4_i32 = arith.constant 4 : i32
      %c0_i32_31 = arith.constant 0 : i32
      %41 = tpu.memref_slice %arg2[%40, %c0_i32_31] : memref<512x128xf32, #tpu.memory_space<any>> -> memref<1x128xf32, #tpu.memory_space<any>>
      %c4_i32_32 = arith.constant 4 : i32
      %c0_i32_33 = arith.constant 0 : i32
      %42 = tpu.memref_slice %arg7[%c4_i32_32, %c0_i32_33] : memref<32x128xf32, #tpu.memory_space<vmem>> -> memref<1x128xf32, #tpu.memory_space<vmem>>
      %43 = tpu.memref_slice %arg8[%c4_i32] : memref<32x!tpu.dma_semaphore, #tpu.memory_space<semaphore_mem>> -> memref<1x!tpu.dma_semaphore, #tpu.memory_space<semaphore_mem>>
      %44 = tpu.memref_squeeze %43 : memref<1x!tpu.dma_semaphore, #tpu.memory_space<semaphore_mem>> -> memref<!tpu.dma_semaphore, #tpu.memory_space<semaphore_mem>>
      tpu.enqueue_dma source(%41 : memref<1x128xf32, #tpu.memory_space<any>>) target(%42 : memref<1x128xf32, #tpu.memory_space<vmem>>) target_semaphore(%44 : memref<!tpu.dma_semaphore, #tpu.memory_space<semaphore_mem>>)
      %c5 = arith.constant 5 : index
      %45 = memref.load %arg1[%c5] : memref<32xi32, #tpu.memory_space<smem>>
      %c0_i32_34 = arith.constant 0 : i32
      %c511_i32_35 = arith.constant 511 : i32
      %46 = arith.maxsi %c0_i32_34, %45 : i32
      %47 = arith.minsi %c511_i32_35, %46 : i32
      %c5_i32 = arith.constant 5 : i32
      %c0_i32_36 = arith.constant 0 : i32
      %48 = tpu.memref_slice %arg2[%47, %c0_i32_36] : memref<512x128xf32, #tpu.memory_space<any>> -> memref<1x128xf32, #tpu.memory_space<any>>
      %c5_i32_37 = arith.constant 5 : i32
      %c0_i32_38 = arith.constant 0 : i32
      %49 = tpu.memref_slice %arg7[%c5_i32_37, %c0_i32_38] : memref<32x128xf32, #tpu.memory_space<vmem>> -> memref<1x128xf32, #tpu.memory_space<vmem>>
      %50 = tpu.memref_slice %arg8[%c5_i32] : memref<32x!tpu.dma_semaphore, #tpu.memory_space<semaphore_mem>> -> memref<1x!tpu.dma_semaphore, #tpu.memory_space<semaphore_mem>>
      %51 = tpu.memref_squeeze %50 : memref<1x!tpu.dma_semaphore, #tpu.memory_space<semaphore_mem>> -> memref<!tpu.dma_semaphore, #tpu.memory_space<semaphore_mem>>
      tpu.enqueue_dma source(%48 : memref<1x128xf32, #tpu.memory_space<any>>) target(%49 : memref<1x128xf32, #tpu.memory_space<vmem>>) target_semaphore(%51 : memref<!tpu.dma_semaphore, #tpu.memory_space<semaphore_mem>>)
      %c6 = arith.constant 6 : index
      %52 = memref.load %arg1[%c6] : memref<32xi32, #tpu.memory_space<smem>>
      %c0_i32_39 = arith.constant 0 : i32
      %c511_i32_40 = arith.constant 511 : i32
      %53 = arith.maxsi %c0_i32_39, %52 : i32
      %54 = arith.minsi %c511_i32_40, %53 : i32
      %c6_i32 = arith.constant 6 : i32
      %c0_i32_41 = arith.constant 0 : i32
      %55 = tpu.memref_slice %arg2[%54, %c0_i32_41] : memref<512x128xf32, #tpu.memory_space<any>> -> memref<1x128xf32, #tpu.memory_space<any>>
      %c6_i32_42 = arith.constant 6 : i32
      %c0_i32_43 = arith.constant 0 : i32
      %56 = tpu.memref_slice %arg7[%c6_i32_42, %c0_i32_43] : memref<32x128xf32, #tpu.memory_space<vmem>> -> memref<1x128xf32, #tpu.memory_space<vmem>>
      %57 = tpu.memref_slice %arg8[%c6_i32] : memref<32x!tpu.dma_semaphore, #tpu.memory_space<semaphore_mem>> -> memref<1x!tpu.dma_semaphore, #tpu.memory_space<semaphore_mem>>
      %58 = tpu.memref_squeeze %57 : memref<1x!tpu.dma_semaphore, #tpu.memory_space<semaphore_mem>> -> memref<!tpu.dma_semaphore, #tpu.memory_space<semaphore_mem>>
      tpu.enqueue_dma source(%55 : memref<1x128xf32, #tpu.memory_space<any>>) target(%56 : memref<1x128xf32, #tpu.memory_space<vmem>>) target_semaphore(%58 : memref<!tpu.dma_semaphore, #tpu.memory_space<semaphore_mem>>)
      %c7 = arith.constant 7 : index
      %59 = memref.load %arg1[%c7] : memref<32xi32, #tpu.memory_space<smem>>
      %c0_i32_44 = arith.constant 0 : i32
      %c511_i32_45 = arith.constant 511 : i32
      %60 = arith.maxsi %c0_i32_44, %59 : i32
      %61 = arith.minsi %c511_i32_45, %60 : i32
      %c7_i32 = arith.constant 7 : i32
      %c0_i32_46 = arith.constant 0 : i32
      %62 = tpu.memref_slice %arg2[%61, %c0_i32_46] : memref<512x128xf32, #tpu.memory_space<any>> -> memref<1x128xf32, #tpu.memory_space<any>>
      %c7_i32_47 = arith.constant 7 : i32
      %c0_i32_48 = arith.constant 0 : i32
      %63 = tpu.memref_slice %arg7[%c7_i32_47, %c0_i32_48] : memref<32x128xf32, #tpu.memory_space<vmem>> -> memref<1x128xf32, #tpu.memory_space<vmem>>
      %64 = tpu.memref_slice %arg8[%c7_i32] : memref<32x!tpu.dma_semaphore, #tpu.memory_space<semaphore_mem>> -> memref<1x!tpu.dma_semaphore, #tpu.memory_space<semaphore_mem>>
      %65 = tpu.memref_squeeze %64 : memref<1x!tpu.dma_semaphore, #tpu.memory_space<semaphore_mem>> -> memref<!tpu.dma_semaphore, #tpu.memory_space<semaphore_mem>>
      tpu.enqueue_dma source(%62 : memref<1x128xf32, #tpu.memory_space<any>>) target(%63 : memref<1x128xf32, #tpu.memory_space<vmem>>) target_semaphore(%65 : memref<!tpu.dma_semaphore, #tpu.memory_space<semaphore_mem>>)
      %c8 = arith.constant 8 : index
      %66 = memref.load %arg1[%c8] : memref<32xi32, #tpu.memory_space<smem>>
      %c0_i32_49 = arith.constant 0 : i32
      %c511_i32_50 = arith.constant 511 : i32
      %67 = arith.maxsi %c0_i32_49, %66 : i32
      %68 = arith.minsi %c511_i32_50, %67 : i32
      %c8_i32 = arith.constant 8 : i32
      %c0_i32_51 = arith.constant 0 : i32
      %69 = tpu.memref_slice %arg2[%68, %c0_i32_51] : memref<512x128xf32, #tpu.memory_space<any>> -> memref<1x128xf32, #tpu.memory_space<any>>
      %c8_i32_52 = arith.constant 8 : i32
      %c0_i32_53 = arith.constant 0 : i32
      %70 = tpu.memref_slice %arg7[%c8_i32_52, %c0_i32_53] : memref<32x128xf32, #tpu.memory_space<vmem>> -> memref<1x128xf32, #tpu.memory_space<vmem>>
      %71 = tpu.memref_slice %arg8[%c8_i32] : memref<32x!tpu.dma_semaphore, #tpu.memory_space<semaphore_mem>> -> memref<1x!tpu.dma_semaphore, #tpu.memory_space<semaphore_mem>>
      %72 = tpu.memref_squeeze %71 : memref<1x!tpu.dma_semaphore, #tpu.memory_space<semaphore_mem>> -> memref<!tpu.dma_semaphore, #tpu.memory_space<semaphore_mem>>
      tpu.enqueue_dma source(%69 : memref<1x128xf32, #tpu.memory_space<any>>) target(%70 : memref<1x128xf32, #tpu.memory_space<vmem>>) target_semaphore(%72 : memref<!tpu.dma_semaphore, #tpu.memory_space<semaphore_mem>>)
      %c9 = arith.constant 9 : index
      %73 = memref.load %arg1[%c9] : memref<32xi32, #tpu.memory_space<smem>>
      %c0_i32_54 = arith.constant 0 : i32
      %c511_i32_55 = arith.constant 511 : i32
      %74 = arith.maxsi %c0_i32_54, %73 : i32
      %75 = arith.minsi %c511_i32_55, %74 : i32
      %c9_i32 = arith.constant 9 : i32
      %c0_i32_56 = arith.constant 0 : i32
      %76 = tpu.memref_slice %arg2[%75, %c0_i32_56] : memref<512x128xf32, #tpu.memory_space<any>> -> memref<1x128xf32, #tpu.memory_space<any>>
      %c9_i32_57 = arith.constant 9 : i32
      %c0_i32_58 = arith.constant 0 : i32
      %77 = tpu.memref_slice %arg7[%c9_i32_57, %c0_i32_58] : memref<32x128xf32, #tpu.memory_space<vmem>> -> memref<1x128xf32, #tpu.memory_space<vmem>>
      %78 = tpu.memref_slice %arg8[%c9_i32] : memref<32x!tpu.dma_semaphore, #tpu.memory_space<semaphore_mem>> -> memref<1x!tpu.dma_semaphore, #tpu.memory_space<semaphore_mem>>
      %79 = tpu.memref_squeeze %78 : memref<1x!tpu.dma_semaphore, #tpu.memory_space<semaphore_mem>> -> memref<!tpu.dma_semaphore, #tpu.memory_space<semaphore_mem>>
      tpu.enqueue_dma source(%76 : memref<1x128xf32, #tpu.memory_space<any>>) target(%77 : memref<1x128xf32, #tpu.memory_space<vmem>>) target_semaphore(%79 : memref<!tpu.dma_semaphore, #tpu.memory_space<semaphore_mem>>)
      %c10 = arith.constant 10 : index
      %80 = memref.load %arg1[%c10] : memref<32xi32, #tpu.memory_space<smem>>
      %c0_i32_59 = arith.constant 0 : i32
      %c511_i32_60 = arith.constant 511 : i32
      %81 = arith.maxsi %c0_i32_59, %80 : i32
      %82 = arith.minsi %c511_i32_60, %81 : i32
      %c10_i32 = arith.constant 10 : i32
      %c0_i32_61 = arith.constant 0 : i32
      %83 = tpu.memref_slice %arg2[%82, %c0_i32_61] : memref<512x128xf32, #tpu.memory_space<any>> -> memref<1x128xf32, #tpu.memory_space<any>>
      %c10_i32_62 = arith.constant 10 : i32
      %c0_i32_63 = arith.constant 0 : i32
      %84 = tpu.memref_slice %arg7[%c10_i32_62, %c0_i32_63] : memref<32x128xf32, #tpu.memory_space<vmem>> -> memref<1x128xf32, #tpu.memory_space<vmem>>
      %85 = tpu.memref_slice %arg8[%c10_i32] : memref<32x!tpu.dma_semaphore, #tpu.memory_space<semaphore_mem>> -> memref<1x!tpu.dma_semaphore, #tpu.memory_space<semaphore_mem>>
      %86 = tpu.memref_squeeze %85 : memref<1x!tpu.dma_semaphore, #tpu.memory_space<semaphore_mem>> -> memref<!tpu.dma_semaphore, #tpu.memory_space<semaphore_mem>>
      tpu.enqueue_dma source(%83 : memref<1x128xf32, #tpu.memory_space<any>>) target(%84 : memref<1x128xf32, #tpu.memory_space<vmem>>) target_semaphore(%86 : memref<!tpu.dma_semaphore, #tpu.memory_space<semaphore_mem>>)
      %c11 = arith.constant 11 : index
      %87 = memref.load %arg1[%c11] : memref<32xi32, #tpu.memory_space<smem>>
      %c0_i32_64 = arith.constant 0 : i32
      %c511_i32_65 = arith.constant 511 : i32
      %88 = arith.maxsi %c0_i32_64, %87 : i32
      %89 = arith.minsi %c511_i32_65, %88 : i32
      %c11_i32 = arith.constant 11 : i32
      %c0_i32_66 = arith.constant 0 : i32
      %90 = tpu.memref_slice %arg2[%89, %c0_i32_66] : memref<512x128xf32, #tpu.memory_space<any>> -> memref<1x128xf32, #tpu.memory_space<any>>
      %c11_i32_67 = arith.constant 11 : i32
      %c0_i32_68 = arith.constant 0 : i32
      %91 = tpu.memref_slice %arg7[%c11_i32_67, %c0_i32_68] : memref<32x128xf32, #tpu.memory_space<vmem>> -> memref<1x128xf32, #tpu.memory_space<vmem>>
      %92 = tpu.memref_slice %arg8[%c11_i32] : memref<32x!tpu.dma_semaphore, #tpu.memory_space<semaphore_mem>> -> memref<1x!tpu.dma_semaphore, #tpu.memory_space<semaphore_mem>>
      %93 = tpu.memref_squeeze %92 : memref<1x!tpu.dma_semaphore, #tpu.memory_space<semaphore_mem>> -> memref<!tpu.dma_semaphore, #tpu.memory_space<semaphore_mem>>
      tpu.enqueue_dma source(%90 : memref<1x128xf32, #tpu.memory_space<any>>) target(%91 : memref<1x128xf32, #tpu.memory_space<vmem>>) target_semaphore(%93 : memref<!tpu.dma_semaphore, #tpu.memory_space<semaphore_mem>>)
      %c12 = arith.constant 12 : index
      %94 = memref.load %arg1[%c12] : memref<32xi32, #tpu.memory_space<smem>>
      %c0_i32_69 = arith.constant 0 : i32
      %c511_i32_70 = arith.constant 511 : i32
      %95 = arith.maxsi %c0_i32_69, %94 : i32
      %96 = arith.minsi %c511_i32_70, %95 : i32
      %c12_i32 = arith.constant 12 : i32
      %c0_i32_71 = arith.constant 0 : i32
      %97 = tpu.memref_slice %arg2[%96, %c0_i32_71] : memref<512x128xf32, #tpu.memory_space<any>> -> memref<1x128xf32, #tpu.memory_space<any>>
      %c12_i32_72 = arith.constant 12 : i32
      %c0_i32_73 = arith.constant 0 : i32
      %98 = tpu.memref_slice %arg7[%c12_i32_72, %c0_i32_73] : memref<32x128xf32, #tpu.memory_space<vmem>> -> memref<1x128xf32, #tpu.memory_space<vmem>>
      %99 = tpu.memref_slice %arg8[%c12_i32] : memref<32x!tpu.dma_semaphore, #tpu.memory_space<semaphore_mem>> -> memref<1x!tpu.dma_semaphore, #tpu.memory_space<semaphore_mem>>
      %100 = tpu.memref_squeeze %99 : memref<1x!tpu.dma_semaphore, #tpu.memory_space<semaphore_mem>> -> memref<!tpu.dma_semaphore, #tpu.memory_space<semaphore_mem>>
      tpu.enqueue_dma source(%97 : memref<1x128xf32, #tpu.memory_space<any>>) target(%98 : memref<1x128xf32, #tpu.memory_space<vmem>>) target_semaphore(%100 : memref<!tpu.dma_semaphore, #tpu.memory_space<semaphore_mem>>)
      %c13 = arith.constant 13 : index
      %101 = memref.load %arg1[%c13] : memref<32xi32, #tpu.memory_space<smem>>
      %c0_i32_74 = arith.constant 0 : i32
      %c511_i32_75 = arith.constant 511 : i32
      %102 = arith.maxsi %c0_i32_74, %101 : i32
      %103 = arith.minsi %c511_i32_75, %102 : i32
      %c13_i32 = arith.constant 13 : i32
      %c0_i32_76 = arith.constant 0 : i32
      %104 = tpu.memref_slice %arg2[%103, %c0_i32_76] : memref<512x128xf32, #tpu.memory_space<any>> -> memref<1x128xf32, #tpu.memory_space<any>>
      %c13_i32_77 = arith.constant 13 : i32
      %c0_i32_78 = arith.constant 0 : i32
      %105 = tpu.memref_slice %arg7[%c13_i32_77, %c0_i32_78] : memref<32x128xf32, #tpu.memory_space<vmem>> -> memref<1x128xf32, #tpu.memory_space<vmem>>
      %106 = tpu.memref_slice %arg8[%c13_i32] : memref<32x!tpu.dma_semaphore, #tpu.memory_space<semaphore_mem>> -> memref<1x!tpu.dma_semaphore, #tpu.memory_space<semaphore_mem>>
      %107 = tpu.memref_squeeze %106 : memref<1x!tpu.dma_semaphore, #tpu.memory_space<semaphore_mem>> -> memref<!tpu.dma_semaphore, #tpu.memory_space<semaphore_mem>>
      tpu.enqueue_dma source(%104 : memref<1x128xf32, #tpu.memory_space<any>>) target(%105 : memref<1x128xf32, #tpu.memory_space<vmem>>) target_semaphore(%107 : memref<!tpu.dma_semaphore, #tpu.memory_space<semaphore_mem>>)
      %c14 = arith.constant 14 : index
      %108 = memref.load %arg1[%c14] : memref<32xi32, #tpu.memory_space<smem>>
      %c0_i32_79 = arith.constant 0 : i32
      %c511_i32_80 = arith.constant 511 : i32
      %109 = arith.maxsi %c0_i32_79, %108 : i32
      %110 = arith.minsi %c511_i32_80, %109 : i32
      %c14_i32 = arith.constant 14 : i32
      %c0_i32_81 = arith.constant 0 : i32
      %111 = tpu.memref_slice %arg2[%110, %c0_i32_81] : memref<512x128xf32, #tpu.memory_space<any>> -> memref<1x128xf32, #tpu.memory_space<any>>
      %c14_i32_82 = arith.constant 14 : i32
      %c0_i32_83 = arith.constant 0 : i32
      %112 = tpu.memref_slice %arg7[%c14_i32_82, %c0_i32_83] : memref<32x128xf32, #tpu.memory_space<vmem>> -> memref<1x128xf32, #tpu.memory_space<vmem>>
      %113 = tpu.memref_slice %arg8[%c14_i32] : memref<32x!tpu.dma_semaphore, #tpu.memory_space<semaphore_mem>> -> memref<1x!tpu.dma_semaphore, #tpu.memory_space<semaphore_mem>>
      %114 = tpu.memref_squeeze %113 : memref<1x!tpu.dma_semaphore, #tpu.memory_space<semaphore_mem>> -> memref<!tpu.dma_semaphore, #tpu.memory_space<semaphore_mem>>
      tpu.enqueue_dma source(%111 : memref<1x128xf32, #tpu.memory_space<any>>) target(%112 : memref<1x128xf32, #tpu.memory_space<vmem>>) target_semaphore(%114 : memref<!tpu.dma_semaphore, #tpu.memory_space<semaphore_mem>>)
      %c15 = arith.constant 15 : index
      %115 = memref.load %arg1[%c15] : memref<32xi32, #tpu.memory_space<smem>>
      %c0_i32_84 = arith.constant 0 : i32
      %c511_i32_85 = arith.constant 511 : i32
      %116 = arith.maxsi %c0_i32_84, %115 : i32
      %117 = arith.minsi %c511_i32_85, %116 : i32
      %c15_i32 = arith.constant 15 : i32
      %c0_i32_86 = arith.constant 0 : i32
      %118 = tpu.memref_slice %arg2[%117, %c0_i32_86] : memref<512x128xf32, #tpu.memory_space<any>> -> memref<1x128xf32, #tpu.memory_space<any>>
      %c15_i32_87 = arith.constant 15 : i32
      %c0_i32_88 = arith.constant 0 : i32
      %119 = tpu.memref_slice %arg7[%c15_i32_87, %c0_i32_88] : memref<32x128xf32, #tpu.memory_space<vmem>> -> memref<1x128xf32, #tpu.memory_space<vmem>>
      %120 = tpu.memref_slice %arg8[%c15_i32] : memref<32x!tpu.dma_semaphore, #tpu.memory_space<semaphore_mem>> -> memref<1x!tpu.dma_semaphore, #tpu.memory_space<semaphore_mem>>
      %121 = tpu.memref_squeeze %120 : memref<1x!tpu.dma_semaphore, #tpu.memory_space<semaphore_mem>> -> memref<!tpu.dma_semaphore, #tpu.memory_space<semaphore_mem>>
      tpu.enqueue_dma source(%118 : memref<1x128xf32, #tpu.memory_space<any>>) target(%119 : memref<1x128xf32, #tpu.memory_space<vmem>>) target_semaphore(%121 : memref<!tpu.dma_semaphore, #tpu.memory_space<semaphore_mem>>)
      %c16 = arith.constant 16 : index
      %122 = memref.load %arg1[%c16] : memref<32xi32, #tpu.memory_space<smem>>
      %c0_i32_89 = arith.constant 0 : i32
      %c511_i32_90 = arith.constant 511 : i32
      %123 = arith.maxsi %c0_i32_89, %122 : i32
      %124 = arith.minsi %c511_i32_90, %123 : i32
      %c16_i32 = arith.constant 16 : i32
      %c0_i32_91 = arith.constant 0 : i32
      %125 = tpu.memref_slice %arg2[%124, %c0_i32_91] : memref<512x128xf32, #tpu.memory_space<any>> -> memref<1x128xf32, #tpu.memory_space<any>>
      %c16_i32_92 = arith.constant 16 : i32
      %c0_i32_93 = arith.constant 0 : i32
      %126 = tpu.memref_slice %arg7[%c16_i32_92, %c0_i32_93] : memref<32x128xf32, #tpu.memory_space<vmem>> -> memref<1x128xf32, #tpu.memory_space<vmem>>
      %127 = tpu.memref_slice %arg8[%c16_i32] : memref<32x!tpu.dma_semaphore, #tpu.memory_space<semaphore_mem>> -> memref<1x!tpu.dma_semaphore, #tpu.memory_space<semaphore_mem>>
      %128 = tpu.memref_squeeze %127 : memref<1x!tpu.dma_semaphore, #tpu.memory_space<semaphore_mem>> -> memref<!tpu.dma_semaphore, #tpu.memory_space<semaphore_mem>>
      tpu.enqueue_dma source(%125 : memref<1x128xf32, #tpu.memory_space<any>>) target(%126 : memref<1x128xf32, #tpu.memory_space<vmem>>) target_semaphore(%128 : memref<!tpu.dma_semaphore, #tpu.memory_space<semaphore_mem>>)
      %c17 = arith.constant 17 : index
      %129 = memref.load %arg1[%c17] : memref<32xi32, #tpu.memory_space<smem>>
      %c0_i32_94 = arith.constant 0 : i32
      %c511_i32_95 = arith.constant 511 : i32
      %130 = arith.maxsi %c0_i32_94, %129 : i32
      %131 = arith.minsi %c511_i32_95, %130 : i32
      %c17_i32 = arith.constant 17 : i32
      %c0_i32_96 = arith.constant 0 : i32
      %132 = tpu.memref_slice %arg2[%131, %c0_i32_96] : memref<512x128xf32, #tpu.memory_space<any>> -> memref<1x128xf32, #tpu.memory_space<any>>
      %c17_i32_97 = arith.constant 17 : i32
      %c0_i32_98 = arith.constant 0 : i32
      %133 = tpu.memref_slice %arg7[%c17_i32_97, %c0_i32_98] : memref<32x128xf32, #tpu.memory_space<vmem>> -> memref<1x128xf32, #tpu.memory_space<vmem>>
      %134 = tpu.memref_slice %arg8[%c17_i32] : memref<32x!tpu.dma_semaphore, #tpu.memory_space<semaphore_mem>> -> memref<1x!tpu.dma_semaphore, #tpu.memory_space<semaphore_mem>>
      %135 = tpu.memref_squeeze %134 : memref<1x!tpu.dma_semaphore, #tpu.memory_space<semaphore_mem>> -> memref<!tpu.dma_semaphore, #tpu.memory_space<semaphore_mem>>
      tpu.enqueue_dma source(%132 : memref<1x128xf32, #tpu.memory_space<any>>) target(%133 : memref<1x128xf32, #tpu.memory_space<vmem>>) target_semaphore(%135 : memref<!tpu.dma_semaphore, #tpu.memory_space<semaphore_mem>>)
      %c18 = arith.constant 18 : index
      %136 = memref.load %arg1[%c18] : memref<32xi32, #tpu.memory_space<smem>>
      %c0_i32_99 = arith.constant 0 : i32
      %c511_i32_100 = arith.constant 511 : i32
      %137 = arith.maxsi %c0_i32_99, %136 : i32
      %138 = arith.minsi %c511_i32_100, %137 : i32
      %c18_i32 = arith.constant 18 : i32
      %c0_i32_101 = arith.constant 0 : i32
      %139 = tpu.memref_slice %arg2[%138, %c0_i32_101] : memref<512x128xf32, #tpu.memory_space<any>> -> memref<1x128xf32, #tpu.memory_space<any>>
      %c18_i32_102 = arith.constant 18 : i32
      %c0_i32_103 = arith.constant 0 : i32
      %140 = tpu.memref_slice %arg7[%c18_i32_102, %c0_i32_103] : memref<32x128xf32, #tpu.memory_space<vmem>> -> memref<1x128xf32, #tpu.memory_space<vmem>>
      %141 = tpu.memref_slice %arg8[%c18_i32] : memref<32x!tpu.dma_semaphore, #tpu.memory_space<semaphore_mem>> -> memref<1x!tpu.dma_semaphore, #tpu.memory_space<semaphore_mem>>
      %142 = tpu.memref_squeeze %141 : memref<1x!tpu.dma_semaphore, #tpu.memory_space<semaphore_mem>> -> memref<!tpu.dma_semaphore, #tpu.memory_space<semaphore_mem>>
      tpu.enqueue_dma source(%139 : memref<1x128xf32, #tpu.memory_space<any>>) target(%140 : memref<1x128xf32, #tpu.memory_space<vmem>>) target_semaphore(%142 : memref<!tpu.dma_semaphore, #tpu.memory_space<semaphore_mem>>)
      %c19 = arith.constant 19 : index
      %143 = memref.load %arg1[%c19] : memref<32xi32, #tpu.memory_space<smem>>
      %c0_i32_104 = arith.constant 0 : i32
      %c511_i32_105 = arith.constant 511 : i32
      %144 = arith.maxsi %c0_i32_104, %143 : i32
      %145 = arith.minsi %c511_i32_105, %144 : i32
      %c19_i32 = arith.constant 19 : i32
      %c0_i32_106 = arith.constant 0 : i32
      %146 = tpu.memref_slice %arg2[%145, %c0_i32_106] : memref<512x128xf32, #tpu.memory_space<any>> -> memref<1x128xf32, #tpu.memory_space<any>>
      %c19_i32_107 = arith.constant 19 : i32
      %c0_i32_108 = arith.constant 0 : i32
      %147 = tpu.memref_slice %arg7[%c19_i32_107, %c0_i32_108] : memref<32x128xf32, #tpu.memory_space<vmem>> -> memref<1x128xf32, #tpu.memory_space<vmem>>
      %148 = tpu.memref_slice %arg8[%c19_i32] : memref<32x!tpu.dma_semaphore, #tpu.memory_space<semaphore_mem>> -> memref<1x!tpu.dma_semaphore, #tpu.memory_space<semaphore_mem>>
      %149 = tpu.memref_squeeze %148 : memref<1x!tpu.dma_semaphore, #tpu.memory_space<semaphore_mem>> -> memref<!tpu.dma_semaphore, #tpu.memory_space<semaphore_mem>>
      tpu.enqueue_dma source(%146 : memref<1x128xf32, #tpu.memory_space<any>>) target(%147 : memref<1x128xf32, #tpu.memory_space<vmem>>) target_semaphore(%149 : memref<!tpu.dma_semaphore, #tpu.memory_space<semaphore_mem>>)
      %c20 = arith.constant 20 : index
      %150 = memref.load %arg1[%c20] : memref<32xi32, #tpu.memory_space<smem>>
      %c0_i32_109 = arith.constant 0 : i32
      %c511_i32_110 = arith.constant 511 : i32
      %151 = arith.maxsi %c0_i32_109, %150 : i32
      %152 = arith.minsi %c511_i32_110, %151 : i32
      %c20_i32 = arith.constant 20 : i32
      %c0_i32_111 = arith.constant 0 : i32
      %153 = tpu.memref_slice %arg2[%152, %c0_i32_111] : memref<512x128xf32, #tpu.memory_space<any>> -> memref<1x128xf32, #tpu.memory_space<any>>
      %c20_i32_112 = arith.constant 20 : i32
      %c0_i32_113 = arith.constant 0 : i32
      %154 = tpu.memref_slice %arg7[%c20_i32_112, %c0_i32_113] : memref<32x128xf32, #tpu.memory_space<vmem>> -> memref<1x128xf32, #tpu.memory_space<vmem>>
      %155 = tpu.memref_slice %arg8[%c20_i32] : memref<32x!tpu.dma_semaphore, #tpu.memory_space<semaphore_mem>> -> memref<1x!tpu.dma_semaphore, #tpu.memory_space<semaphore_mem>>
      %156 = tpu.memref_squeeze %155 : memref<1x!tpu.dma_semaphore, #tpu.memory_space<semaphore_mem>> -> memref<!tpu.dma_semaphore, #tpu.memory_space<semaphore_mem>>
      tpu.enqueue_dma source(%153 : memref<1x128xf32, #tpu.memory_space<any>>) target(%154 : memref<1x128xf32, #tpu.memory_space<vmem>>) target_semaphore(%156 : memref<!tpu.dma_semaphore, #tpu.memory_space<semaphore_mem>>)
      %c21 = arith.constant 21 : index
      %157 = memref.load %arg1[%c21] : memref<32xi32, #tpu.memory_space<smem>>
      %c0_i32_114 = arith.constant 0 : i32
      %c511_i32_115 = arith.constant 511 : i32
      %158 = arith.maxsi %c0_i32_114, %157 : i32
      %159 = arith.minsi %c511_i32_115, %158 : i32
      %c21_i32 = arith.constant 21 : i32
      %c0_i32_116 = arith.constant 0 : i32
      %160 = tpu.memref_slice %arg2[%159, %c0_i32_116] : memref<512x128xf32, #tpu.memory_space<any>> -> memref<1x128xf32, #tpu.memory_space<any>>
      %c21_i32_117 = arith.constant 21 : i32
      %c0_i32_118 = arith.constant 0 : i32
      %161 = tpu.memref_slice %arg7[%c21_i32_117, %c0_i32_118] : memref<32x128xf32, #tpu.memory_space<vmem>> -> memref<1x128xf32, #tpu.memory_space<vmem>>
      %162 = tpu.memref_slice %arg8[%c21_i32] : memref<32x!tpu.dma_semaphore, #tpu.memory_space<semaphore_mem>> -> memref<1x!tpu.dma_semaphore, #tpu.memory_space<semaphore_mem>>
      %163 = tpu.memref_squeeze %162 : memref<1x!tpu.dma_semaphore, #tpu.memory_space<semaphore_mem>> -> memref<!tpu.dma_semaphore, #tpu.memory_space<semaphore_mem>>
      tpu.enqueue_dma source(%160 : memref<1x128xf32, #tpu.memory_space<any>>) target(%161 : memref<1x128xf32, #tpu.memory_space<vmem>>) target_semaphore(%163 : memref<!tpu.dma_semaphore, #tpu.memory_space<semaphore_mem>>)
      %c22 = arith.constant 22 : index
      %164 = memref.load %arg1[%c22] : memref<32xi32, #tpu.memory_space<smem>>
      %c0_i32_119 = arith.constant 0 : i32
      %c511_i32_120 = arith.constant 511 : i32
      %165 = arith.maxsi %c0_i32_119, %164 : i32
      %166 = arith.minsi %c511_i32_120, %165 : i32
      %c22_i32 = arith.constant 22 : i32
      %c0_i32_121 = arith.constant 0 : i32
      %167 = tpu.memref_slice %arg2[%166, %c0_i32_121] : memref<512x128xf32, #tpu.memory_space<any>> -> memref<1x128xf32, #tpu.memory_space<any>>
      %c22_i32_122 = arith.constant 22 : i32
      %c0_i32_123 = arith.constant 0 : i32
      %168 = tpu.memref_slice %arg7[%c22_i32_122, %c0_i32_123] : memref<32x128xf32, #tpu.memory_space<vmem>> -> memref<1x128xf32, #tpu.memory_space<vmem>>
      %169 = tpu.memref_slice %arg8[%c22_i32] : memref<32x!tpu.dma_semaphore, #tpu.memory_space<semaphore_mem>> -> memref<1x!tpu.dma_semaphore, #tpu.memory_space<semaphore_mem>>
      %170 = tpu.memref_squeeze %169 : memref<1x!tpu.dma_semaphore, #tpu.memory_space<semaphore_mem>> -> memref<!tpu.dma_semaphore, #tpu.memory_space<semaphore_mem>>
      tpu.enqueue_dma source(%167 : memref<1x128xf32, #tpu.memory_space<any>>) target(%168 : memref<1x128xf32, #tpu.memory_space<vmem>>) target_semaphore(%170 : memref<!tpu.dma_semaphore, #tpu.memory_space<semaphore_mem>>)
      %c23 = arith.constant 23 : index
      %171 = memref.load %arg1[%c23] : memref<32xi32, #tpu.memory_space<smem>>
      %c0_i32_124 = arith.constant 0 : i32
      %c511_i32_125 = arith.constant 511 : i32
      %172 = arith.maxsi %c0_i32_124, %171 : i32
      %173 = arith.minsi %c511_i32_125, %172 : i32
      %c23_i32 = arith.constant 23 : i32
      %c0_i32_126 = arith.constant 0 : i32
      %174 = tpu.memref_slice %arg2[%173, %c0_i32_126] : memref<512x128xf32, #tpu.memory_space<any>> -> memref<1x128xf32, #tpu.memory_space<any>>
      %c23_i32_127 = arith.constant 23 : i32
      %c0_i32_128 = arith.constant 0 : i32
      %175 = tpu.memref_slice %arg7[%c23_i32_127, %c0_i32_128] : memref<32x128xf32, #tpu.memory_space<vmem>> -> memref<1x128xf32, #tpu.memory_space<vmem>>
      %176 = tpu.memref_slice %arg8[%c23_i32] : memref<32x!tpu.dma_semaphore, #tpu.memory_space<semaphore_mem>> -> memref<1x!tpu.dma_semaphore, #tpu.memory_space<semaphore_mem>>
      %177 = tpu.memref_squeeze %176 : memref<1x!tpu.dma_semaphore, #tpu.memory_space<semaphore_mem>> -> memref<!tpu.dma_semaphore, #tpu.memory_space<semaphore_mem>>
      tpu.enqueue_dma source(%174 : memref<1x128xf32, #tpu.memory_space<any>>) target(%175 : memref<1x128xf32, #tpu.memory_space<vmem>>) target_semaphore(%177 : memref<!tpu.dma_semaphore, #tpu.memory_space<semaphore_mem>>)
      %c24 = arith.constant 24 : index
      %178 = memref.load %arg1[%c24] : memref<32xi32, #tpu.memory_space<smem>>
      %c0_i32_129 = arith.constant 0 : i32
      %c511_i32_130 = arith.constant 511 : i32
      %179 = arith.maxsi %c0_i32_129, %178 : i32
      %180 = arith.minsi %c511_i32_130, %179 : i32
      %c24_i32 = arith.constant 24 : i32
      %c0_i32_131 = arith.constant 0 : i32
      %181 = tpu.memref_slice %arg2[%180, %c0_i32_131] : memref<512x128xf32, #tpu.memory_space<any>> -> memref<1x128xf32, #tpu.memory_space<any>>
      %c24_i32_132 = arith.constant 24 : i32
      %c0_i32_133 = arith.constant 0 : i32
      %182 = tpu.memref_slice %arg7[%c24_i32_132, %c0_i32_133] : memref<32x128xf32, #tpu.memory_space<vmem>> -> memref<1x128xf32, #tpu.memory_space<vmem>>
      %183 = tpu.memref_slice %arg8[%c24_i32] : memref<32x!tpu.dma_semaphore, #tpu.memory_space<semaphore_mem>> -> memref<1x!tpu.dma_semaphore, #tpu.memory_space<semaphore_mem>>
      %184 = tpu.memref_squeeze %183 : memref<1x!tpu.dma_semaphore, #tpu.memory_space<semaphore_mem>> -> memref<!tpu.dma_semaphore, #tpu.memory_space<semaphore_mem>>
      tpu.enqueue_dma source(%181 : memref<1x128xf32, #tpu.memory_space<any>>) target(%182 : memref<1x128xf32, #tpu.memory_space<vmem>>) target_semaphore(%184 : memref<!tpu.dma_semaphore, #tpu.memory_space<semaphore_mem>>)
      %c25 = arith.constant 25 : index
      %185 = memref.load %arg1[%c25] : memref<32xi32, #tpu.memory_space<smem>>
      %c0_i32_134 = arith.constant 0 : i32
      %c511_i32_135 = arith.constant 511 : i32
      %186 = arith.maxsi %c0_i32_134, %185 : i32
      %187 = arith.minsi %c511_i32_135, %186 : i32
      %c25_i32 = arith.constant 25 : i32
      %c0_i32_136 = arith.constant 0 : i32
      %188 = tpu.memref_slice %arg2[%187, %c0_i32_136] : memref<512x128xf32, #tpu.memory_space<any>> -> memref<1x128xf32, #tpu.memory_space<any>>
      %c25_i32_137 = arith.constant 25 : i32
      %c0_i32_138 = arith.constant 0 : i32
      %189 = tpu.memref_slice %arg7[%c25_i32_137, %c0_i32_138] : memref<32x128xf32, #tpu.memory_space<vmem>> -> memref<1x128xf32, #tpu.memory_space<vmem>>
      %190 = tpu.memref_slice %arg8[%c25_i32] : memref<32x!tpu.dma_semaphore, #tpu.memory_space<semaphore_mem>> -> memref<1x!tpu.dma_semaphore, #tpu.memory_space<semaphore_mem>>
      %191 = tpu.memref_squeeze %190 : memref<1x!tpu.dma_semaphore, #tpu.memory_space<semaphore_mem>> -> memref<!tpu.dma_semaphore, #tpu.memory_space<semaphore_mem>>
      tpu.enqueue_dma source(%188 : memref<1x128xf32, #tpu.memory_space<any>>) target(%189 : memref<1x128xf32, #tpu.memory_space<vmem>>) target_semaphore(%191 : memref<!tpu.dma_semaphore, #tpu.memory_space<semaphore_mem>>)
      %c26 = arith.constant 26 : index
      %192 = memref.load %arg1[%c26] : memref<32xi32, #tpu.memory_space<smem>>
      %c0_i32_139 = arith.constant 0 : i32
      %c511_i32_140 = arith.constant 511 : i32
      %193 = arith.maxsi %c0_i32_139, %192 : i32
      %194 = arith.minsi %c511_i32_140, %193 : i32
      %c26_i32 = arith.constant 26 : i32
      %c0_i32_141 = arith.constant 0 : i32
      %195 = tpu.memref_slice %arg2[%194, %c0_i32_141] : memref<512x128xf32, #tpu.memory_space<any>> -> memref<1x128xf32, #tpu.memory_space<any>>
      %c26_i32_142 = arith.constant 26 : i32
      %c0_i32_143 = arith.constant 0 : i32
      %196 = tpu.memref_slice %arg7[%c26_i32_142, %c0_i32_143] : memref<32x128xf32, #tpu.memory_space<vmem>> -> memref<1x128xf32, #tpu.memory_space<vmem>>
      %197 = tpu.memref_slice %arg8[%c26_i32] : memref<32x!tpu.dma_semaphore, #tpu.memory_space<semaphore_mem>> -> memref<1x!tpu.dma_semaphore, #tpu.memory_space<semaphore_mem>>
      %198 = tpu.memref_squeeze %197 : memref<1x!tpu.dma_semaphore, #tpu.memory_space<semaphore_mem>> -> memref<!tpu.dma_semaphore, #tpu.memory_space<semaphore_mem>>
      tpu.enqueue_dma source(%195 : memref<1x128xf32, #tpu.memory_space<any>>) target(%196 : memref<1x128xf32, #tpu.memory_space<vmem>>) target_semaphore(%198 : memref<!tpu.dma_semaphore, #tpu.memory_space<semaphore_mem>>)
      %c27 = arith.constant 27 : index
      %199 = memref.load %arg1[%c27] : memref<32xi32, #tpu.memory_space<smem>>
      %c0_i32_144 = arith.constant 0 : i32
      %c511_i32_145 = arith.constant 511 : i32
      %200 = arith.maxsi %c0_i32_144, %199 : i32
      %201 = arith.minsi %c511_i32_145, %200 : i32
      %c27_i32 = arith.constant 27 : i32
      %c0_i32_146 = arith.constant 0 : i32
      %202 = tpu.memref_slice %arg2[%201, %c0_i32_146] : memref<512x128xf32, #tpu.memory_space<any>> -> memref<1x128xf32, #tpu.memory_space<any>>
      %c27_i32_147 = arith.constant 27 : i32
      %c0_i32_148 = arith.constant 0 : i32
      %203 = tpu.memref_slice %arg7[%c27_i32_147, %c0_i32_148] : memref<32x128xf32, #tpu.memory_space<vmem>> -> memref<1x128xf32, #tpu.memory_space<vmem>>
      %204 = tpu.memref_slice %arg8[%c27_i32] : memref<32x!tpu.dma_semaphore, #tpu.memory_space<semaphore_mem>> -> memref<1x!tpu.dma_semaphore, #tpu.memory_space<semaphore_mem>>
      %205 = tpu.memref_squeeze %204 : memref<1x!tpu.dma_semaphore, #tpu.memory_space<semaphore_mem>> -> memref<!tpu.dma_semaphore, #tpu.memory_space<semaphore_mem>>
      tpu.enqueue_dma source(%202 : memref<1x128xf32, #tpu.memory_space<any>>) target(%203 : memref<1x128xf32, #tpu.memory_space<vmem>>) target_semaphore(%205 : memref<!tpu.dma_semaphore, #tpu.memory_space<semaphore_mem>>)
      %c28 = arith.constant 28 : index
      %206 = memref.load %arg1[%c28] : memref<32xi32, #tpu.memory_space<smem>>
      %c0_i32_149 = arith.constant 0 : i32
      %c511_i32_150 = arith.constant 511 : i32
      %207 = arith.maxsi %c0_i32_149, %206 : i32
      %208 = arith.minsi %c511_i32_150, %207 : i32
      %c28_i32 = arith.constant 28 : i32
      %c0_i32_151 = arith.constant 0 : i32
      %209 = tpu.memref_slice %arg2[%208, %c0_i32_151] : memref<512x128xf32, #tpu.memory_space<any>> -> memref<1x128xf32, #tpu.memory_space<any>>
      %c28_i32_152 = arith.constant 28 : i32
      %c0_i32_153 = arith.constant 0 : i32
      %210 = tpu.memref_slice %arg7[%c28_i32_152, %c0_i32_153] : memref<32x128xf32, #tpu.memory_space<vmem>> -> memref<1x128xf32, #tpu.memory_space<vmem>>
      %211 = tpu.memref_slice %arg8[%c28_i32] : memref<32x!tpu.dma_semaphore, #tpu.memory_space<semaphore_mem>> -> memref<1x!tpu.dma_semaphore, #tpu.memory_space<semaphore_mem>>
      %212 = tpu.memref_squeeze %211 : memref<1x!tpu.dma_semaphore, #tpu.memory_space<semaphore_mem>> -> memref<!tpu.dma_semaphore, #tpu.memory_space<semaphore_mem>>
      tpu.enqueue_dma source(%209 : memref<1x128xf32, #tpu.memory_space<any>>) target(%210 : memref<1x128xf32, #tpu.memory_space<vmem>>) target_semaphore(%212 : memref<!tpu.dma_semaphore, #tpu.memory_space<semaphore_mem>>)
      %c29 = arith.constant 29 : index
      %213 = memref.load %arg1[%c29] : memref<32xi32, #tpu.memory_space<smem>>
      %c0_i32_154 = arith.constant 0 : i32
      %c511_i32_155 = arith.constant 511 : i32
      %214 = arith.maxsi %c0_i32_154, %213 : i32
      %215 = arith.minsi %c511_i32_155, %214 : i32
      %c29_i32 = arith.constant 29 : i32
      %c0_i32_156 = arith.constant 0 : i32
      %216 = tpu.memref_slice %arg2[%215, %c0_i32_156] : memref<512x128xf32, #tpu.memory_space<any>> -> memref<1x128xf32, #tpu.memory_space<any>>
      %c29_i32_157 = arith.constant 29 : i32
      %c0_i32_158 = arith.constant 0 : i32
      %217 = tpu.memref_slice %arg7[%c29_i32_157, %c0_i32_158] : memref<32x128xf32, #tpu.memory_space<vmem>> -> memref<1x128xf32, #tpu.memory_space<vmem>>
      %218 = tpu.memref_slice %arg8[%c29_i32] : memref<32x!tpu.dma_semaphore, #tpu.memory_space<semaphore_mem>> -> memref<1x!tpu.dma_semaphore, #tpu.memory_space<semaphore_mem>>
      %219 = tpu.memref_squeeze %218 : memref<1x!tpu.dma_semaphore, #tpu.memory_space<semaphore_mem>> -> memref<!tpu.dma_semaphore, #tpu.memory_space<semaphore_mem>>
      tpu.enqueue_dma source(%216 : memref<1x128xf32, #tpu.memory_space<any>>) target(%217 : memref<1x128xf32, #tpu.memory_space<vmem>>) target_semaphore(%219 : memref<!tpu.dma_semaphore, #tpu.memory_space<semaphore_mem>>)
      %c30 = arith.constant 30 : index
      %220 = memref.load %arg1[%c30] : memref<32xi32, #tpu.memory_space<smem>>
      %c0_i32_159 = arith.constant 0 : i32
      %c511_i32_160 = arith.constant 511 : i32
      %221 = arith.maxsi %c0_i32_159, %220 : i32
      %222 = arith.minsi %c511_i32_160, %221 : i32
      %c30_i32 = arith.constant 30 : i32
      %c0_i32_161 = arith.constant 0 : i32
      %223 = tpu.memref_slice %arg2[%222, %c0_i32_161] : memref<512x128xf32, #tpu.memory_space<any>> -> memref<1x128xf32, #tpu.memory_space<any>>
      %c30_i32_162 = arith.constant 30 : i32
      %c0_i32_163 = arith.constant 0 : i32
      %224 = tpu.memref_slice %arg7[%c30_i32_162, %c0_i32_163] : memref<32x128xf32, #tpu.memory_space<vmem>> -> memref<1x128xf32, #tpu.memory_space<vmem>>
      %225 = tpu.memref_slice %arg8[%c30_i32] : memref<32x!tpu.dma_semaphore, #tpu.memory_space<semaphore_mem>> -> memref<1x!tpu.dma_semaphore, #tpu.memory_space<semaphore_mem>>
      %226 = tpu.memref_squeeze %225 : memref<1x!tpu.dma_semaphore, #tpu.memory_space<semaphore_mem>> -> memref<!tpu.dma_semaphore, #tpu.memory_space<semaphore_mem>>
      tpu.enqueue_dma source(%223 : memref<1x128xf32, #tpu.memory_space<any>>) target(%224 : memref<1x128xf32, #tpu.memory_space<vmem>>) target_semaphore(%226 : memref<!tpu.dma_semaphore, #tpu.memory_space<semaphore_mem>>)
      %c31 = arith.constant 31 : index
      %227 = memref.load %arg1[%c31] : memref<32xi32, #tpu.memory_space<smem>>
      %c0_i32_164 = arith.constant 0 : i32
      %c511_i32_165 = arith.constant 511 : i32
      %228 = arith.maxsi %c0_i32_164, %227 : i32
      %229 = arith.minsi %c511_i32_165, %228 : i32
      %c31_i32 = arith.constant 31 : i32
      %c0_i32_166 = arith.constant 0 : i32
      %230 = tpu.memref_slice %arg2[%229, %c0_i32_166] : memref<512x128xf32, #tpu.memory_space<any>> -> memref<1x128xf32, #tpu.memory_space<any>>
      %c31_i32_167 = arith.constant 31 : i32
      %c0_i32_168 = arith.constant 0 : i32
      %231 = tpu.memref_slice %arg7[%c31_i32_167, %c0_i32_168] : memref<32x128xf32, #tpu.memory_space<vmem>> -> memref<1x128xf32, #tpu.memory_space<vmem>>
      %232 = tpu.memref_slice %arg8[%c31_i32] : memref<32x!tpu.dma_semaphore, #tpu.memory_space<semaphore_mem>> -> memref<1x!tpu.dma_semaphore, #tpu.memory_space<semaphore_mem>>
      %233 = tpu.memref_squeeze %232 : memref<1x!tpu.dma_semaphore, #tpu.memory_space<semaphore_mem>> -> memref<!tpu.dma_semaphore, #tpu.memory_space<semaphore_mem>>
      tpu.enqueue_dma source(%230 : memref<1x128xf32, #tpu.memory_space<any>>) target(%231 : memref<1x128xf32, #tpu.memory_space<vmem>>) target_semaphore(%233 : memref<!tpu.dma_semaphore, #tpu.memory_space<semaphore_mem>>)
      %c0_i32_169 = arith.constant 0 : i32
      %c0_i32_170 = arith.constant 0 : i32
      %c0_i32_171 = arith.constant 0 : i32
      %234 = tpu.memref_slice %arg2[%c0_i32_170, %c0_i32_171] : memref<512x128xf32, #tpu.memory_space<any>> -> memref<1x128xf32, #tpu.memory_space<any>>
      %c0_i32_172 = arith.constant 0 : i32
      %c0_i32_173 = arith.constant 0 : i32
      %235 = tpu.memref_slice %arg7[%c0_i32_172, %c0_i32_173] : memref<32x128xf32, #tpu.memory_space<vmem>> -> memref<1x128xf32, #tpu.memory_space<vmem>>
      %236 = tpu.memref_slice %arg8[%c0_i32_169] : memref<32x!tpu.dma_semaphore, #tpu.memory_space<semaphore_mem>> -> memref<1x!tpu.dma_semaphore, #tpu.memory_space<semaphore_mem>>
      %237 = tpu.memref_squeeze %236 : memref<1x!tpu.dma_semaphore, #tpu.memory_space<semaphore_mem>> -> memref<!tpu.dma_semaphore, #tpu.memory_space<semaphore_mem>>
      tpu.wait_dma2 semaphore(%237 : memref<!tpu.dma_semaphore, #tpu.memory_space<semaphore_mem>>) src(%234 : memref<1x128xf32, #tpu.memory_space<any>>) dst(%235 : memref<1x128xf32, #tpu.memory_space<vmem>>)
      %c1_i32_174 = arith.constant 1 : i32
      %c0_i32_175 = arith.constant 0 : i32
      %c0_i32_176 = arith.constant 0 : i32
      %238 = tpu.memref_slice %arg2[%c0_i32_175, %c0_i32_176] : memref<512x128xf32, #tpu.memory_space<any>> -> memref<1x128xf32, #tpu.memory_space<any>>
      %c1_i32_177 = arith.constant 1 : i32
      %c0_i32_178 = arith.constant 0 : i32
      %239 = tpu.memref_slice %arg7[%c1_i32_177, %c0_i32_178] : memref<32x128xf32, #tpu.memory_space<vmem>> -> memref<1x128xf32, #tpu.memory_space<vmem>>
      %240 = tpu.memref_slice %arg8[%c1_i32_174] : memref<32x!tpu.dma_semaphore, #tpu.memory_space<semaphore_mem>> -> memref<1x!tpu.dma_semaphore, #tpu.memory_space<semaphore_mem>>
      %241 = tpu.memref_squeeze %240 : memref<1x!tpu.dma_semaphore, #tpu.memory_space<semaphore_mem>> -> memref<!tpu.dma_semaphore, #tpu.memory_space<semaphore_mem>>
      tpu.wait_dma2 semaphore(%241 : memref<!tpu.dma_semaphore, #tpu.memory_space<semaphore_mem>>) src(%238 : memref<1x128xf32, #tpu.memory_space<any>>) dst(%239 : memref<1x128xf32, #tpu.memory_space<vmem>>)
      %c2_i32_179 = arith.constant 2 : i32
      %c0_i32_180 = arith.constant 0 : i32
      %c0_i32_181 = arith.constant 0 : i32
      %242 = tpu.memref_slice %arg2[%c0_i32_180, %c0_i32_181] : memref<512x128xf32, #tpu.memory_space<any>> -> memref<1x128xf32, #tpu.memory_space<any>>
      %c2_i32_182 = arith.constant 2 : i32
      %c0_i32_183 = arith.constant 0 : i32
      %243 = tpu.memref_slice %arg7[%c2_i32_182, %c0_i32_183] : memref<32x128xf32, #tpu.memory_space<vmem>> -> memref<1x128xf32, #tpu.memory_space<vmem>>
      %244 = tpu.memref_slice %arg8[%c2_i32_179] : memref<32x!tpu.dma_semaphore, #tpu.memory_space<semaphore_mem>> -> memref<1x!tpu.dma_semaphore, #tpu.memory_space<semaphore_mem>>
      %245 = tpu.memref_squeeze %244 : memref<1x!tpu.dma_semaphore, #tpu.memory_space<semaphore_mem>> -> memref<!tpu.dma_semaphore, #tpu.memory_space<semaphore_mem>>
      tpu.wait_dma2 semaphore(%245 : memref<!tpu.dma_semaphore, #tpu.memory_space<semaphore_mem>>) src(%242 : memref<1x128xf32, #tpu.memory_space<any>>) dst(%243 : memref<1x128xf32, #tpu.memory_space<vmem>>)
      %c3_i32_184 = arith.constant 3 : i32
      %c0_i32_185 = arith.constant 0 : i32
      %c0_i32_186 = arith.constant 0 : i32
      %246 = tpu.memref_slice %arg2[%c0_i32_185, %c0_i32_186] : memref<512x128xf32, #tpu.memory_space<any>> -> memref<1x128xf32, #tpu.memory_space<any>>
      %c3_i32_187 = arith.constant 3 : i32
      %c0_i32_188 = arith.constant 0 : i32
      %247 = tpu.memref_slice %arg7[%c3_i32_187, %c0_i32_188] : memref<32x128xf32, #tpu.memory_space<vmem>> -> memref<1x128xf32, #tpu.memory_space<vmem>>
      %248 = tpu.memref_slice %arg8[%c3_i32_184] : memref<32x!tpu.dma_semaphore, #tpu.memory_space<semaphore_mem>> -> memref<1x!tpu.dma_semaphore, #tpu.memory_space<semaphore_mem>>
      %249 = tpu.memref_squeeze %248 : memref<1x!tpu.dma_semaphore, #tpu.memory_space<semaphore_mem>> -> memref<!tpu.dma_semaphore, #tpu.memory_space<semaphore_mem>>
      tpu.wait_dma2 semaphore(%249 : memref<!tpu.dma_semaphore, #tpu.memory_space<semaphore_mem>>) src(%246 : memref<1x128xf32, #tpu.memory_space<any>>) dst(%247 : memref<1x128xf32, #tpu.memory_space<vmem>>)
      %c4_i32_189 = arith.constant 4 : i32
      %c0_i32_190 = arith.constant 0 : i32
      %c0_i32_191 = arith.constant 0 : i32
      %250 = tpu.memref_slice %arg2[%c0_i32_190, %c0_i32_191] : memref<512x128xf32, #tpu.memory_space<any>> -> memref<1x128xf32, #tpu.memory_space<any>>
      %c4_i32_192 = arith.constant 4 : i32
      %c0_i32_193 = arith.constant 0 : i32
      %251 = tpu.memref_slice %arg7[%c4_i32_192, %c0_i32_193] : memref<32x128xf32, #tpu.memory_space<vmem>> -> memref<1x128xf32, #tpu.memory_space<vmem>>
      %252 = tpu.memref_slice %arg8[%c4_i32_189] : memref<32x!tpu.dma_semaphore, #tpu.memory_space<semaphore_mem>> -> memref<1x!tpu.dma_semaphore, #tpu.memory_space<semaphore_mem>>
      %253 = tpu.memref_squeeze %252 : memref<1x!tpu.dma_semaphore, #tpu.memory_space<semaphore_mem>> -> memref<!tpu.dma_semaphore, #tpu.memory_space<semaphore_mem>>
      tpu.wait_dma2 semaphore(%253 : memref<!tpu.dma_semaphore, #tpu.memory_space<semaphore_mem>>) src(%250 : memref<1x128xf32, #tpu.memory_space<any>>) dst(%251 : memref<1x128xf32, #tpu.memory_space<vmem>>)
      %c5_i32_194 = arith.constant 5 : i32
      %c0_i32_195 = arith.constant 0 : i32
      %c0_i32_196 = arith.constant 0 : i32
      %254 = tpu.memref_slice %arg2[%c0_i32_195, %c0_i32_196] : memref<512x128xf32, #tpu.memory_space<any>> -> memref<1x128xf32, #tpu.memory_space<any>>
      %c5_i32_197 = arith.constant 5 : i32
      %c0_i32_198 = arith.constant 0 : i32
      %255 = tpu.memref_slice %arg7[%c5_i32_197, %c0_i32_198] : memref<32x128xf32, #tpu.memory_space<vmem>> -> memref<1x128xf32, #tpu.memory_space<vmem>>
      %256 = tpu.memref_slice %arg8[%c5_i32_194] : memref<32x!tpu.dma_semaphore, #tpu.memory_space<semaphore_mem>> -> memref<1x!tpu.dma_semaphore, #tpu.memory_space<semaphore_mem>>
      %257 = tpu.memref_squeeze %256 : memref<1x!tpu.dma_semaphore, #tpu.memory_space<semaphore_mem>> -> memref<!tpu.dma_semaphore, #tpu.memory_space<semaphore_mem>>
      tpu.wait_dma2 semaphore(%257 : memref<!tpu.dma_semaphore, #tpu.memory_space<semaphore_mem>>) src(%254 : memref<1x128xf32, #tpu.memory_space<any>>) dst(%255 : memref<1x128xf32, #tpu.memory_space<vmem>>)
      %c6_i32_199 = arith.constant 6 : i32
      %c0_i32_200 = arith.constant 0 : i32
      %c0_i32_201 = arith.constant 0 : i32
      %258 = tpu.memref_slice %arg2[%c0_i32_200, %c0_i32_201] : memref<512x128xf32, #tpu.memory_space<any>> -> memref<1x128xf32, #tpu.memory_space<any>>
      %c6_i32_202 = arith.constant 6 : i32
      %c0_i32_203 = arith.constant 0 : i32
      %259 = tpu.memref_slice %arg7[%c6_i32_202, %c0_i32_203] : memref<32x128xf32, #tpu.memory_space<vmem>> -> memref<1x128xf32, #tpu.memory_space<vmem>>
      %260 = tpu.memref_slice %arg8[%c6_i32_199] : memref<32x!tpu.dma_semaphore, #tpu.memory_space<semaphore_mem>> -> memref<1x!tpu.dma_semaphore, #tpu.memory_space<semaphore_mem>>
      %261 = tpu.memref_squeeze %260 : memref<1x!tpu.dma_semaphore, #tpu.memory_space<semaphore_mem>> -> memref<!tpu.dma_semaphore, #tpu.memory_space<semaphore_mem>>
      tpu.wait_dma2 semaphore(%261 : memref<!tpu.dma_semaphore, #tpu.memory_space<semaphore_mem>>) src(%258 : memref<1x128xf32, #tpu.memory_space<any>>) dst(%259 : memref<1x128xf32, #tpu.memory_space<vmem>>)
      %c7_i32_204 = arith.constant 7 : i32
      %c0_i32_205 = arith.constant 0 : i32
      %c0_i32_206 = arith.constant 0 : i32
      %262 = tpu.memref_slice %arg2[%c0_i32_205, %c0_i32_206] : memref<512x128xf32, #tpu.memory_space<any>> -> memref<1x128xf32, #tpu.memory_space<any>>
      %c7_i32_207 = arith.constant 7 : i32
      %c0_i32_208 = arith.constant 0 : i32
      %263 = tpu.memref_slice %arg7[%c7_i32_207, %c0_i32_208] : memref<32x128xf32, #tpu.memory_space<vmem>> -> memref<1x128xf32, #tpu.memory_space<vmem>>
      %264 = tpu.memref_slice %arg8[%c7_i32_204] : memref<32x!tpu.dma_semaphore, #tpu.memory_space<semaphore_mem>> -> memref<1x!tpu.dma_semaphore, #tpu.memory_space<semaphore_mem>>
      %265 = tpu.memref_squeeze %264 : memref<1x!tpu.dma_semaphore, #tpu.memory_space<semaphore_mem>> -> memref<!tpu.dma_semaphore, #tpu.memory_space<semaphore_mem>>
      tpu.wait_dma2 semaphore(%265 : memref<!tpu.dma_semaphore, #tpu.memory_space<semaphore_mem>>) src(%262 : memref<1x128xf32, #tpu.memory_space<any>>) dst(%263 : memref<1x128xf32, #tpu.memory_space<vmem>>)
      %c8_i32_209 = arith.constant 8 : i32
      %c0_i32_210 = arith.constant 0 : i32
      %c0_i32_211 = arith.constant 0 : i32
      %266 = tpu.memref_slice %arg2[%c0_i32_210, %c0_i32_211] : memref<512x128xf32, #tpu.memory_space<any>> -> memref<1x128xf32, #tpu.memory_space<any>>
      %c8_i32_212 = arith.constant 8 : i32
      %c0_i32_213 = arith.constant 0 : i32
      %267 = tpu.memref_slice %arg7[%c8_i32_212, %c0_i32_213] : memref<32x128xf32, #tpu.memory_space<vmem>> -> memref<1x128xf32, #tpu.memory_space<vmem>>
      %268 = tpu.memref_slice %arg8[%c8_i32_209] : memref<32x!tpu.dma_semaphore, #tpu.memory_space<semaphore_mem>> -> memref<1x!tpu.dma_semaphore, #tpu.memory_space<semaphore_mem>>
      %269 = tpu.memref_squeeze %268 : memref<1x!tpu.dma_semaphore, #tpu.memory_space<semaphore_mem>> -> memref<!tpu.dma_semaphore, #tpu.memory_space<semaphore_mem>>
      tpu.wait_dma2 semaphore(%269 : memref<!tpu.dma_semaphore, #tpu.memory_space<semaphore_mem>>) src(%266 : memref<1x128xf32, #tpu.memory_space<any>>) dst(%267 : memref<1x128xf32, #tpu.memory_space<vmem>>)
      %c9_i32_214 = arith.constant 9 : i32
      %c0_i32_215 = arith.constant 0 : i32
      %c0_i32_216 = arith.constant 0 : i32
      %270 = tpu.memref_slice %arg2[%c0_i32_215, %c0_i32_216] : memref<512x128xf32, #tpu.memory_space<any>> -> memref<1x128xf32, #tpu.memory_space<any>>
      %c9_i32_217 = arith.constant 9 : i32
      %c0_i32_218 = arith.constant 0 : i32
      %271 = tpu.memref_slice %arg7[%c9_i32_217, %c0_i32_218] : memref<32x128xf32, #tpu.memory_space<vmem>> -> memref<1x128xf32, #tpu.memory_space<vmem>>
      %272 = tpu.memref_slice %arg8[%c9_i32_214] : memref<32x!tpu.dma_semaphore, #tpu.memory_space<semaphore_mem>> -> memref<1x!tpu.dma_semaphore, #tpu.memory_space<semaphore_mem>>
      %273 = tpu.memref_squeeze %272 : memref<1x!tpu.dma_semaphore, #tpu.memory_space<semaphore_mem>> -> memref<!tpu.dma_semaphore, #tpu.memory_space<semaphore_mem>>
      tpu.wait_dma2 semaphore(%273 : memref<!tpu.dma_semaphore, #tpu.memory_space<semaphore_mem>>) src(%270 : memref<1x128xf32, #tpu.memory_space<any>>) dst(%271 : memref<1x128xf32, #tpu.memory_space<vmem>>)
      %c10_i32_219 = arith.constant 10 : i32
      %c0_i32_220 = arith.constant 0 : i32
      %c0_i32_221 = arith.constant 0 : i32
      %274 = tpu.memref_slice %arg2[%c0_i32_220, %c0_i32_221] : memref<512x128xf32, #tpu.memory_space<any>> -> memref<1x128xf32, #tpu.memory_space<any>>
      %c10_i32_222 = arith.constant 10 : i32
      %c0_i32_223 = arith.constant 0 : i32
      %275 = tpu.memref_slice %arg7[%c10_i32_222, %c0_i32_223] : memref<32x128xf32, #tpu.memory_space<vmem>> -> memref<1x128xf32, #tpu.memory_space<vmem>>
      %276 = tpu.memref_slice %arg8[%c10_i32_219] : memref<32x!tpu.dma_semaphore, #tpu.memory_space<semaphore_mem>> -> memref<1x!tpu.dma_semaphore, #tpu.memory_space<semaphore_mem>>
      %277 = tpu.memref_squeeze %276 : memref<1x!tpu.dma_semaphore, #tpu.memory_space<semaphore_mem>> -> memref<!tpu.dma_semaphore, #tpu.memory_space<semaphore_mem>>
      tpu.wait_dma2 semaphore(%277 : memref<!tpu.dma_semaphore, #tpu.memory_space<semaphore_mem>>) src(%274 : memref<1x128xf32, #tpu.memory_space<any>>) dst(%275 : memref<1x128xf32, #tpu.memory_space<vmem>>)
      %c11_i32_224 = arith.constant 11 : i32
      %c0_i32_225 = arith.constant 0 : i32
      %c0_i32_226 = arith.constant 0 : i32
      %278 = tpu.memref_slice %arg2[%c0_i32_225, %c0_i32_226] : memref<512x128xf32, #tpu.memory_space<any>> -> memref<1x128xf32, #tpu.memory_space<any>>
      %c11_i32_227 = arith.constant 11 : i32
      %c0_i32_228 = arith.constant 0 : i32
      %279 = tpu.memref_slice %arg7[%c11_i32_227, %c0_i32_228] : memref<32x128xf32, #tpu.memory_space<vmem>> -> memref<1x128xf32, #tpu.memory_space<vmem>>
      %280 = tpu.memref_slice %arg8[%c11_i32_224] : memref<32x!tpu.dma_semaphore, #tpu.memory_space<semaphore_mem>> -> memref<1x!tpu.dma_semaphore, #tpu.memory_space<semaphore_mem>>
      %281 = tpu.memref_squeeze %280 : memref<1x!tpu.dma_semaphore, #tpu.memory_space<semaphore_mem>> -> memref<!tpu.dma_semaphore, #tpu.memory_space<semaphore_mem>>
      tpu.wait_dma2 semaphore(%281 : memref<!tpu.dma_semaphore, #tpu.memory_space<semaphore_mem>>) src(%278 : memref<1x128xf32, #tpu.memory_space<any>>) dst(%279 : memref<1x128xf32, #tpu.memory_space<vmem>>)
      %c12_i32_229 = arith.constant 12 : i32
      %c0_i32_230 = arith.constant 0 : i32
      %c0_i32_231 = arith.constant 0 : i32
      %282 = tpu.memref_slice %arg2[%c0_i32_230, %c0_i32_231] : memref<512x128xf32, #tpu.memory_space<any>> -> memref<1x128xf32, #tpu.memory_space<any>>
      %c12_i32_232 = arith.constant 12 : i32
      %c0_i32_233 = arith.constant 0 : i32
      %283 = tpu.memref_slice %arg7[%c12_i32_232, %c0_i32_233] : memref<32x128xf32, #tpu.memory_space<vmem>> -> memref<1x128xf32, #tpu.memory_space<vmem>>
      %284 = tpu.memref_slice %arg8[%c12_i32_229] : memref<32x!tpu.dma_semaphore, #tpu.memory_space<semaphore_mem>> -> memref<1x!tpu.dma_semaphore, #tpu.memory_space<semaphore_mem>>
      %285 = tpu.memref_squeeze %284 : memref<1x!tpu.dma_semaphore, #tpu.memory_space<semaphore_mem>> -> memref<!tpu.dma_semaphore, #tpu.memory_space<semaphore_mem>>
      tpu.wait_dma2 semaphore(%285 : memref<!tpu.dma_semaphore, #tpu.memory_space<semaphore_mem>>) src(%282 : memref<1x128xf32, #tpu.memory_space<any>>) dst(%283 : memref<1x128xf32, #tpu.memory_space<vmem>>)
      %c13_i32_234 = arith.constant 13 : i32
      %c0_i32_235 = arith.constant 0 : i32
      %c0_i32_236 = arith.constant 0 : i32
      %286 = tpu.memref_slice %arg2[%c0_i32_235, %c0_i32_236] : memref<512x128xf32, #tpu.memory_space<any>> -> memref<1x128xf32, #tpu.memory_space<any>>
      %c13_i32_237 = arith.constant 13 : i32
      %c0_i32_238 = arith.constant 0 : i32
      %287 = tpu.memref_slice %arg7[%c13_i32_237, %c0_i32_238] : memref<32x128xf32, #tpu.memory_space<vmem>> -> memref<1x128xf32, #tpu.memory_space<vmem>>
      %288 = tpu.memref_slice %arg8[%c13_i32_234] : memref<32x!tpu.dma_semaphore, #tpu.memory_space<semaphore_mem>> -> memref<1x!tpu.dma_semaphore, #tpu.memory_space<semaphore_mem>>
      %289 = tpu.memref_squeeze %288 : memref<1x!tpu.dma_semaphore, #tpu.memory_space<semaphore_mem>> -> memref<!tpu.dma_semaphore, #tpu.memory_space<semaphore_mem>>
      tpu.wait_dma2 semaphore(%289 : memref<!tpu.dma_semaphore, #tpu.memory_space<semaphore_mem>>) src(%286 : memref<1x128xf32, #tpu.memory_space<any>>) dst(%287 : memref<1x128xf32, #tpu.memory_space<vmem>>)
      %c14_i32_239 = arith.constant 14 : i32
      %c0_i32_240 = arith.constant 0 : i32
      %c0_i32_241 = arith.constant 0 : i32
      %290 = tpu.memref_slice %arg2[%c0_i32_240, %c0_i32_241] : memref<512x128xf32, #tpu.memory_space<any>> -> memref<1x128xf32, #tpu.memory_space<any>>
      %c14_i32_242 = arith.constant 14 : i32
      %c0_i32_243 = arith.constant 0 : i32
      %291 = tpu.memref_slice %arg7[%c14_i32_242, %c0_i32_243] : memref<32x128xf32, #tpu.memory_space<vmem>> -> memref<1x128xf32, #tpu.memory_space<vmem>>
      %292 = tpu.memref_slice %arg8[%c14_i32_239] : memref<32x!tpu.dma_semaphore, #tpu.memory_space<semaphore_mem>> -> memref<1x!tpu.dma_semaphore, #tpu.memory_space<semaphore_mem>>
      %293 = tpu.memref_squeeze %292 : memref<1x!tpu.dma_semaphore, #tpu.memory_space<semaphore_mem>> -> memref<!tpu.dma_semaphore, #tpu.memory_space<semaphore_mem>>
      tpu.wait_dma2 semaphore(%293 : memref<!tpu.dma_semaphore, #tpu.memory_space<semaphore_mem>>) src(%290 : memref<1x128xf32, #tpu.memory_space<any>>) dst(%291 : memref<1x128xf32, #tpu.memory_space<vmem>>)
      %c15_i32_244 = arith.constant 15 : i32
      %c0_i32_245 = arith.constant 0 : i32
      %c0_i32_246 = arith.constant 0 : i32
      %294 = tpu.memref_slice %arg2[%c0_i32_245, %c0_i32_246] : memref<512x128xf32, #tpu.memory_space<any>> -> memref<1x128xf32, #tpu.memory_space<any>>
      %c15_i32_247 = arith.constant 15 : i32
      %c0_i32_248 = arith.constant 0 : i32
      %295 = tpu.memref_slice %arg7[%c15_i32_247, %c0_i32_248] : memref<32x128xf32, #tpu.memory_space<vmem>> -> memref<1x128xf32, #tpu.memory_space<vmem>>
      %296 = tpu.memref_slice %arg8[%c15_i32_244] : memref<32x!tpu.dma_semaphore, #tpu.memory_space<semaphore_mem>> -> memref<1x!tpu.dma_semaphore, #tpu.memory_space<semaphore_mem>>
      %297 = tpu.memref_squeeze %296 : memref<1x!tpu.dma_semaphore, #tpu.memory_space<semaphore_mem>> -> memref<!tpu.dma_semaphore, #tpu.memory_space<semaphore_mem>>
      tpu.wait_dma2 semaphore(%297 : memref<!tpu.dma_semaphore, #tpu.memory_space<semaphore_mem>>) src(%294 : memref<1x128xf32, #tpu.memory_space<any>>) dst(%295 : memref<1x128xf32, #tpu.memory_space<vmem>>)
      %c16_i32_249 = arith.constant 16 : i32
      %c0_i32_250 = arith.constant 0 : i32
      %c0_i32_251 = arith.constant 0 : i32
      %298 = tpu.memref_slice %arg2[%c0_i32_250, %c0_i32_251] : memref<512x128xf32, #tpu.memory_space<any>> -> memref<1x128xf32, #tpu.memory_space<any>>
      %c16_i32_252 = arith.constant 16 : i32
      %c0_i32_253 = arith.constant 0 : i32
      %299 = tpu.memref_slice %arg7[%c16_i32_252, %c0_i32_253] : memref<32x128xf32, #tpu.memory_space<vmem>> -> memref<1x128xf32, #tpu.memory_space<vmem>>
      %300 = tpu.memref_slice %arg8[%c16_i32_249] : memref<32x!tpu.dma_semaphore, #tpu.memory_space<semaphore_mem>> -> memref<1x!tpu.dma_semaphore, #tpu.memory_space<semaphore_mem>>
      %301 = tpu.memref_squeeze %300 : memref<1x!tpu.dma_semaphore, #tpu.memory_space<semaphore_mem>> -> memref<!tpu.dma_semaphore, #tpu.memory_space<semaphore_mem>>
      tpu.wait_dma2 semaphore(%301 : memref<!tpu.dma_semaphore, #tpu.memory_space<semaphore_mem>>) src(%298 : memref<1x128xf32, #tpu.memory_space<any>>) dst(%299 : memref<1x128xf32, #tpu.memory_space<vmem>>)
      %c17_i32_254 = arith.constant 17 : i32
      %c0_i32_255 = arith.constant 0 : i32
      %c0_i32_256 = arith.constant 0 : i32
      %302 = tpu.memref_slice %arg2[%c0_i32_255, %c0_i32_256] : memref<512x128xf32, #tpu.memory_space<any>> -> memref<1x128xf32, #tpu.memory_space<any>>
      %c17_i32_257 = arith.constant 17 : i32
      %c0_i32_258 = arith.constant 0 : i32
      %303 = tpu.memref_slice %arg7[%c17_i32_257, %c0_i32_258] : memref<32x128xf32, #tpu.memory_space<vmem>> -> memref<1x128xf32, #tpu.memory_space<vmem>>
      %304 = tpu.memref_slice %arg8[%c17_i32_254] : memref<32x!tpu.dma_semaphore, #tpu.memory_space<semaphore_mem>> -> memref<1x!tpu.dma_semaphore, #tpu.memory_space<semaphore_mem>>
      %305 = tpu.memref_squeeze %304 : memref<1x!tpu.dma_semaphore, #tpu.memory_space<semaphore_mem>> -> memref<!tpu.dma_semaphore, #tpu.memory_space<semaphore_mem>>
      tpu.wait_dma2 semaphore(%305 : memref<!tpu.dma_semaphore, #tpu.memory_space<semaphore_mem>>) src(%302 : memref<1x128xf32, #tpu.memory_space<any>>) dst(%303 : memref<1x128xf32, #tpu.memory_space<vmem>>)
      %c18_i32_259 = arith.constant 18 : i32
      %c0_i32_260 = arith.constant 0 : i32
      %c0_i32_261 = arith.constant 0 : i32
      %306 = tpu.memref_slice %arg2[%c0_i32_260, %c0_i32_261] : memref<512x128xf32, #tpu.memory_space<any>> -> memref<1x128xf32, #tpu.memory_space<any>>
      %c18_i32_262 = arith.constant 18 : i32
      %c0_i32_263 = arith.constant 0 : i32
      %307 = tpu.memref_slice %arg7[%c18_i32_262, %c0_i32_263] : memref<32x128xf32, #tpu.memory_space<vmem>> -> memref<1x128xf32, #tpu.memory_space<vmem>>
      %308 = tpu.memref_slice %arg8[%c18_i32_259] : memref<32x!tpu.dma_semaphore, #tpu.memory_space<semaphore_mem>> -> memref<1x!tpu.dma_semaphore, #tpu.memory_space<semaphore_mem>>
      %309 = tpu.memref_squeeze %308 : memref<1x!tpu.dma_semaphore, #tpu.memory_space<semaphore_mem>> -> memref<!tpu.dma_semaphore, #tpu.memory_space<semaphore_mem>>
      tpu.wait_dma2 semaphore(%309 : memref<!tpu.dma_semaphore, #tpu.memory_space<semaphore_mem>>) src(%306 : memref<1x128xf32, #tpu.memory_space<any>>) dst(%307 : memref<1x128xf32, #tpu.memory_space<vmem>>)
      %c19_i32_264 = arith.constant 19 : i32
      %c0_i32_265 = arith.constant 0 : i32
      %c0_i32_266 = arith.constant 0 : i32
      %310 = tpu.memref_slice %arg2[%c0_i32_265, %c0_i32_266] : memref<512x128xf32, #tpu.memory_space<any>> -> memref<1x128xf32, #tpu.memory_space<any>>
      %c19_i32_267 = arith.constant 19 : i32
      %c0_i32_268 = arith.constant 0 : i32
      %311 = tpu.memref_slice %arg7[%c19_i32_267, %c0_i32_268] : memref<32x128xf32, #tpu.memory_space<vmem>> -> memref<1x128xf32, #tpu.memory_space<vmem>>
      %312 = tpu.memref_slice %arg8[%c19_i32_264] : memref<32x!tpu.dma_semaphore, #tpu.memory_space<semaphore_mem>> -> memref<1x!tpu.dma_semaphore, #tpu.memory_space<semaphore_mem>>
      %313 = tpu.memref_squeeze %312 : memref<1x!tpu.dma_semaphore, #tpu.memory_space<semaphore_mem>> -> memref<!tpu.dma_semaphore, #tpu.memory_space<semaphore_mem>>
      tpu.wait_dma2 semaphore(%313 : memref<!tpu.dma_semaphore, #tpu.memory_space<semaphore_mem>>) src(%310 : memref<1x128xf32, #tpu.memory_space<any>>) dst(%311 : memref<1x128xf32, #tpu.memory_space<vmem>>)
      %c20_i32_269 = arith.constant 20 : i32
      %c0_i32_270 = arith.constant 0 : i32
      %c0_i32_271 = arith.constant 0 : i32
      %314 = tpu.memref_slice %arg2[%c0_i32_270, %c0_i32_271] : memref<512x128xf32, #tpu.memory_space<any>> -> memref<1x128xf32, #tpu.memory_space<any>>
      %c20_i32_272 = arith.constant 20 : i32
      %c0_i32_273 = arith.constant 0 : i32
      %315 = tpu.memref_slice %arg7[%c20_i32_272, %c0_i32_273] : memref<32x128xf32, #tpu.memory_space<vmem>> -> memref<1x128xf32, #tpu.memory_space<vmem>>
      %316 = tpu.memref_slice %arg8[%c20_i32_269] : memref<32x!tpu.dma_semaphore, #tpu.memory_space<semaphore_mem>> -> memref<1x!tpu.dma_semaphore, #tpu.memory_space<semaphore_mem>>
      %317 = tpu.memref_squeeze %316 : memref<1x!tpu.dma_semaphore, #tpu.memory_space<semaphore_mem>> -> memref<!tpu.dma_semaphore, #tpu.memory_space<semaphore_mem>>
      tpu.wait_dma2 semaphore(%317 : memref<!tpu.dma_semaphore, #tpu.memory_space<semaphore_mem>>) src(%314 : memref<1x128xf32, #tpu.memory_space<any>>) dst(%315 : memref<1x128xf32, #tpu.memory_space<vmem>>)
      %c21_i32_274 = arith.constant 21 : i32
      %c0_i32_275 = arith.constant 0 : i32
      %c0_i32_276 = arith.constant 0 : i32
      %318 = tpu.memref_slice %arg2[%c0_i32_275, %c0_i32_276] : memref<512x128xf32, #tpu.memory_space<any>> -> memref<1x128xf32, #tpu.memory_space<any>>
      %c21_i32_277 = arith.constant 21 : i32
      %c0_i32_278 = arith.constant 0 : i32
      %319 = tpu.memref_slice %arg7[%c21_i32_277, %c0_i32_278] : memref<32x128xf32, #tpu.memory_space<vmem>> -> memref<1x128xf32, #tpu.memory_space<vmem>>
      %320 = tpu.memref_slice %arg8[%c21_i32_274] : memref<32x!tpu.dma_semaphore, #tpu.memory_space<semaphore_mem>> -> memref<1x!tpu.dma_semaphore, #tpu.memory_space<semaphore_mem>>
      %321 = tpu.memref_squeeze %320 : memref<1x!tpu.dma_semaphore, #tpu.memory_space<semaphore_mem>> -> memref<!tpu.dma_semaphore, #tpu.memory_space<semaphore_mem>>
      tpu.wait_dma2 semaphore(%321 : memref<!tpu.dma_semaphore, #tpu.memory_space<semaphore_mem>>) src(%318 : memref<1x128xf32, #tpu.memory_space<any>>) dst(%319 : memref<1x128xf32, #tpu.memory_space<vmem>>)
      %c22_i32_279 = arith.constant 22 : i32
      %c0_i32_280 = arith.constant 0 : i32
      %c0_i32_281 = arith.constant 0 : i32
      %322 = tpu.memref_slice %arg2[%c0_i32_280, %c0_i32_281] : memref<512x128xf32, #tpu.memory_space<any>> -> memref<1x128xf32, #tpu.memory_space<any>>
      %c22_i32_282 = arith.constant 22 : i32
      %c0_i32_283 = arith.constant 0 : i32
      %323 = tpu.memref_slice %arg7[%c22_i32_282, %c0_i32_283] : memref<32x128xf32, #tpu.memory_space<vmem>> -> memref<1x128xf32, #tpu.memory_space<vmem>>
      %324 = tpu.memref_slice %arg8[%c22_i32_279] : memref<32x!tpu.dma_semaphore, #tpu.memory_space<semaphore_mem>> -> memref<1x!tpu.dma_semaphore, #tpu.memory_space<semaphore_mem>>
      %325 = tpu.memref_squeeze %324 : memref<1x!tpu.dma_semaphore, #tpu.memory_space<semaphore_mem>> -> memref<!tpu.dma_semaphore, #tpu.memory_space<semaphore_mem>>
      tpu.wait_dma2 semaphore(%325 : memref<!tpu.dma_semaphore, #tpu.memory_space<semaphore_mem>>) src(%322 : memref<1x128xf32, #tpu.memory_space<any>>) dst(%323 : memref<1x128xf32, #tpu.memory_space<vmem>>)
      %c23_i32_284 = arith.constant 23 : i32
      %c0_i32_285 = arith.constant 0 : i32
      %c0_i32_286 = arith.constant 0 : i32
      %326 = tpu.memref_slice %arg2[%c0_i32_285, %c0_i32_286] : memref<512x128xf32, #tpu.memory_space<any>> -> memref<1x128xf32, #tpu.memory_space<any>>
      %c23_i32_287 = arith.constant 23 : i32
      %c0_i32_288 = arith.constant 0 : i32
      %327 = tpu.memref_slice %arg7[%c23_i32_287, %c0_i32_288] : memref<32x128xf32, #tpu.memory_space<vmem>> -> memref<1x128xf32, #tpu.memory_space<vmem>>
      %328 = tpu.memref_slice %arg8[%c23_i32_284] : memref<32x!tpu.dma_semaphore, #tpu.memory_space<semaphore_mem>> -> memref<1x!tpu.dma_semaphore, #tpu.memory_space<semaphore_mem>>
      %329 = tpu.memref_squeeze %328 : memref<1x!tpu.dma_semaphore, #tpu.memory_space<semaphore_mem>> -> memref<!tpu.dma_semaphore, #tpu.memory_space<semaphore_mem>>
      tpu.wait_dma2 semaphore(%329 : memref<!tpu.dma_semaphore, #tpu.memory_space<semaphore_mem>>) src(%326 : memref<1x128xf32, #tpu.memory_space<any>>) dst(%327 : memref<1x128xf32, #tpu.memory_space<vmem>>)
      %c24_i32_289 = arith.constant 24 : i32
      %c0_i32_290 = arith.constant 0 : i32
      %c0_i32_291 = arith.constant 0 : i32
      %330 = tpu.memref_slice %arg2[%c0_i32_290, %c0_i32_291] : memref<512x128xf32, #tpu.memory_space<any>> -> memref<1x128xf32, #tpu.memory_space<any>>
      %c24_i32_292 = arith.constant 24 : i32
      %c0_i32_293 = arith.constant 0 : i32
      %331 = tpu.memref_slice %arg7[%c24_i32_292, %c0_i32_293] : memref<32x128xf32, #tpu.memory_space<vmem>> -> memref<1x128xf32, #tpu.memory_space<vmem>>
      %332 = tpu.memref_slice %arg8[%c24_i32_289] : memref<32x!tpu.dma_semaphore, #tpu.memory_space<semaphore_mem>> -> memref<1x!tpu.dma_semaphore, #tpu.memory_space<semaphore_mem>>
      %333 = tpu.memref_squeeze %332 : memref<1x!tpu.dma_semaphore, #tpu.memory_space<semaphore_mem>> -> memref<!tpu.dma_semaphore, #tpu.memory_space<semaphore_mem>>
      tpu.wait_dma2 semaphore(%333 : memref<!tpu.dma_semaphore, #tpu.memory_space<semaphore_mem>>) src(%330 : memref<1x128xf32, #tpu.memory_space<any>>) dst(%331 : memref<1x128xf32, #tpu.memory_space<vmem>>)
      %c25_i32_294 = arith.constant 25 : i32
      %c0_i32_295 = arith.constant 0 : i32
      %c0_i32_296 = arith.constant 0 : i32
      %334 = tpu.memref_slice %arg2[%c0_i32_295, %c0_i32_296] : memref<512x128xf32, #tpu.memory_space<any>> -> memref<1x128xf32, #tpu.memory_space<any>>
      %c25_i32_297 = arith.constant 25 : i32
      %c0_i32_298 = arith.constant 0 : i32
      %335 = tpu.memref_slice %arg7[%c25_i32_297, %c0_i32_298] : memref<32x128xf32, #tpu.memory_space<vmem>> -> memref<1x128xf32, #tpu.memory_space<vmem>>
      %336 = tpu.memref_slice %arg8[%c25_i32_294] : memref<32x!tpu.dma_semaphore, #tpu.memory_space<semaphore_mem>> -> memref<1x!tpu.dma_semaphore, #tpu.memory_space<semaphore_mem>>
      %337 = tpu.memref_squeeze %336 : memref<1x!tpu.dma_semaphore, #tpu.memory_space<semaphore_mem>> -> memref<!tpu.dma_semaphore, #tpu.memory_space<semaphore_mem>>
      tpu.wait_dma2 semaphore(%337 : memref<!tpu.dma_semaphore, #tpu.memory_space<semaphore_mem>>) src(%334 : memref<1x128xf32, #tpu.memory_space<any>>) dst(%335 : memref<1x128xf32, #tpu.memory_space<vmem>>)
      %c26_i32_299 = arith.constant 26 : i32
      %c0_i32_300 = arith.constant 0 : i32
      %c0_i32_301 = arith.constant 0 : i32
      %338 = tpu.memref_slice %arg2[%c0_i32_300, %c0_i32_301] : memref<512x128xf32, #tpu.memory_space<any>> -> memref<1x128xf32, #tpu.memory_space<any>>
      %c26_i32_302 = arith.constant 26 : i32
      %c0_i32_303 = arith.constant 0 : i32
      %339 = tpu.memref_slice %arg7[%c26_i32_302, %c0_i32_303] : memref<32x128xf32, #tpu.memory_space<vmem>> -> memref<1x128xf32, #tpu.memory_space<vmem>>
      %340 = tpu.memref_slice %arg8[%c26_i32_299] : memref<32x!tpu.dma_semaphore, #tpu.memory_space<semaphore_mem>> -> memref<1x!tpu.dma_semaphore, #tpu.memory_space<semaphore_mem>>
      %341 = tpu.memref_squeeze %340 : memref<1x!tpu.dma_semaphore, #tpu.memory_space<semaphore_mem>> -> memref<!tpu.dma_semaphore, #tpu.memory_space<semaphore_mem>>
      tpu.wait_dma2 semaphore(%341 : memref<!tpu.dma_semaphore, #tpu.memory_space<semaphore_mem>>) src(%338 : memref<1x128xf32, #tpu.memory_space<any>>) dst(%339 : memref<1x128xf32, #tpu.memory_space<vmem>>)
      %c27_i32_304 = arith.constant 27 : i32
      %c0_i32_305 = arith.constant 0 : i32
      %c0_i32_306 = arith.constant 0 : i32
      %342 = tpu.memref_slice %arg2[%c0_i32_305, %c0_i32_306] : memref<512x128xf32, #tpu.memory_space<any>> -> memref<1x128xf32, #tpu.memory_space<any>>
      %c27_i32_307 = arith.constant 27 : i32
      %c0_i32_308 = arith.constant 0 : i32
      %343 = tpu.memref_slice %arg7[%c27_i32_307, %c0_i32_308] : memref<32x128xf32, #tpu.memory_space<vmem>> -> memref<1x128xf32, #tpu.memory_space<vmem>>
      %344 = tpu.memref_slice %arg8[%c27_i32_304] : memref<32x!tpu.dma_semaphore, #tpu.memory_space<semaphore_mem>> -> memref<1x!tpu.dma_semaphore, #tpu.memory_space<semaphore_mem>>
      %345 = tpu.memref_squeeze %344 : memref<1x!tpu.dma_semaphore, #tpu.memory_space<semaphore_mem>> -> memref<!tpu.dma_semaphore, #tpu.memory_space<semaphore_mem>>
      tpu.wait_dma2 semaphore(%345 : memref<!tpu.dma_semaphore, #tpu.memory_space<semaphore_mem>>) src(%342 : memref<1x128xf32, #tpu.memory_space<any>>) dst(%343 : memref<1x128xf32, #tpu.memory_space<vmem>>)
      %c28_i32_309 = arith.constant 28 : i32
      %c0_i32_310 = arith.constant 0 : i32
      %c0_i32_311 = arith.constant 0 : i32
      %346 = tpu.memref_slice %arg2[%c0_i32_310, %c0_i32_311] : memref<512x128xf32, #tpu.memory_space<any>> -> memref<1x128xf32, #tpu.memory_space<any>>
      %c28_i32_312 = arith.constant 28 : i32
      %c0_i32_313 = arith.constant 0 : i32
      %347 = tpu.memref_slice %arg7[%c28_i32_312, %c0_i32_313] : memref<32x128xf32, #tpu.memory_space<vmem>> -> memref<1x128xf32, #tpu.memory_space<vmem>>
      %348 = tpu.memref_slice %arg8[%c28_i32_309] : memref<32x!tpu.dma_semaphore, #tpu.memory_space<semaphore_mem>> -> memref<1x!tpu.dma_semaphore, #tpu.memory_space<semaphore_mem>>
      %349 = tpu.memref_squeeze %348 : memref<1x!tpu.dma_semaphore, #tpu.memory_space<semaphore_mem>> -> memref<!tpu.dma_semaphore, #tpu.memory_space<semaphore_mem>>
      tpu.wait_dma2 semaphore(%349 : memref<!tpu.dma_semaphore, #tpu.memory_space<semaphore_mem>>) src(%346 : memref<1x128xf32, #tpu.memory_space<any>>) dst(%347 : memref<1x128xf32, #tpu.memory_space<vmem>>)
      %c29_i32_314 = arith.constant 29 : i32
      %c0_i32_315 = arith.constant 0 : i32
      %c0_i32_316 = arith.constant 0 : i32
      %350 = tpu.memref_slice %arg2[%c0_i32_315, %c0_i32_316] : memref<512x128xf32, #tpu.memory_space<any>> -> memref<1x128xf32, #tpu.memory_space<any>>
      %c29_i32_317 = arith.constant 29 : i32
      %c0_i32_318 = arith.constant 0 : i32
      %351 = tpu.memref_slice %arg7[%c29_i32_317, %c0_i32_318] : memref<32x128xf32, #tpu.memory_space<vmem>> -> memref<1x128xf32, #tpu.memory_space<vmem>>
      %352 = tpu.memref_slice %arg8[%c29_i32_314] : memref<32x!tpu.dma_semaphore, #tpu.memory_space<semaphore_mem>> -> memref<1x!tpu.dma_semaphore, #tpu.memory_space<semaphore_mem>>
      %353 = tpu.memref_squeeze %352 : memref<1x!tpu.dma_semaphore, #tpu.memory_space<semaphore_mem>> -> memref<!tpu.dma_semaphore, #tpu.memory_space<semaphore_mem>>
      tpu.wait_dma2 semaphore(%353 : memref<!tpu.dma_semaphore, #tpu.memory_space<semaphore_mem>>) src(%350 : memref<1x128xf32, #tpu.memory_space<any>>) dst(%351 : memref<1x128xf32, #tpu.memory_space<vmem>>)
      %c30_i32_319 = arith.constant 30 : i32
      %c0_i32_320 = arith.constant 0 : i32
      %c0_i32_321 = arith.constant 0 : i32
      %354 = tpu.memref_slice %arg2[%c0_i32_320, %c0_i32_321] : memref<512x128xf32, #tpu.memory_space<any>> -> memref<1x128xf32, #tpu.memory_space<any>>
      %c30_i32_322 = arith.constant 30 : i32
      %c0_i32_323 = arith.constant 0 : i32
      %355 = tpu.memref_slice %arg7[%c30_i32_322, %c0_i32_323] : memref<32x128xf32, #tpu.memory_space<vmem>> -> memref<1x128xf32, #tpu.memory_space<vmem>>
      %356 = tpu.memref_slice %arg8[%c30_i32_319] : memref<32x!tpu.dma_semaphore, #tpu.memory_space<semaphore_mem>> -> memref<1x!tpu.dma_semaphore, #tpu.memory_space<semaphore_mem>>
      %357 = tpu.memref_squeeze %356 : memref<1x!tpu.dma_semaphore, #tpu.memory_space<semaphore_mem>> -> memref<!tpu.dma_semaphore, #tpu.memory_space<semaphore_mem>>
      tpu.wait_dma2 semaphore(%357 : memref<!tpu.dma_semaphore, #tpu.memory_space<semaphore_mem>>) src(%354 : memref<1x128xf32, #tpu.memory_space<any>>) dst(%355 : memref<1x128xf32, #tpu.memory_space<vmem>>)
      %c31_i32_324 = arith.constant 31 : i32
      %c0_i32_325 = arith.constant 0 : i32
      %c0_i32_326 = arith.constant 0 : i32
      %358 = tpu.memref_slice %arg2[%c0_i32_325, %c0_i32_326] : memref<512x128xf32, #tpu.memory_space<any>> -> memref<1x128xf32, #tpu.memory_space<any>>
      %c31_i32_327 = arith.constant 31 : i32
      %c0_i32_328 = arith.constant 0 : i32
      %359 = tpu.memref_slice %arg7[%c31_i32_327, %c0_i32_328] : memref<32x128xf32, #tpu.memory_space<vmem>> -> memref<1x128xf32, #tpu.memory_space<vmem>>
      %360 = tpu.memref_slice %arg8[%c31_i32_324] : memref<32x!tpu.dma_semaphore, #tpu.memory_space<semaphore_mem>> -> memref<1x!tpu.dma_semaphore, #tpu.memory_space<semaphore_mem>>
      %361 = tpu.memref_squeeze %360 : memref<1x!tpu.dma_semaphore, #tpu.memory_space<semaphore_mem>> -> memref<!tpu.dma_semaphore, #tpu.memory_space<semaphore_mem>>
      tpu.wait_dma2 semaphore(%361 : memref<!tpu.dma_semaphore, #tpu.memory_space<semaphore_mem>>) src(%358 : memref<1x128xf32, #tpu.memory_space<any>>) dst(%359 : memref<1x128xf32, #tpu.memory_space<vmem>>)
      %c0_329 = arith.constant 0 : index
      %c0_330 = arith.constant 0 : index
      %362 = vector.load %arg7[%c0_329, %c0_330] : memref<32x128xf32, #tpu.memory_space<vmem>>, vector<32x128xf32>
      %363 = vector.shape_cast %362 : vector<32x128xf32> to vector<8x4x128xf32>
      %cst_331 = arith.constant dense<0.000000e+00> : vector<8x128xf32>
      %364 = vector.multi_reduction <add>, %363, %cst_331 [1] : vector<8x4x128xf32> to vector<8x128xf32>
      %cst_332 = arith.constant 2.500000e-01 : f32
      %365 = vector.broadcast %cst_332 : f32 to vector<8x128xf32>
      %366 = arith.mulf %364, %365 : vector<8x128xf32>
      %c0_333 = arith.constant 0 : index
      %c0_334 = arith.constant 0 : index
      %367 = vector.load %arg6[%c0_333, %c0_334] : memref<8x128xf32, #tpu.memory_space<vmem>>, vector<8x128xf32>
      tpu.vector_store %arg6[%c0_333, %c0_334], %366 {strides = array<i32>} : memref<8x128xf32, #tpu.memory_space<vmem>>, vector<8x128xf32>,
    } else {
    }
    %c0 = arith.constant 0 : index
    %c0_1 = arith.constant 0 : index
    %3 = vector.load %arg6[%c0, %c0_1] : memref<8x128xf32, #tpu.memory_space<vmem>>, vector<8x128xf32>
    %c0_2 = arith.constant 0 : index
    %c0_3 = arith.constant 0 : index
    %4 = vector.load %arg3[%c0_2, %c0_3] : memref<128x128xf32, #tpu.memory_space<vmem>>, vector<128x128xf32>
    %cst = arith.constant dense<0.000000e+00> : vector<8x128xf32>
    %5 = tpu.matmul %3, %4, %cst {dimension_numbers = #tpu.dot_dimension_numbers<[1], [0], [0], [1], [0, 0, 1, 1], [], []>} : vector<8x128xf32>, vector<128x128xf32>, vector<8x128xf32> -> vector<8x128xf32>
    %c0_4 = arith.constant 0 : index
    %c0_5 = arith.constant 0 : index
    %6 = vector.load %arg4[%c0_4, %c0_5] : memref<1x128xf32, #tpu.memory_space<vmem>>, vector<1x128xf32>
    %7 = vector.broadcast %6 : vector<1x128xf32> to vector<8x128xf32>
    %8 = arith.addf %5, %7 : vector<8x128xf32>
    %c0_6 = arith.constant 0 : index
    %c0_7 = arith.constant 0 : index
    %9 = vector.load %arg5[%c0_6, %c0_7] : memref<8x128xf32, #tpu.memory_space<vmem>>, vector<8x128xf32>
    tpu.vector_store %arg5[%c0_6, %c0_7], %8 {strides = array<i32>} : memref<8x128xf32, #tpu.memory_space<vmem>>, vector<8x128xf32>,
    return
  }
  func.func @transform_1(%arg0: i32, %arg1: memref<32xi32, #tpu.memory_space<smem>>) -> (i32, i32) {
    %c0_i32 = arith.constant 0 : i32
    %c0_i32_0 = arith.constant 0 : i32
    return %c0_i32, %arg0 : i32, i32
  }
  func.func @transform_2(%arg0: i32, %arg1: memref<32xi32, #tpu.memory_space<smem>>) -> (i32, i32) {
    %c0_i32 = arith.constant 0 : i32
    %c0_i32_0 = arith.constant 0 : i32
    return %c0_i32, %arg0 : i32, i32
  }
  func.func @transform_3(%arg0: i32, %arg1: memref<32xi32, #tpu.memory_space<smem>>) -> (i32, i32) {
    %c0_i32 = arith.constant 0 : i32
    %c0_i32_0 = arith.constant 0 : i32
    return %c0_i32, %arg0 : i32, i32
  }
}

</mosaic_0001>

<llo_original>
// kernel: tpu_custom_call.1
$region0: #{tpu_custom_call.1}
  #allocation0 [shape = 'u32[]', space=smem, size = 0x4, offset = 0x4, fixed_abs, tag = 'smem constant byte address 0x4 - core index']
  #allocation1 [shape = 'u32[72,128]{1,0:T(1,128)}', space=vmem, size = 0x9000, scoped, tag = 'internal scratch']
  #allocation2 [shape = 'f32[8,128]{1,0:T(8,128)}', space=vmem, size = 0x1000, scoped, tag = 'scratch operand']
  #allocation3 [shape = 'f32[32,128]{1,0:T(8,128)}', space=vmem, size = 0x4000, scoped, tag = 'scratch operand']
  #allocation4 [shape = 's32[32]{0}', space=sflag, size = 0x80, scoped, tag = 'scratch operand']
  #allocation5 [shape = 's32[1]{0}', space=sflag, size = 0x4, scoped, tag = 'scoped memory for tpu_custom_call.1']
  #allocation6 [shape = 'u8[512]{0}', space=smem, size = 0x200, scoped, tag = 'prefetched SMEM operand 0']
  #allocation13 [shape = 's32[]', space=sflag, size = 0x4, offset = 0, fixed_abs, tag = 'sflag constant byte address 0x0 - dummy sync flag']
  #allocation14 [shape = 's32[]', space=sflag, size = 0x4, offset = 0, fixed_abs, tag = 'sflag constant byte address 0x0 - dummy sync flag']
  #allocation15 [shape = 'u32[]', space=smem, size = 0x4, offset = 0x44, fixed_abs, tag = 'smem constant byte address 0x44 - assertion arg 0']
  #allocation16 [shape = 'u32[]', space=smem, size = 0x4, offset = 0x48, fixed_abs, tag = 'smem constant byte address 0x48 - assertion arg 1']
  #allocation17 [shape = 's32[]', space=sflag, size = 0x4, offset = 0, fixed_abs, tag = 'sflag constant byte address 0x0 - dummy sync flag']
  #allocation18 [shape = 's32[]', space=sflag, size = 0x4, offset = 0, fixed_abs, tag = 'sflag constant byte address 0x0 - dummy sync flag']
  #allocation19 [shape = 's32[]', space=sflag, size = 0x4, offset = 0, fixed_abs, tag = 'sflag constant byte address 0x0 - dummy sync flag']
  #allocation20 [shape = 's32[]', space=sflag, size = 0x4, offset = 0, fixed_abs, tag = 'sflag constant byte address 0x0 - dummy sync flag']
  #allocation21 [shape = 's32[]', space=sflag, size = 0x4, offset = 0, fixed_abs, tag = 'sflag constant byte address 0x0 - dummy sync flag']
  #allocation22 [shape = 's32[]', space=sflag, size = 0x4, offset = 0, fixed_abs, tag = 'sflag constant byte address 0x0 - dummy sync flag']
  #allocation23 [shape = 's32[]', space=sflag, size = 0x4, offset = 0, fixed_abs, tag = 'sflag constant byte address 0x0 - dummy sync flag']
  #allocation24 [shape = 's32[]', space=sflag, size = 0x4, offset = 0, fixed_abs, tag = 'sflag constant byte address 0x0 - dummy sync flag']
  #allocation25 [shape = 's32[]', space=sflag, size = 0x4, offset = 0, fixed_abs, tag = 'sflag constant byte address 0x0 - dummy sync flag']
  #allocation26 [shape = 's32[]', space=sflag, size = 0x4, offset = 0, fixed_abs, tag = 'sflag constant byte address 0x0 - dummy sync flag']
  #allocation27 [shape = 's32[]', space=sflag, size = 0x4, offset = 0, fixed_abs, tag = 'sflag constant byte address 0x0 - dummy sync flag']
  #allocation28 [shape = 's32[]', space=sflag, size = 0x4, offset = 0, fixed_abs, tag = 'sflag constant byte address 0x0 - dummy sync flag']
  #allocation29 [shape = 's32[]', space=sflag, size = 0x4, offset = 0, fixed_abs, tag = 'sflag constant byte address 0x0 - dummy sync flag']
  #allocation30 [shape = 's32[]', space=sflag, size = 0x4, offset = 0, fixed_abs, tag = 'sflag constant byte address 0x0 - dummy sync flag']
  #allocation31 [shape = 's32[]', space=sflag, size = 0x4, offset = 0, fixed_abs, tag = 'sflag constant byte address 0x0 - dummy sync flag']
  #allocation32 [shape = 's32[]', space=sflag, size = 0x4, offset = 0, fixed_abs, tag = 'sflag constant byte address 0x0 - dummy sync flag']
  #allocation33 [shape = 's32[]', space=sflag, size = 0x4, offset = 0, fixed_abs, tag = 'sflag constant byte address 0x0 - dummy sync flag']
  #allocation34 [shape = 's32[]', space=sflag, size = 0x4, offset = 0, fixed_abs, tag = 'sflag constant byte address 0x0 - dummy sync flag']
  #allocation35 [shape = 's32[]', space=sflag, size = 0x4, offset = 0, fixed_abs, tag = 'sflag constant byte address 0x0 - dummy sync flag']
  #allocation36 [shape = 's32[]', space=sflag, size = 0x4, offset = 0, fixed_abs, tag = 'sflag constant byte address 0x0 - dummy sync flag']
  #allocation37 [shape = 's32[]', space=sflag, size = 0x4, offset = 0, fixed_abs, tag = 'sflag constant byte address 0x0 - dummy sync flag']
  #allocation38 [shape = 's32[]', space=sflag, size = 0x4, offset = 0, fixed_abs, tag = 'sflag constant byte address 0x0 - dummy sync flag']
  #allocation39 [shape = 's32[]', space=sflag, size = 0x4, offset = 0, fixed_abs, tag = 'sflag constant byte address 0x0 - dummy sync flag']
  #allocation40 [shape = 's32[]', space=sflag, size = 0x4, offset = 0, fixed_abs, tag = 'sflag constant byte address 0x0 - dummy sync flag']
  #allocation41 [shape = 's32[]', space=sflag, size = 0x4, offset = 0, fixed_abs, tag = 'sflag constant byte address 0x0 - dummy sync flag']
  #allocation42 [shape = 's32[]', space=sflag, size = 0x4, offset = 0, fixed_abs, tag = 'sflag constant byte address 0x0 - dummy sync flag']
  #allocation43 [shape = 's32[]', space=sflag, size = 0x4, offset = 0, fixed_abs, tag = 'sflag constant byte address 0x0 - dummy sync flag']
  #allocation44 [shape = 's32[]', space=sflag, size = 0x4, offset = 0, fixed_abs, tag = 'sflag constant byte address 0x0 - dummy sync flag']
  #allocation45 [shape = 's32[]', space=sflag, size = 0x4, offset = 0, fixed_abs, tag = 'sflag constant byte address 0x0 - dummy sync flag']
  #allocation46 [shape = 's32[]', space=sflag, size = 0x4, offset = 0, fixed_abs, tag = 'sflag constant byte address 0x0 - dummy sync flag']
  #allocation47 [shape = 's32[]', space=sflag, size = 0x4, offset = 0, fixed_abs, tag = 'sflag constant byte address 0x0 - dummy sync flag']
  #allocation48 [shape = 's32[]', space=sflag, size = 0x4, offset = 0, fixed_abs, tag = 'sflag constant byte address 0x0 - dummy sync flag']
  #allocation49 [shape = 's32[]', space=sflag, size = 0x4, offset = 0, fixed_abs, tag = 'sflag constant byte address 0x0 - dummy sync flag']
  #allocation50 [shape = 's32[]', space=sflag, size = 0x4, offset = 0, fixed_abs, tag = 'sflag constant byte address 0x0 - dummy sync flag']
  #allocation51 [shape = 's32[]', space=sflag, size = 0x4, offset = 0, fixed_abs, tag = 'sflag constant byte address 0x0 - dummy sync flag']
  #allocation52 [shape = 's32[]', space=sflag, size = 0x4, offset = 0, fixed_abs, tag = 'sflag constant byte address 0x0 - dummy sync flag']
  #allocation53 [shape = 's32[]', space=sflag, size = 0x4, offset = 0, fixed_abs, tag = 'sflag constant byte address 0x0 - dummy sync flag']
  #allocation54 [shape = 's32[]', space=sflag, size = 0x4, offset = 0, fixed_abs, tag = 'sflag constant byte address 0x0 - dummy sync flag']
  #allocation55 [shape = 's32[]', space=sflag, size = 0x4, offset = 0, fixed_abs, tag = 'sflag constant byte address 0x0 - dummy sync flag']
  #allocation56 [shape = 's32[]', space=sflag, size = 0x4, offset = 0, fixed_abs, tag = 'sflag constant byte address 0x0 - dummy sync flag']
  #allocation57 [shape = 's32[]', space=sflag, size = 0x4, offset = 0, fixed_abs, tag = 'sflag constant byte address 0x0 - dummy sync flag']
  #allocation58 [shape = 's32[]', space=sflag, size = 0x4, offset = 0, fixed_abs, tag = 'sflag constant byte address 0x0 - dummy sync flag']
  #allocation59 [shape = 's32[]', space=sflag, size = 0x4, offset = 0, fixed_abs, tag = 'sflag constant byte address 0x0 - dummy sync flag']
  #allocation60 [shape = 's32[]', space=sflag, size = 0x4, offset = 0, fixed_abs, tag = 'sflag constant byte address 0x0 - dummy sync flag']
  #allocation61 [shape = 's32[]', space=sflag, size = 0x4, offset = 0, fixed_abs, tag = 'sflag constant byte address 0x0 - dummy sync flag']
  #allocation62 [shape = 's32[]', space=sflag, size = 0x4, offset = 0, fixed_abs, tag = 'sflag constant byte address 0x0 - dummy sync flag']
  #allocation63 [shape = 's32[]', space=sflag, size = 0x4, offset = 0, fixed_abs, tag = 'sflag constant byte address 0x0 - dummy sync flag']
  #allocation64 [shape = 's32[]', space=sflag, size = 0x4, offset = 0, fixed_abs, tag = 'sflag constant byte address 0x0 - dummy sync flag']
  #allocation65 [shape = 's32[]', space=sflag, size = 0x4, offset = 0, fixed_abs, tag = 'sflag constant byte address 0x0 - dummy sync flag']
  #allocation66 [shape = 's32[]', space=sflag, size = 0x4, offset = 0, fixed_abs, tag = 'sflag constant byte address 0x0 - dummy sync flag']
  #allocation67 [shape = 's32[]', space=sflag, size = 0x4, offset = 0, fixed_abs, tag = 'sflag constant byte address 0x0 - dummy sync flag']
  #allocation68 [shape = 's32[]', space=sflag, size = 0x4, offset = 0, fixed_abs, tag = 'sflag constant byte address 0x0 - dummy sync flag']
  #allocation69 [shape = 's32[]', space=sflag, size = 0x4, offset = 0, fixed_abs, tag = 'sflag constant byte address 0x0 - dummy sync flag']
  #allocation70 [shape = 's32[]', space=sflag, size = 0x4, offset = 0, fixed_abs, tag = 'sflag constant byte address 0x0 - dummy sync flag']
  #allocation71 [shape = 's32[]', space=sflag, size = 0x4, offset = 0, fixed_abs, tag = 'sflag constant byte address 0x0 - dummy sync flag']
  #allocation72 [shape = 's32[]', space=sflag, size = 0x4, offset = 0, fixed_abs, tag = 'sflag constant byte address 0x0 - dummy sync flag']
  #allocation73 [shape = 's32[]', space=sflag, size = 0x4, offset = 0, fixed_abs, tag = 'sflag constant byte address 0x0 - dummy sync flag']
  #allocation74 [shape = 's32[]', space=sflag, size = 0x4, offset = 0, fixed_abs, tag = 'sflag constant byte address 0x0 - dummy sync flag']
  #allocation75 [shape = 's32[]', space=sflag, size = 0x4, offset = 0, fixed_abs, tag = 'sflag constant byte address 0x0 - dummy sync flag']
  #allocation76 [shape = 's32[]', space=sflag, size = 0x4, offset = 0, fixed_abs, tag = 'sflag constant byte address 0x0 - dummy sync flag']
  #allocation77 [shape = 's32[]', space=sflag, size = 0x4, offset = 0, fixed_abs, tag = 'sflag constant byte address 0x0 - dummy sync flag']
  #allocation78 [shape = 's32[]', space=sflag, size = 0x4, offset = 0, fixed_abs, tag = 'sflag constant byte address 0x0 - dummy sync flag']
  %s0 = inlined_call_operand.hbm [shape: s32[32], index: 0, kind: input, shape index: {}]
  %s1 = inlined_call_operand.hbm [shape: f32[512,128], index: 1, kind: input, shape index: {}]
  %s2 = inlined_call_operand.hbm [shape: f32[128,512], index: 2, kind: input, shape index: {}]
  %s3 = inlined_call_operand.hbm [shape: f32[1,512], index: 3, kind: input, shape index: {}]
  %s4 = inlined_call_operand.hbm [shape: f32[8,512], index: 4, kind: output, shape index: {}]
  %s5 = sld [smem:[#allocation0]]
  $region181: #{tpu_custom_call.1} parent=0
    _
  %s7 = ssub.s32 1, %s5
  %s8 = scalar_select 0, %s7, %s5
  %s10 = sshll.u32 %s0, 4
  %s11 = int_to_ptr.hbm [resolvable:$true] %s10
  %13 = dma.hbm_to_smem %s11, 16, [#allocation6], [#allocation5]
  %15 = dma.done [#allocation5], 16
  %16 = sfence
  $region1: #{tpu_custom_call.1} parent=0
    #allocation7 [shape = 'u8[131072]{0}', space=vmem, size = 0x20000, scoped, tag = 'input window, operand 2']
    #allocation8 [shape = 's32[2]{0}', space=sflag, size = 0x8, scoped, tag = 'scoped memory for tpu_custom_call.1']
    #allocation9 [shape = 's32[2]{0}', space=sflag, size = 0x8, scoped, tag = 'scoped memory for tpu_custom_call.1']
    #allocation10 [shape = 'u8[1024]{0}', space=vmem, size = 0x400, scoped, tag = 'input window, operand 3']
    #allocation11 [shape = 's32[2]{0}', space=sflag, size = 0x8, scoped, tag = 'scoped memory for tpu_custom_call.1']
    #allocation12 [shape = 'u8[8192]{0}', space=vmem, size = 0x2000, scoped, tag = 'output window, operand 0']
    %17 = vsyncpa [#allocation8], 0
    %s18 = scalar_lea.sflag [#allocation8], 1
    %19 = vsyncpa %s18, 0
    %20 = vsyncpa [#allocation11], 0
    %s21 = scalar_lea.sflag [#allocation11], 1
    %22 = vsyncpa %s21, 0
    %23 = vsyncpa [#allocation9], 0
    %s24 = scalar_lea.sflag [#allocation9], 1
    %25 = vsyncpa %s24, 0
    loop: start=0, step=1, limit=6
    $region2: #{tpu_custom_call.1} parent=1 // loop_pre_header
      _
    $region3: #{tpu_custom_call.1} parent=1 // loop_header
      %s27 = sphi 0, %s31
      %p28 = scmp.ge.s32.totalorder %s27, 6
      %s37 = sphi 0, %s39
      %s40 = sphi 0, %s37
      %s41 = sphi 0, %s40
      %s57 = sphi 0, %s41
      %s63 = sphi 0, %s65
      %s66 = sphi 0, %s63
      %s67 = sphi 0, %s66
      %s83 = sphi 0, %s67
      %s89 = sphi 0, %s91
      %s92 = sphi 0, %s89
      %s93 = sphi 0, %s92
      %s109 = sphi 0, %s93
    $region4: #{tpu_custom_call.1} parent=1 // loop_header_branch
      %30 = sbr.rel (%p28) target = $region8
    $region5: #{tpu_custom_call.1} parent=1 // loop_body
      %s32 = ssub.s32 %s27, 1
      %s33 = ssub.s32 %s27, 2
      %s34 = sadd.s32 %s27, 1
      %s35 = ssub.s32 %s27, %s34
      %p36 = scmp.eq.s32.totalorder %s35, 0
      %s38 = sadd.s32 %s37, 1
      %s39 = scalar_select %p36, %s37, %s38
      %p42 = pneg %p36
      %p43 = scmp.eq.s32.totalorder %s27, 3
      %p44 = por %p42, %p43
      %p45 = scmp.ne.s32.totalorder %s37, %s40
      %p46 = scmp.eq.s32.totalorder %s27, 0
      %p47 = por %p45, %p46
      %p48 = scmp.ne.s32.totalorder %s37, %s40
      %p49 = scmp.eq.s32.totalorder %s32, 3
      %p50 = por %p48, %p49
      %p51 = scmp.ne.s32.totalorder %s40, %s41
      %p52 = scmp.eq.s32.totalorder %s32, 0
      %p53 = por %p51, %p52
      %p54 = scmp.ne.s32.totalorder %s40, %s41
      %p55 = scmp.eq.s32.totalorder %s33, 3
      %p56 = por %p54, %p55
      %p58 = scmp.ne.s32.totalorder %s41, %s57
      %p59 = scmp.eq.s32.totalorder %s33, 0
      %p60 = por %p58, %p59
      %s61 = ssub.s32 %s27, %s34
      %p62 = scmp.eq.s32.totalorder %s61, 0
      %s64 = sadd.s32 %s63, 1
      %s65 = scalar_select %p62, %s63, %s64
      %p68 = pneg %p62
      %p69 = scmp.eq.s32.totalorder %s27, 3
      %p70 = por %p68, %p69
      %p71 = scmp.ne.s32.totalorder %s63, %s66
      %p72 = scmp.eq.s32.totalorder %s27, 0
      %p73 = por %p71, %p72
      %p74 = scmp.ne.s32.totalorder %s63, %s66
      %p75 = scmp.eq.s32.totalorder %s32, 3
      %p76 = por %p74, %p75
      %p77 = scmp.ne.s32.totalorder %s66, %s67
      %p78 = scmp.eq.s32.totalorder %s32, 0
      %p79 = por %p77, %p78
      %p80 = scmp.ne.s32.totalorder %s66, %s67
      %p81 = scmp.eq.s32.totalorder %s33, 3
      %p82 = por %p80, %p81
      %p84 = scmp.ne.s32.totalorder %s67, %s83
      %p85 = scmp.eq.s32.totalorder %s33, 0
      %p86 = por %p84, %p85
      %s87 = ssub.s32 %s27, %s34
      %p88 = scmp.eq.s32.totalorder %s87, 0
      %s90 = sadd.s32 %s89, 1
      %s91 = scalar_select %p88, %s89, %s90
      %p94 = pneg %p88
      %p95 = scmp.eq.s32.totalorder %s27, 3
      %p96 = por %p94, %p95
      %p97 = scmp.ne.s32.totalorder %s89, %s92
      %p98 = scmp.eq.s32.totalorder %s27, 0
      %p99 = por %p97, %p98
      %p100 = scmp.ne.s32.totalorder %s89, %s92
      %p101 = scmp.eq.s32.totalorder %s32, 3
      %p102 = por %p100, %p101
      %p103 = scmp.ne.s32.totalorder %s92, %s93
      %p104 = scmp.eq.s32.totalorder %s32, 0
      %p105 = por %p103, %p104
      %p106 = scmp.ne.s32.totalorder %s92, %s93
      %p107 = scmp.eq.s32.totalorder %s33, 3
      %p108 = por %p106, %p107
      %p110 = scmp.ne.s32.totalorder %s93, %s109
      %p111 = scmp.eq.s32.totalorder %s33, 0
      %p112 = por %p110, %p111
      %p113 = scmp.le.s32.totalorder 1, %s27
      %p114 = scmp.lt.s32.totalorder %s27, 5
      %p115 = pnand %p113, %p114
      %p116 = pneg %p115
      // Predicated region
      $region9: #{tpu_custom_call.1} parent=5 // pred_check
        _
      $region10: #{tpu_custom_call.1} parent=5 // pred_check_branch
        %118 = sbr.rel (%p115) target = $region12
      $region11: #{tpu_custom_call.1} parent=5 // pred_region
        %s119 = ssub.s32 %s27, 1
      $region12: #{tpu_custom_call.1} parent=5 // pred_fallthru
        _
      %p120 = scmp.lt.s32.totalorder %s27, 4
      // Predicated region
      $region13: #{tpu_custom_call.1} parent=5 // pred_check
        %p121 = pneg %p120
      $region14: #{tpu_custom_call.1} parent=5 // pred_check_branch
        %123 = sbr.rel (%p121) target = $region16
      $region15: #{tpu_custom_call.1} parent=5 // pred_region
        // Predicated region
        $region17: #{tpu_custom_call.1} parent=15 // pred_check
          %p124 = pneg %p47
        $region18: #{tpu_custom_call.1} parent=15 // pred_check_branch
          %126 = sbr.rel (%p124) target = $region20
        $region19: #{tpu_custom_call.1} parent=15 // pred_region
          %s127 = sand.u32 %s37, 1
          %s128 = scalar_lea.sflag [#allocation8], %s127
          %s129 = sand.u32 %s37, 1
          %s130 = smul.addr %s129, 128
          %s131 = scalar_lea.vmem [#allocation7], %s130
          %133 = vsyncadd %s128, 0
          %s134 = smul.addr %s27, 8
          %s135 = scalar_lea.hbm %s2, %s134
          %s136 = sshll.u32 %s135, 4
          %s137 = int_to_ptr.hbm [resolvable:$true] %s136
          %s138 = sshll.u32 %s131, 4
          %s139 = int_to_ptr.vmem [resolvable:$true] %s138
          %144 = dma.hbm_to_vmem [thread:$0]  %s137, 2048, %s139, %s128, 512, 128, 8
        $region20: #{tpu_custom_call.1} parent=15 // pred_fallthru
          _
        // Predicated region
        $region21: #{tpu_custom_call.1} parent=15 // pred_check
          %p145 = pneg %p73
        $region22: #{tpu_custom_call.1} parent=15 // pred_check_branch
          %147 = sbr.rel (%p145) target = $region24
        $region23: #{tpu_custom_call.1} parent=15 // pred_region
          %s148 = sand.u32 %s63, 1
          %s149 = scalar_lea.sflag [#allocation11], %s148
          %s150 = sand.u32 %s63, 1
          %s151 = scalar_lea.vmem [#allocation10], %s150
          %153 = vsyncadd %s149, 0
          %s154 = scalar_lea.hbm %s3, %s27
          %s156 = sshll.u32 %s154, 4
          %s157 = int_to_ptr.hbm [resolvable:$true] %s156
          %s158 = sshll.u32 %s151, 4
          %s159 = int_to_ptr.vmem [resolvable:$true] %s158
          %161 = dma.hbm_to_vmem [thread:$0]  %s157, 16, %s159, %s149
        $region24: #{tpu_custom_call.1} parent=15 // pred_fallthru
          _
      $region16: #{tpu_custom_call.1} parent=5 // pred_fallthru
        _
      %p162 = scmp.le.s32.totalorder 1, %s27
      %p163 = scmp.lt.s32.totalorder %s27, 5
      %p164 = pnand %p162, %p163
      %p165 = pneg %p164
      // Predicated region
      $region25: #{tpu_custom_call.1} parent=5 // pred_check
        _
      $region26: #{tpu_custom_call.1} parent=5 // pred_check_branch
        %167 = sbr.rel (%p164) target = $region28
      $region27: #{tpu_custom_call.1} parent=5 // pred_region
        %s168 = ssub.s32 %s27, 1
        %s169 = sand.u32 %s40, 1
        %s170 = scalar_lea.sflag [#allocation8], %s169
        %s171 = sand.u32 %s40, 1
        %s172 = smul.addr %s171, 128
        %s173 = scalar_lea.vmem [#allocation7], %s172
        // Predicated region
        $region29: #{tpu_custom_call.1} parent=27 // pred_check
          %p174 = pneg %p53
        $region30: #{tpu_custom_call.1} parent=27 // pred_check_branch
          %176 = sbr.rel (%p174) target = $region32
        $region31: #{tpu_custom_call.1} parent=27 // pred_region
          %178 = dma.done %s170, 2048
        $region32: #{tpu_custom_call.1} parent=27 // pred_fallthru
          _
        %s179 = sand.u32 %s66, 1
        %s180 = scalar_lea.sflag [#allocation11], %s179
        %s181 = sand.u32 %s66, 1
        %s182 = scalar_lea.vmem [#allocation10], %s181
        // Predicated region
        $region33: #{tpu_custom_call.1} parent=27 // pred_check
          %p183 = pneg %p79
        $region34: #{tpu_custom_call.1} parent=27 // pred_check_branch
          %185 = sbr.rel (%p183) target = $region36
        $region35: #{tpu_custom_call.1} parent=27 // pred_region
          %187 = dma.done %s180, 16
        $region36: #{tpu_custom_call.1} parent=27 // pred_fallthru
          _
        %s188 = sand.u32 %s40, 1
        %s189 = scalar_lea.sflag [#allocation8], %s188
        %s190 = sand.u32 %s40, 1
        %s191 = smul.addr %s190, 128
        %s192 = scalar_lea.vmem [#allocation7], %s191
        %p193 = pneg %p53
        %p194 = pneg %p50
        %s195 = sand.u32 %s66, 1
        %s196 = scalar_lea.sflag [#allocation11], %s195
        %s197 = sand.u32 %s66, 1
        %s198 = scalar_lea.vmem [#allocation10], %s197
        %p199 = pneg %p79
        %p200 = pneg %p76
        %p201 = pneg %p105
        %p202 = pneg %p102
        %s203 = sand.u32 %s92, 1
        %s204 = scalar_lea.sflag [#allocation9], %s203
        %s205 = sand.u32 %s92, 1
        %s206 = smul.addr %s205, 8
        %s207 = scalar_lea.vmem [#allocation12], %s206
        %p208 = scmp.eq.s32.totalorder %s32, 0
        // Predicated region
        $region37: #{tpu_custom_call.1} parent=27 // pred_check
          %p209 = pneg %p208
        $region38: #{tpu_custom_call.1} parent=27 // pred_check_branch
          %211 = sbr.rel (%p209) target = $region40
        $region39: #{tpu_custom_call.1} parent=27 // pred_region
          %s212 = sld [smem:[#allocation6]]
          %p213 = scmp.gt.s32.totalorder %s212, 0
          %s214 = scalar_select %p213, %s212, 0
          %p215 = scmp.lt.s32.totalorder %s214, 511
          %s216 = scalar_select %p215, %s214, 511
          %s217 = scalar_lea.hbm %s1, %s216
          // Predicated region
          $region41: #{tpu_custom_call.1} parent=39 // pred_check
            _
          $region42: #{tpu_custom_call.1} parent=39 // pred_check_branch
            %219 = sbr.rel target = $region44
          $region43: #{tpu_custom_call.1} parent=39 // pred_region
            %220 = sst [smem:[#allocation15]] [#allocation14]
            %221 = sst [smem:[#allocation16]] [#allocation13]
          $region44: #{tpu_custom_call.1} parent=39 // pred_fallthru
            _
          %223 = shalt.err (0)
          %s225 = sshll.u32 %s217, 4
          %s226 = int_to_ptr.hbm [resolvable:$true] %s225
          %s227 = sshll.u32 [#allocation3], 4
          %s228 = int_to_ptr.vmem [resolvable:$true] %s227
          %230 = dma.hbm_to_vmem [thread:$0]  %s226, 16, %s228, [#allocation4]
          %s231 = sld [smem:[#allocation6 + $0x1]]
          %p232 = scmp.gt.s32.totalorder %s231, 0
          %s233 = scalar_select %p232, %s231, 0
          %p234 = scmp.lt.s32.totalorder %s233, 511
          %s235 = scalar_select %p234, %s233, 511
          %s236 = scalar_lea.hbm %s1, %s235
          %s237 = scalar_lea.vmem [#allocation3], 1
          %s238 = scalar_lea.sflag [#allocation4], 1
          // Predicated region
          $region45: #{tpu_custom_call.1} parent=39 // pred_check
            _
          $region46: #{tpu_custom_call.1} parent=39 // pred_check_branch
            %240 = sbr.rel target = $region48
          $region47: #{tpu_custom_call.1} parent=39 // pred_region
            %241 = sst [smem:[#allocation15]] [#allocation18]
            %242 = sst [smem:[#allocation16]] [#allocation17]
          $region48: #{tpu_custom_call.1} parent=39 // pred_fallthru
            _
          %244 = shalt.err (0)
          %s246 = sshll.u32 %s236, 4
          %s247 = int_to_ptr.hbm [resolvable:$true] %s246
          %s248 = sshll.u32 %s237, 4
          %s249 = int_to_ptr.vmem [resolvable:$true] %s248
          %251 = dma.hbm_to_vmem [thread:$0]  %s247, 16, %s249, %s238
          %s252 = sld [smem:[#allocation6 + $0x2]]
          %p253 = scmp.gt.s32.totalorder %s252, 0
          %s254 = scalar_select %p253, %s252, 0
          %p255 = scmp.lt.s32.totalorder %s254, 511
          %s256 = scalar_select %p255, %s254, 511
          %s257 = scalar_lea.hbm %s1, %s256
          %s258 = scalar_lea.vmem [#allocation3], 2
          %s259 = scalar_lea.sflag [#allocation4], 2
          // Predicated region
          $region49: #{tpu_custom_call.1} parent=39 // pred_check
            _
          $region50: #{tpu_custom_call.1} parent=39 // pred_check_branch
            %261 = sbr.rel target = $region52
          $region51: #{tpu_custom_call.1} parent=39 // pred_region
            %262 = sst [smem:[#allocation15]] [#allocation20]
            %263 = sst [smem:[#allocation16]] [#allocation19]
          $region52: #{tpu_custom_call.1} parent=39 // pred_fallthru
            _
          %265 = shalt.err (0)
          %s267 = sshll.u32 %s257, 4
          %s268 = int_to_ptr.hbm [resolvable:$true] %s267
          %s269 = sshll.u32 %s258, 4
          %s270 = int_to_ptr.vmem [resolvable:$true] %s269
          %272 = dma.hbm_to_vmem [thread:$0]  %s268, 16, %s270, %s259
          %s273 = sld [smem:[#allocation6 + $0x3]]
          %p274 = scmp.gt.s32.totalorder %s273, 0
          %s275 = scalar_select %p274, %s273, 0
          %p276 = scmp.lt.s32.totalorder %s275, 511
          %s277 = scalar_select %p276, %s275, 511
          %s278 = scalar_lea.hbm %s1, %s277
          %s279 = scalar_lea.vmem [#allocation3], 3
          %s280 = scalar_lea.sflag [#allocation4], 3
          // Predicated region
          $region53: #{tpu_custom_call.1} parent=39 // pred_check
            _
          $region54: #{tpu_custom_call.1} parent=39 // pred_check_branch
            %282 = sbr.rel target = $region56
          $region55: #{tpu_custom_call.1} parent=39 // pred_region
            %283 = sst [smem:[#allocation15]] [#allocation22]
            %284 = sst [smem:[#allocation16]] [#allocation21]
          $region56: #{tpu_custom_call.1} parent=39 // pred_fallthru
            _
          %286 = shalt.err (0)
          %s288 = sshll.u32 %s278, 4
          %s289 = int_to_ptr.hbm [resolvable:$true] %s288
          %s290 = sshll.u32 %s279, 4
          %s291 = int_to_ptr.vmem [resolvable:$true] %s290
          %293 = dma.hbm_to_vmem [thread:$0]  %s289, 16, %s291, %s280
          %s294 = sld [smem:[#allocation6 + $0x4]]
          %p295 = scmp.gt.s32.totalorder %s294, 0
          %s296 = scalar_select %p295, %s294, 0
          %p297 = scmp.lt.s32.totalorder %s296, 511
          %s298 = scalar_select %p297, %s296, 511
          %s299 = scalar_lea.hbm %s1, %s298
          %s300 = scalar_lea.vmem [#allocation3], 4
          %s301 = scalar_lea.sflag [#allocation4], 4
          // Predicated region
          $region57: #{tpu_custom_call.1} parent=39 // pred_check
            _
          $region58: #{tpu_custom_call.1} parent=39 // pred_check_branch
            %303 = sbr.rel target = $region60
          $region59: #{tpu_custom_call.1} parent=39 // pred_region
            %304 = sst [smem:[#allocation15]] [#allocation24]
            %305 = sst [smem:[#allocation16]] [#allocation23]
          $region60: #{tpu_custom_call.1} parent=39 // pred_fallthru
            _
          %307 = shalt.err (0)
          %s309 = sshll.u32 %s299, 4
          %s310 = int_to_ptr.hbm [resolvable:$true] %s309
          %s311 = sshll.u32 %s300, 4
          %s312 = int_to_ptr.vmem [resolvable:$true] %s311
          %314 = dma.hbm_to_vmem [thread:$0]  %s310, 16, %s312, %s301
          %s315 = sld [smem:[#allocation6 + $0x5]]
          %p316 = scmp.gt.s32.totalorder %s315, 0
          %s317 = scalar_select %p316, %s315, 0
          %p318 = scmp.lt.s32.totalorder %s317, 511
          %s319 = scalar_select %p318, %s317, 511
          %s320 = scalar_lea.hbm %s1, %s319
          %s321 = scalar_lea.vmem [#allocation3], 5
          %s322 = scalar_lea.sflag [#allocation4], 5
          // Predicated region
          $region61: #{tpu_custom_call.1} parent=39 // pred_check
            _
          $region62: #{tpu_custom_call.1} parent=39 // pred_check_branch
            %324 = sbr.rel target = $region64
          $region63: #{tpu_custom_call.1} parent=39 // pred_region
            %325 = sst [smem:[#allocation15]] [#allocation26]
            %326 = sst [smem:[#allocation16]] [#allocation25]
          $region64: #{tpu_custom_call.1} parent=39 // pred_fallthru
            _
          %328 = shalt.err (0)
          %s330 = sshll.u32 %s320, 4
          %s331 = int_to_ptr.hbm [resolvable:$true] %s330
          %s332 = sshll.u32 %s321, 4
          %s333 = int_to_ptr.vmem [resolvable:$true] %s332
          %335 = dma.hbm_to_vmem [thread:$0]  %s331, 16, %s333, %s322
          %s336 = sld [smem:[#allocation6 + $0x6]]
          %p337 = scmp.gt.s32.totalorder %s336, 0
          %s338 = scalar_select %p337, %s336, 0
          %p339 = scmp.lt.s32.totalorder %s338, 511
          %s340 = scalar_select %p339, %s338, 511
          %s341 = scalar_lea.hbm %s1, %s340
          %s342 = scalar_lea.vmem [#allocation3], 6
          %s343 = scalar_lea.sflag [#allocation4], 6
          // Predicated region
          $region65: #{tpu_custom_call.1} parent=39 // pred_check
            _
          $region66: #{tpu_custom_call.1} parent=39 // pred_check_branch
            %345 = sbr.rel target = $region68
          $region67: #{tpu_custom_call.1} parent=39 // pred_region
            %346 = sst [smem:[#allocation15]] [#allocation28]
            %347 = sst [smem:[#allocation16]] [#allocation27]
          $region68: #{tpu_custom_call.1} parent=39 // pred_fallthru
            _
          %349 = shalt.err (0)
          %s351 = sshll.u32 %s341, 4
          %s352 = int_to_ptr.hbm [resolvable:$true] %s351
          %s353 = sshll.u32 %s342, 4
          %s354 = int_to_ptr.vmem [resolvable:$true] %s353
          %356 = dma.hbm_to_vmem [thread:$0]  %s352, 16, %s354, %s343
          %s357 = sld [smem:[#allocation6 + $0x7]]
          %p358 = scmp.gt.s32.totalorder %s357, 0
          %s359 = scalar_select %p358, %s357, 0
          %p360 = scmp.lt.s32.totalorder %s359, 511
          %s361 = scalar_select %p360, %s359, 511
          %s362 = scalar_lea.hbm %s1, %s361
          %s363 = scalar_lea.vmem [#allocation3], 7
          %s364 = scalar_lea.sflag [#allocation4], 7
          // Predicated region
          $region69: #{tpu_custom_call.1} parent=39 // pred_check
            _
          $region70: #{tpu_custom_call.1} parent=39 // pred_check_branch
            %366 = sbr.rel target = $region72
          $region71: #{tpu_custom_call.1} parent=39 // pred_region
            %367 = sst [smem:[#allocation15]] [#allocation30]
            %368 = sst [smem:[#allocation16]] [#allocation29]
          $region72: #{tpu_custom_call.1} parent=39 // pred_fallthru
            _
          %370 = shalt.err (0)
          %s372 = sshll.u32 %s362, 4
          %s373 = int_to_ptr.hbm [resolvable:$true] %s372
          %s374 = sshll.u32 %s363, 4
          %s375 = int_to_ptr.vmem [resolvable:$true] %s374
          %377 = dma.hbm_to_vmem [thread:$0]  %s373, 16, %s375, %s364
          %s378 = sld [smem:[#allocation6 + $0x8]]
          %p379 = scmp.gt.s32.totalorder %s378, 0
          %s380 = scalar_select %p379, %s378, 0
          %p381 = scmp.lt.s32.totalorder %s380, 511
          %s382 = scalar_select %p381, %s380, 511
          %s383 = scalar_lea.hbm %s1, %s382
          %s384 = scalar_lea.vmem [#allocation3], 8
          %s385 = scalar_lea.sflag [#allocation4], 8
          // Predicated region
          $region73: #{tpu_custom_call.1} parent=39 // pred_check
            _
          $region74: #{tpu_custom_call.1} parent=39 // pred_check_branch
            %387 = sbr.rel target = $region76
          $region75: #{tpu_custom_call.1} parent=39 // pred_region
            %388 = sst [smem:[#allocation15]] [#allocation32]
            %389 = sst [smem:[#allocation16]] [#allocation31]
          $region76: #{tpu_custom_call.1} parent=39 // pred_fallthru
            _
          %391 = shalt.err (0)
          %s393 = sshll.u32 %s383, 4
          %s394 = int_to_ptr.hbm [resolvable:$true] %s393
          %s395 = sshll.u32 %s384, 4
          %s396 = int_to_ptr.vmem [resolvable:$true] %s395
          %398 = dma.hbm_to_vmem [thread:$0]  %s394, 16, %s396, %s385
          %s399 = sld [smem:[#allocation6 + $0x9]]
          %p400 = scmp.gt.s32.totalorder %s399, 0
          %s401 = scalar_select %p400, %s399, 0
          %p402 = scmp.lt.s32.totalorder %s401, 511
          %s403 = scalar_select %p402, %s401, 511
          %s404 = scalar_lea.hbm %s1, %s403
          %s405 = scalar_lea.vmem [#allocation3], 9
          %s406 = scalar_lea.sflag [#allocation4], 9
          // Predicated region
          $region77: #{tpu_custom_call.1} parent=39 // pred_check
            _
          $region78: #{tpu_custom_call.1} parent=39 // pred_check_branch
            %408 = sbr.rel target = $region80
          $region79: #{tpu_custom_call.1} parent=39 // pred_region
            %409 = sst [smem:[#allocation15]] [#allocation34]
            %410 = sst [smem:[#allocation16]] [#allocation33]
          $region80: #{tpu_custom_call.1} parent=39 // pred_fallthru
            _
          %412 = shalt.err (0)
          %s414 = sshll.u32 %s404, 4
          %s415 = int_to_ptr.hbm [resolvable:$true] %s414
          %s416 = sshll.u32 %s405, 4
          %s417 = int_to_ptr.vmem [resolvable:$true] %s416
          %419 = dma.hbm_to_vmem [thread:$0]  %s415, 16, %s417, %s406
          %s420 = sld [smem:[#allocation6 + $0xa]]
          %p421 = scmp.gt.s32.totalorder %s420, 0
          %s422 = scalar_select %p421, %s420, 0
          %p423 = scmp.lt.s32.totalorder %s422, 511
          %s424 = scalar_select %p423, %s422, 511
          %s425 = scalar_lea.hbm %s1, %s424
          %s426 = scalar_lea.vmem [#allocation3], 10
          %s427 = scalar_lea.sflag [#allocation4], 10
          // Predicated region
          $region81: #{tpu_custom_call.1} parent=39 // pred_check
            _
          $region82: #{tpu_custom_call.1} parent=39 // pred_check_branch
            %429 = sbr.rel target = $region84
          $region83: #{tpu_custom_call.1} parent=39 // pred_region
            %430 = sst [smem:[#allocation15]] [#allocation36]
            %431 = sst [smem:[#allocation16]] [#allocation35]
          $region84: #{tpu_custom_call.1} parent=39 // pred_fallthru
            _
          %433 = shalt.err (0)
          %s435 = sshll.u32 %s425, 4
          %s436 = int_to_ptr.hbm [resolvable:$true] %s435
          %s437 = sshll.u32 %s426, 4
          %s438 = int_to_ptr.vmem [resolvable:$true] %s437
          %440 = dma.hbm_to_vmem [thread:$0]  %s436, 16, %s438, %s427
          %s441 = sld [smem:[#allocation6 + $0xb]]
          %p442 = scmp.gt.s32.totalorder %s441, 0
          %s443 = scalar_select %p442, %s441, 0
          %p444 = scmp.lt.s32.totalorder %s443, 511
          %s445 = scalar_select %p444, %s443, 511
          %s446 = scalar_lea.hbm %s1, %s445
          %s447 = scalar_lea.vmem [#allocation3], 11
          %s448 = scalar_lea.sflag [#allocation4], 11
          // Predicated region
          $region85: #{tpu_custom_call.1} parent=39 // pred_check
            _
          $region86: #{tpu_custom_call.1} parent=39 // pred_check_branch
            %450 = sbr.rel target = $region88
          $region87: #{tpu_custom_call.1} parent=39 // pred_region
            %451 = sst [smem:[#allocation15]] [#allocation38]
            %452 = sst [smem:[#allocation16]] [#allocation37]
          $region88: #{tpu_custom_call.1} parent=39 // pred_fallthru
            _
          %454 = shalt.err (0)
          %s456 = sshll.u32 %s446, 4
          %s457 = int_to_ptr.hbm [resolvable:$true] %s456
          %s458 = sshll.u32 %s447, 4
          %s459 = int_to_ptr.vmem [resolvable:$true] %s458
          %461 = dma.hbm_to_vmem [thread:$0]  %s457, 16, %s459, %s448
          %s462 = sld [smem:[#allocation6 + $0xc]]
          %p463 = scmp.gt.s32.totalorder %s462, 0
          %s464 = scalar_select %p463, %s462, 0
          %p465 = scmp.lt.s32.totalorder %s464, 511
          %s466 = scalar_select %p465, %s464, 511
          %s467 = scalar_lea.hbm %s1, %s466
          %s468 = scalar_lea.vmem [#allocation3], 12
          %s469 = scalar_lea.sflag [#allocation4], 12
          // Predicated region
          $region89: #{tpu_custom_call.1} parent=39 // pred_check
            _
          $region90: #{tpu_custom_call.1} parent=39 // pred_check_branch
            %471 = sbr.rel target = $region92
          $region91: #{tpu_custom_call.1} parent=39 // pred_region
            %472 = sst [smem:[#allocation15]] [#allocation40]
            %473 = sst [smem:[#allocation16]] [#allocation39]
          $region92: #{tpu_custom_call.1} parent=39 // pred_fallthru
            _
          %475 = shalt.err (0)
          %s477 = sshll.u32 %s467, 4
          %s478 = int_to_ptr.hbm [resolvable:$true] %s477
          %s479 = sshll.u32 %s468, 4
          %s480 = int_to_ptr.vmem [resolvable:$true] %s479
          %482 = dma.hbm_to_vmem [thread:$0]  %s478, 16, %s480, %s469
          %s483 = sld [smem:[#allocation6 + $0xd]]
          %p484 = scmp.gt.s32.totalorder %s483, 0
          %s485 = scalar_select %p484, %s483, 0
          %p486 = scmp.lt.s32.totalorder %s485, 511
          %s487 = scalar_select %p486, %s485, 511
          %s488 = scalar_lea.hbm %s1, %s487
          %s489 = scalar_lea.vmem [#allocation3], 13
          %s490 = scalar_lea.sflag [#allocation4], 13
          // Predicated region
          $region93: #{tpu_custom_call.1} parent=39 // pred_check
            _
          $region94: #{tpu_custom_call.1} parent=39 // pred_check_branch
            %492 = sbr.rel target = $region96
          $region95: #{tpu_custom_call.1} parent=39 // pred_region
            %493 = sst [smem:[#allocation15]] [#allocation42]
            %494 = sst [smem:[#allocation16]] [#allocation41]
          $region96: #{tpu_custom_call.1} parent=39 // pred_fallthru
            _
          %496 = shalt.err (0)
          %s498 = sshll.u32 %s488, 4
          %s499 = int_to_ptr.hbm [resolvable:$true] %s498
          %s500 = sshll.u32 %s489, 4
          %s501 = int_to_ptr.vmem [resolvable:$true] %s500
          %503 = dma.hbm_to_vmem [thread:$0]  %s499, 16, %s501, %s490
          %s504 = sld [smem:[#allocation6 + $0xe]]
          %p505 = scmp.gt.s32.totalorder %s504, 0
          %s506 = scalar_select %p505, %s504, 0
          %p507 = scmp.lt.s32.totalorder %s506, 511
          %s508 = scalar_select %p507, %s506, 511
          %s509 = scalar_lea.hbm %s1, %s508
          %s510 = scalar_lea.vmem [#allocation3], 14
          %s511 = scalar_lea.sflag [#allocation4], 14
          // Predicated region
          $region97: #{tpu_custom_call.1} parent=39 // pred_check
            _
          $region98: #{tpu_custom_call.1} parent=39 // pred_check_branch
            %513 = sbr.rel target = $region100
          $region99: #{tpu_custom_call.1} parent=39 // pred_region
            %514 = sst [smem:[#allocation15]] [#allocation44]
            %515 = sst [smem:[#allocation16]] [#allocation43]
          $region100: #{tpu_custom_call.1} parent=39 // pred_fallthru
            _
          %517 = shalt.err (0)
          %s519 = sshll.u32 %s509, 4
          %s520 = int_to_ptr.hbm [resolvable:$true] %s519
          %s521 = sshll.u32 %s510, 4
          %s522 = int_to_ptr.vmem [resolvable:$true] %s521
          %524 = dma.hbm_to_vmem [thread:$0]  %s520, 16, %s522, %s511
          %s525 = sld [smem:[#allocation6 + $0xf]]
          %p526 = scmp.gt.s32.totalorder %s525, 0
          %s527 = scalar_select %p526, %s525, 0
          %p528 = scmp.lt.s32.totalorder %s527, 511
          %s529 = scalar_select %p528, %s527, 511
          %s530 = scalar_lea.hbm %s1, %s529
          %s531 = scalar_lea.vmem [#allocation3], 15
          %s532 = scalar_lea.sflag [#allocation4], 15
          // Predicated region
          $region101: #{tpu_custom_call.1} parent=39 // pred_check
            _
          $region102: #{tpu_custom_call.1} parent=39 // pred_check_branch
            %534 = sbr.rel target = $region104
          $region103: #{tpu_custom_call.1} parent=39 // pred_region
            %535 = sst [smem:[#allocation15]] [#allocation46]
            %536 = sst [smem:[#allocation16]] [#allocation45]
          $region104: #{tpu_custom_call.1} parent=39 // pred_fallthru
            _
          %538 = shalt.err (0)
          %s540 = sshll.u32 %s530, 4
          %s541 = int_to_ptr.hbm [resolvable:$true] %s540
          %s542 = sshll.u32 %s531, 4
          %s543 = int_to_ptr.vmem [resolvable:$true] %s542
          %545 = dma.hbm_to_vmem [thread:$0]  %s541, 16, %s543, %s532
          %s546 = sld [smem:[#allocation6 + $0x10]]
          %p547 = scmp.gt.s32.totalorder %s546, 0
          %s548 = scalar_select %p547, %s546, 0
          %p549 = scmp.lt.s32.totalorder %s548, 511
          %s550 = scalar_select %p549, %s548, 511
          %s551 = scalar_lea.hbm %s1, %s550
          %s552 = scalar_lea.vmem [#allocation3], 16
          %s553 = scalar_lea.sflag [#allocation4], 16
          // Predicated region
          $region105: #{tpu_custom_call.1} parent=39 // pred_check
            _
          $region106: #{tpu_custom_call.1} parent=39 // pred_check_branch
            %555 = sbr.rel target = $region108
          $region107: #{tpu_custom_call.1} parent=39 // pred_region
            %556 = sst [smem:[#allocation15]] [#allocation48]
            %557 = sst [smem:[#allocation16]] [#allocation47]
          $region108: #{tpu_custom_call.1} parent=39 // pred_fallthru
            _
          %559 = shalt.err (0)
          %s561 = sshll.u32 %s551, 4
          %s562 = int_to_ptr.hbm [resolvable:$true] %s561
          %s563 = sshll.u32 %s552, 4
          %s564 = int_to_ptr.vmem [resolvable:$true] %s563
          %566 = dma.hbm_to_vmem [thread:$0]  %s562, 16, %s564, %s553
          %s567 = sld [smem:[#allocation6 + $0x11]]
          %p568 = scmp.gt.s32.totalorder %s567, 0
          %s569 = scalar_select %p568, %s567, 0
          %p570 = scmp.lt.s32.totalorder %s569, 511
          %s571 = scalar_select %p570, %s569, 511
          %s572 = scalar_lea.hbm %s1, %s571
          %s573 = scalar_lea.vmem [#allocation3], 17
          %s574 = scalar_lea.sflag [#allocation4], 17
          // Predicated region
          $region109: #{tpu_custom_call.1} parent=39 // pred_check
            _
          $region110: #{tpu_custom_call.1} parent=39 // pred_check_branch
            %576 = sbr.rel target = $region112
          $region111: #{tpu_custom_call.1} parent=39 // pred_region
            %577 = sst [smem:[#allocation15]] [#allocation50]
            %578 = sst [smem:[#allocation16]] [#allocation49]
          $region112: #{tpu_custom_call.1} parent=39 // pred_fallthru
            _
          %580 = shalt.err (0)
          %s582 = sshll.u32 %s572, 4
          %s583 = int_to_ptr.hbm [resolvable:$true] %s582
          %s584 = sshll.u32 %s573, 4
          %s585 = int_to_ptr.vmem [resolvable:$true] %s584
          %587 = dma.hbm_to_vmem [thread:$0]  %s583, 16, %s585, %s574
          %s588 = sld [smem:[#allocation6 + $0x12]]
          %p589 = scmp.gt.s32.totalorder %s588, 0
          %s590 = scalar_select %p589, %s588, 0
          %p591 = scmp.lt.s32.totalorder %s590, 511
          %s592 = scalar_select %p591, %s590, 511
          %s593 = scalar_lea.hbm %s1, %s592
          %s594 = scalar_lea.vmem [#allocation3], 18
          %s595 = scalar_lea.sflag [#allocation4], 18
          // Predicated region
          $region113: #{tpu_custom_call.1} parent=39 // pred_check
            _
          $region114: #{tpu_custom_call.1} parent=39 // pred_check_branch
            %597 = sbr.rel target = $region116
          $region115: #{tpu_custom_call.1} parent=39 // pred_region
            %598 = sst [smem:[#allocation15]] [#allocation52]
            %599 = sst [smem:[#allocation16]] [#allocation51]
          $region116: #{tpu_custom_call.1} parent=39 // pred_fallthru
            _
          %601 = shalt.err (0)
          %s603 = sshll.u32 %s593, 4
          %s604 = int_to_ptr.hbm [resolvable:$true] %s603
          %s605 = sshll.u32 %s594, 4
          %s606 = int_to_ptr.vmem [resolvable:$true] %s605
          %608 = dma.hbm_to_vmem [thread:$0]  %s604, 16, %s606, %s595
          %s609 = sld [smem:[#allocation6 + $0x13]]
          %p610 = scmp.gt.s32.totalorder %s609, 0
          %s611 = scalar_select %p610, %s609, 0
          %p612 = scmp.lt.s32.totalorder %s611, 511
          %s613 = scalar_select %p612, %s611, 511
          %s614 = scalar_lea.hbm %s1, %s613
          %s615 = scalar_lea.vmem [#allocation3], 19
          %s616 = scalar_lea.sflag [#allocation4], 19
          // Predicated region
          $region117: #{tpu_custom_call.1} parent=39 // pred_check
            _
          $region118: #{tpu_custom_call.1} parent=39 // pred_check_branch
            %618 = sbr.rel target = $region120
          $region119: #{tpu_custom_call.1} parent=39 // pred_region
            %619 = sst [smem:[#allocation15]] [#allocation54]
            %620 = sst [smem:[#allocation16]] [#allocation53]
          $region120: #{tpu_custom_call.1} parent=39 // pred_fallthru
            _
          %622 = shalt.err (0)
          %s624 = sshll.u32 %s614, 4
          %s625 = int_to_ptr.hbm [resolvable:$true] %s624
          %s626 = sshll.u32 %s615, 4
          %s627 = int_to_ptr.vmem [resolvable:$true] %s626
          %629 = dma.hbm_to_vmem [thread:$0]  %s625, 16, %s627, %s616
          %s630 = sld [smem:[#allocation6 + $0x14]]
          %p631 = scmp.gt.s32.totalorder %s630, 0
          %s632 = scalar_select %p631, %s630, 0
          %p633 = scmp.lt.s32.totalorder %s632, 511
          %s634 = scalar_select %p633, %s632, 511
          %s635 = scalar_lea.hbm %s1, %s634
          %s636 = scalar_lea.vmem [#allocation3], 20
          %s637 = scalar_lea.sflag [#allocation4], 20
          // Predicated region
          $region121: #{tpu_custom_call.1} parent=39 // pred_check
            _
          $region122: #{tpu_custom_call.1} parent=39 // pred_check_branch
            %639 = sbr.rel target = $region124
          $region123: #{tpu_custom_call.1} parent=39 // pred_region
            %640 = sst [smem:[#allocation15]] [#allocation56]
            %641 = sst [smem:[#allocation16]] [#allocation55]
          $region124: #{tpu_custom_call.1} parent=39 // pred_fallthru
            _
          %643 = shalt.err (0)
          %s645 = sshll.u32 %s635, 4
          %s646 = int_to_ptr.hbm [resolvable:$true] %s645
          %s647 = sshll.u32 %s636, 4
          %s648 = int_to_ptr.vmem [resolvable:$true] %s647
          %650 = dma.hbm_to_vmem [thread:$0]  %s646, 16, %s648, %s637
          %s651 = sld [smem:[#allocation6 + $0x15]]
          %p652 = scmp.gt.s32.totalorder %s651, 0
          %s653 = scalar_select %p652, %s651, 0
          %p654 = scmp.lt.s32.totalorder %s653, 511
          %s655 = scalar_select %p654, %s653, 511
          %s656 = scalar_lea.hbm %s1, %s655
          %s657 = scalar_lea.vmem [#allocation3], 21
          %s658 = scalar_lea.sflag [#allocation4], 21
          // Predicated region
          $region125: #{tpu_custom_call.1} parent=39 // pred_check
            _
          $region126: #{tpu_custom_call.1} parent=39 // pred_check_branch
            %660 = sbr.rel target = $region128
          $region127: #{tpu_custom_call.1} parent=39 // pred_region
            %661 = sst [smem:[#allocation15]] [#allocation58]
            %662 = sst [smem:[#allocation16]] [#allocation57]
          $region128: #{tpu_custom_call.1} parent=39 // pred_fallthru
            _
          %664 = shalt.err (0)
          %s666 = sshll.u32 %s656, 4
          %s667 = int_to_ptr.hbm [resolvable:$true] %s666
          %s668 = sshll.u32 %s657, 4
          %s669 = int_to_ptr.vmem [resolvable:$true] %s668
          %671 = dma.hbm_to_vmem [thread:$0]  %s667, 16, %s669, %s658
          %s672 = sld [smem:[#allocation6 + $0x16]]
          %p673 = scmp.gt.s32.totalorder %s672, 0
          %s674 = scalar_select %p673, %s672, 0
          %p675 = scmp.lt.s32.totalorder %s674, 511
          %s676 = scalar_select %p675, %s674, 511
          %s677 = scalar_lea.hbm %s1, %s676
          %s678 = scalar_lea.vmem [#allocation3], 22
          %s679 = scalar_lea.sflag [#allocation4], 22
          // Predicated region
          $region129: #{tpu_custom_call.1} parent=39 // pred_check
            _
          $region130: #{tpu_custom_call.1} parent=39 // pred_check_branch
            %681 = sbr.rel target = $region132
          $region131: #{tpu_custom_call.1} parent=39 // pred_region
            %682 = sst [smem:[#allocation15]] [#allocation60]
            %683 = sst [smem:[#allocation16]] [#allocation59]
          $region132: #{tpu_custom_call.1} parent=39 // pred_fallthru
            _
          %685 = shalt.err (0)
          %s687 = sshll.u32 %s677, 4
          %s688 = int_to_ptr.hbm [resolvable:$true] %s687
          %s689 = sshll.u32 %s678, 4
          %s690 = int_to_ptr.vmem [resolvable:$true] %s689
          %692 = dma.hbm_to_vmem [thread:$0]  %s688, 16, %s690, %s679
          %s693 = sld [smem:[#allocation6 + $0x17]]
          %p694 = scmp.gt.s32.totalorder %s693, 0
          %s695 = scalar_select %p694, %s693, 0
          %p696 = scmp.lt.s32.totalorder %s695, 511
          %s697 = scalar_select %p696, %s695, 511
          %s698 = scalar_lea.hbm %s1, %s697
          %s699 = scalar_lea.vmem [#allocation3], 23
          %s700 = scalar_lea.sflag [#allocation4], 23
          // Predicated region
          $region133: #{tpu_custom_call.1} parent=39 // pred_check
            _
          $region134: #{tpu_custom_call.1} parent=39 // pred_check_branch
            %702 = sbr.rel target = $region136
          $region135: #{tpu_custom_call.1} parent=39 // pred_region
            %703 = sst [smem:[#allocation15]] [#allocation62]
            %704 = sst [smem:[#allocation16]] [#allocation61]
          $region136: #{tpu_custom_call.1} parent=39 // pred_fallthru
            _
          %706 = shalt.err (0)
          %s708 = sshll.u32 %s698, 4
          %s709 = int_to_ptr.hbm [resolvable:$true] %s708
          %s710 = sshll.u32 %s699, 4
          %s711 = int_to_ptr.vmem [resolvable:$true] %s710
          %713 = dma.hbm_to_vmem [thread:$0]  %s709, 16, %s711, %s700
          %s714 = sld [smem:[#allocation6 + $0x18]]
          %p715 = scmp.gt.s32.totalorder %s714, 0
          %s716 = scalar_select %p715, %s714, 0
          %p717 = scmp.lt.s32.totalorder %s716, 511
          %s718 = scalar_select %p717, %s716, 511
          %s719 = scalar_lea.hbm %s1, %s718
          %s720 = scalar_lea.vmem [#allocation3], 24
          %s721 = scalar_lea.sflag [#allocation4], 24
          // Predicated region
          $region137: #{tpu_custom_call.1} parent=39 // pred_check
            _
          $region138: #{tpu_custom_call.1} parent=39 // pred_check_branch
            %723 = sbr.rel target = $region140
          $region139: #{tpu_custom_call.1} parent=39 // pred_region
            %724 = sst [smem:[#allocation15]] [#allocation64]
            %725 = sst [smem:[#allocation16]] [#allocation63]
          $region140: #{tpu_custom_call.1} parent=39 // pred_fallthru
            _
          %727 = shalt.err (0)
          %s729 = sshll.u32 %s719, 4
          %s730 = int_to_ptr.hbm [resolvable:$true] %s729
          %s731 = sshll.u32 %s720, 4
          %s732 = int_to_ptr.vmem [resolvable:$true] %s731
          %734 = dma.hbm_to_vmem [thread:$0]  %s730, 16, %s732, %s721
          %s735 = sld [smem:[#allocation6 + $0x19]]
          %p736 = scmp.gt.s32.totalorder %s735, 0
          %s737 = scalar_select %p736, %s735, 0
          %p738 = scmp.lt.s32.totalorder %s737, 511
          %s739 = scalar_select %p738, %s737, 511
          %s740 = scalar_lea.hbm %s1, %s739
          %s741 = scalar_lea.vmem [#allocation3], 25
          %s742 = scalar_lea.sflag [#allocation4], 25
          // Predicated region
          $region141: #{tpu_custom_call.1} parent=39 // pred_check
            _
          $region142: #{tpu_custom_call.1} parent=39 // pred_check_branch
            %744 = sbr.rel target = $region144
          $region143: #{tpu_custom_call.1} parent=39 // pred_region
            %745 = sst [smem:[#allocation15]] [#allocation66]
            %746 = sst [smem:[#allocation16]] [#allocation65]
          $region144: #{tpu_custom_call.1} parent=39 // pred_fallthru
            _
          %748 = shalt.err (0)
          %s750 = sshll.u32 %s740, 4
          %s751 = int_to_ptr.hbm [resolvable:$true] %s750
          %s752 = sshll.u32 %s741, 4
          %s753 = int_to_ptr.vmem [resolvable:$true] %s752
          %755 = dma.hbm_to_vmem [thread:$0]  %s751, 16, %s753, %s742
          %s756 = sld [smem:[#allocation6 + $0x1a]]
          %p757 = scmp.gt.s32.totalorder %s756, 0
          %s758 = scalar_select %p757, %s756, 0
          %p759 = scmp.lt.s32.totalorder %s758, 511
          %s760 = scalar_select %p759, %s758, 511
          %s761 = scalar_lea.hbm %s1, %s760
          %s762 = scalar_lea.vmem [#allocation3], 26
          %s763 = scalar_lea.sflag [#allocation4], 26
          // Predicated region
          $region145: #{tpu_custom_call.1} parent=39 // pred_check
            _
          $region146: #{tpu_custom_call.1} parent=39 // pred_check_branch
            %765 = sbr.rel target = $region148
          $region147: #{tpu_custom_call.1} parent=39 // pred_region
            %766 = sst [smem:[#allocation15]] [#allocation68]
            %767 = sst [smem:[#allocation16]] [#allocation67]
          $region148: #{tpu_custom_call.1} parent=39 // pred_fallthru
            _
          %769 = shalt.err (0)
          %s771 = sshll.u32 %s761, 4
          %s772 = int_to_ptr.hbm [resolvable:$true] %s771
          %s773 = sshll.u32 %s762, 4
          %s774 = int_to_ptr.vmem [resolvable:$true] %s773
          %776 = dma.hbm_to_vmem [thread:$0]  %s772, 16, %s774, %s763
          %s777 = sld [smem:[#allocation6 + $0x1b]]
          %p778 = scmp.gt.s32.totalorder %s777, 0
          %s779 = scalar_select %p778, %s777, 0
          %p780 = scmp.lt.s32.totalorder %s779, 511
          %s781 = scalar_select %p780, %s779, 511
          %s782 = scalar_lea.hbm %s1, %s781
          %s783 = scalar_lea.vmem [#allocation3], 27
          %s784 = scalar_lea.sflag [#allocation4], 27
          // Predicated region
          $region149: #{tpu_custom_call.1} parent=39 // pred_check
            _
          $region150: #{tpu_custom_call.1} parent=39 // pred_check_branch
            %786 = sbr.rel target = $region152
          $region151: #{tpu_custom_call.1} parent=39 // pred_region
            %787 = sst [smem:[#allocation15]] [#allocation70]
            %788 = sst [smem:[#allocation16]] [#allocation69]
          $region152: #{tpu_custom_call.1} parent=39 // pred_fallthru
            _
          %790 = shalt.err (0)
          %s792 = sshll.u32 %s782, 4
          %s793 = int_to_ptr.hbm [resolvable:$true] %s792
          %s794 = sshll.u32 %s783, 4
          %s795 = int_to_ptr.vmem [resolvable:$true] %s794
          %797 = dma.hbm_to_vmem [thread:$0]  %s793, 16, %s795, %s784
          %s798 = sld [smem:[#allocation6 + $0x1c]]
          %p799 = scmp.gt.s32.totalorder %s798, 0
          %s800 = scalar_select %p799, %s798, 0
          %p801 = scmp.lt.s32.totalorder %s800, 511
          %s802 = scalar_select %p801, %s800, 511
          %s803 = scalar_lea.hbm %s1, %s802
          %s804 = scalar_lea.vmem [#allocation3], 28
          %s805 = scalar_lea.sflag [#allocation4], 28
          // Predicated region
          $region153: #{tpu_custom_call.1} parent=39 // pred_check
            _
          $region154: #{tpu_custom_call.1} parent=39 // pred_check_branch
            %807 = sbr.rel target = $region156
          $region155: #{tpu_custom_call.1} parent=39 // pred_region
            %808 = sst [smem:[#allocation15]] [#allocation72]
            %809 = sst [smem:[#allocation16]] [#allocation71]
          $region156: #{tpu_custom_call.1} parent=39 // pred_fallthru
            _
          %811 = shalt.err (0)
          %s813 = sshll.u32 %s803, 4
          %s814 = int_to_ptr.hbm [resolvable:$true] %s813
          %s815 = sshll.u32 %s804, 4
          %s816 = int_to_ptr.vmem [resolvable:$true] %s815
          %818 = dma.hbm_to_vmem [thread:$0]  %s814, 16, %s816, %s805
          %s819 = sld [smem:[#allocation6 + $0x1d]]
          %p820 = scmp.gt.s32.totalorder %s819, 0
          %s821 = scalar_select %p820, %s819, 0
          %p822 = scmp.lt.s32.totalorder %s821, 511
          %s823 = scalar_select %p822, %s821, 511
          %s824 = scalar_lea.hbm %s1, %s823
          %s825 = scalar_lea.vmem [#allocation3], 29
          %s826 = scalar_lea.sflag [#allocation4], 29
          // Predicated region
          $region157: #{tpu_custom_call.1} parent=39 // pred_check
            _
          $region158: #{tpu_custom_call.1} parent=39 // pred_check_branch
            %828 = sbr.rel target = $region160
          $region159: #{tpu_custom_call.1} parent=39 // pred_region
            %829 = sst [smem:[#allocation15]] [#allocation74]
            %830 = sst [smem:[#allocation16]] [#allocation73]
          $region160: #{tpu_custom_call.1} parent=39 // pred_fallthru
            _
          %832 = shalt.err (0)
          %s834 = sshll.u32 %s824, 4
          %s835 = int_to_ptr.hbm [resolvable:$true] %s834
          %s836 = sshll.u32 %s825, 4
          %s837 = int_to_ptr.vmem [resolvable:$true] %s836
          %839 = dma.hbm_to_vmem [thread:$0]  %s835, 16, %s837, %s826
          %s840 = sld [smem:[#allocation6 + $0x1e]]
          %p841 = scmp.gt.s32.totalorder %s840, 0
          %s842 = scalar_select %p841, %s840, 0
          %p843 = scmp.lt.s32.totalorder %s842, 511
          %s844 = scalar_select %p843, %s842, 511
          %s845 = scalar_lea.hbm %s1, %s844
          %s846 = scalar_lea.vmem [#allocation3], 30
          %s847 = scalar_lea.sflag [#allocation4], 30
          // Predicated region
          $region161: #{tpu_custom_call.1} parent=39 // pred_check
            _
          $region162: #{tpu_custom_call.1} parent=39 // pred_check_branch
            %849 = sbr.rel target = $region164
          $region163: #{tpu_custom_call.1} parent=39 // pred_region
            %850 = sst [smem:[#allocation15]] [#allocation76]
            %851 = sst [smem:[#allocation16]] [#allocation75]
          $region164: #{tpu_custom_call.1} parent=39 // pred_fallthru
            _
          %853 = shalt.err (0)
          %s855 = sshll.u32 %s845, 4
          %s856 = int_to_ptr.hbm [resolvable:$true] %s855
          %s857 = sshll.u32 %s846, 4
          %s858 = int_to_ptr.vmem [resolvable:$true] %s857
          %860 = dma.hbm_to_vmem [thread:$0]  %s856, 16, %s858, %s847
          %s861 = sld [smem:[#allocation6 + $0x1f]]
          %p862 = scmp.gt.s32.totalorder %s861, 0
          %s863 = scalar_select %p862, %s861, 0
          %p864 = scmp.lt.s32.totalorder %s863, 511
          %s865 = scalar_select %p864, %s863, 511
          %s866 = scalar_lea.hbm %s1, %s865
          %s867 = scalar_lea.vmem [#allocation3], 31
          %s868 = scalar_lea.sflag [#allocation4], 31
          // Predicated region
          $region165: #{tpu_custom_call.1} parent=39 // pred_check
            _
          $region166: #{tpu_custom_call.1} parent=39 // pred_check_branch
            %870 = sbr.rel target = $region168
          $region167: #{tpu_custom_call.1} parent=39 // pred_region
            %871 = sst [smem:[#allocation15]] [#allocation78]
            %872 = sst [smem:[#allocation16]] [#allocation77]
          $region168: #{tpu_custom_call.1} parent=39 // pred_fallthru
            _
          %874 = shalt.err (0)
          %s876 = sshll.u32 %s866, 4
          %s877 = int_to_ptr.hbm [resolvable:$true] %s876
          %s878 = sshll.u32 %s867, 4
          %s879 = int_to_ptr.vmem [resolvable:$true] %s878
          %881 = dma.hbm_to_vmem [thread:$0]  %s877, 16, %s879, %s868
          %s882 = smul.u32 1, 1
          %s883 = sshll.u32 %s882, 4
          %884 = dma.done [#allocation4], %s883
          %s885 = sshll.u32 %s882, 4
          %886 = dma.done %s238, %s885
          %s887 = sshll.u32 %s882, 4
          %888 = dma.done %s259, %s887
          %s889 = sshll.u32 %s882, 4
          %890 = dma.done %s280, %s889
          %s891 = sshll.u32 %s882, 4
          %892 = dma.done %s301, %s891
          %s893 = sshll.u32 %s882, 4
          %894 = dma.done %s322, %s893
          %s895 = sshll.u32 %s882, 4
          %896 = dma.done %s343, %s895
          %s897 = sshll.u32 %s882, 4
          %898 = dma.done %s364, %s897
          %s899 = sshll.u32 %s882, 4
          %900 = dma.done %s385, %s899
          %s901 = sshll.u32 %s882, 4
          %902 = dma.done %s406, %s901
          %s903 = sshll.u32 %s882, 4
          %904 = dma.done %s427, %s903
          %s905 = sshll.u32 %s882, 4
          %906 = dma.done %s448, %s905
          %s907 = sshll.u32 %s882, 4
          %908 = dma.done %s469, %s907
          %s909 = sshll.u32 %s882, 4
          %910 = dma.done %s490, %s909
          %s911 = sshll.u32 %s882, 4
          %912 = dma.done %s511, %s911
          %s913 = sshll.u32 %s882, 4
          %914 = dma.done %s532, %s913
          %s915 = sshll.u32 %s882, 4
          %916 = dma.done %s553, %s915
          %s917 = sshll.u32 %s882, 4
          %918 = dma.done %s574, %s917
          %s919 = sshll.u32 %s882, 4
          %920 = dma.done %s595, %s919
          %s921 = sshll.u32 %s882, 4
          %922 = dma.done %s616, %s921
          %s923 = sshll.u32 %s882, 4
          %924 = dma.done %s637, %s923
          %s925 = sshll.u32 %s882, 4
          %926 = dma.done %s658, %s925
          %s927 = sshll.u32 %s882, 4
          %928 = dma.done %s679, %s927
          %s929 = sshll.u32 %s882, 4
          %930 = dma.done %s700, %s929
          %s931 = sshll.u32 %s882, 4
          %932 = dma.done %s721, %s931
          %s933 = sshll.u32 %s882, 4
          %934 = dma.done %s742, %s933
          %s935 = sshll.u32 %s882, 4
          %936 = dma.done %s763, %s935
          %s937 = sshll.u32 %s882, 4
          %938 = dma.done %s784, %s937
          %s939 = sshll.u32 %s882, 4
          %940 = dma.done %s805, %s939
          %s941 = sshll.u32 %s882, 4
          %942 = dma.done %s826, %s941
          %s943 = sshll.u32 %s882, 4
          %944 = dma.done %s847, %s943
          %s945 = sshll.u32 %s882, 4
          %946 = dma.done %s868, %s945
          %v947 = vld [vmem:[#allocation3] sm:$0xff]
          %v948 = vld [vmem:[#allocation3 + $0x8] sm:$0xff]
          %v949 = vld [vmem:[#allocation3 + $0x10] sm:$0xff]
          %v950 = vld [vmem:[#allocation3 + $0x18] sm:$0xff]
          %v955 = vrot.slane %v947, 4
          %v956 = vrot.slane %v948, 4
          %v957 = vrot.slane %v949, 4
          %v958 = vrot.slane %v950, 4
          %vm963 = vcmask 1043456
          %v964 = vsel %vm963, %v947, 0.0
          %v965 = vrot.slane %v964, 4
          %v966 = vadd.f32 %v964, %v965
          %v967 = vrot.slane %v966, 2
          %v968 = vadd.f32 %v966, %v967
          %v969 = vrot.slane %v968, 1
          %v970 = vadd.f32 %v968, %v969
          %v971 = vsel %vm963, %v955, 0.0
          %v972 = vrot.slane %v971, 4
          %v973 = vadd.f32 %v971, %v972
          %v974 = vrot.slane %v973, 2
          %v975 = vadd.f32 %v973, %v974
          %v976 = vrot.slane %v975, 1
          %v977 = vadd.f32 %v975, %v976
          %v978 = vsel %vm963, %v948, 0.0
          %v979 = vrot.slane %v978, 4
          %v980 = vadd.f32 %v978, %v979
          %v981 = vrot.slane %v980, 2
          %v982 = vadd.f32 %v980, %v981
          %v983 = vrot.slane %v982, 1
          %v984 = vadd.f32 %v982, %v983
          %v985 = vsel %vm963, %v956, 0.0
          %v986 = vrot.slane %v985, 4
          %v987 = vadd.f32 %v985, %v986
          %v988 = vrot.slane %v987, 2
          %v989 = vadd.f32 %v987, %v988
          %v990 = vrot.slane %v989, 1
          %v991 = vadd.f32 %v989, %v990
          %v992 = vsel %vm963, %v949, 0.0
          %v993 = vrot.slane %v992, 4
          %v994 = vadd.f32 %v992, %v993
          %v995 = vrot.slane %v994, 2
          %v996 = vadd.f32 %v994, %v995
          %v997 = vrot.slane %v996, 1
          %v998 = vadd.f32 %v996, %v997
          %v999 = vsel %vm963, %v957, 0.0
          %v1000 = vrot.slane %v999, 4
          %v1001 = vadd.f32 %v999, %v1000
          %v1002 = vrot.slane %v1001, 2
          %v1003 = vadd.f32 %v1001, %v1002
          %v1004 = vrot.slane %v1003, 1
          %v1005 = vadd.f32 %v1003, %v1004
          %v1006 = vsel %vm963, %v950, 0.0
          %v1007 = vrot.slane %v1006, 4
          %v1008 = vadd.f32 %v1006, %v1007
          %v1009 = vrot.slane %v1008, 2
          %v1010 = vadd.f32 %v1008, %v1009
          %v1011 = vrot.slane %v1010, 1
          %v1012 = vadd.f32 %v1010, %v1011
          %v1013 = vsel %vm963, %v958, 0.0
          %v1014 = vrot.slane %v1013, 4
          %v1015 = vadd.f32 %v1013, %v1014
          %v1016 = vrot.slane %v1015, 2
          %v1017 = vadd.f32 %v1015, %v1016
          %v1018 = vrot.slane %v1017, 1
          %v1019 = vadd.f32 %v1017, %v1018
          %v1020 = vmul.f32 %v970, 0.25
          %v1021 = vmul.f32 %v977, 0.25
          %v1022 = vmul.f32 %v984, 0.25
          %v1023 = vmul.f32 %v991, 0.25
          %v1024 = vmul.f32 %v998, 0.25
          %v1025 = vmul.f32 %v1005, 0.25
          %v1026 = vmul.f32 %v1012, 0.25
          %v1027 = vmul.f32 %v1019, 0.25
          %vm1036 = vcmask 1041409
          %v1037 = vsel %vm1036, %v1021, %v1020
          %vm1038 = vcmask 1042434
          %v1039 = vsel %vm1038, %v1022, %v1037
          %vm1040 = vcmask 1043459
          %v1041 = vsel %vm1040, %v1023, %v1039
          %vm1042 = vcmask 1044484
          %v1043 = vsel %vm1042, %v1024, %v1041
          %vm1044 = vcmask 1045509
          %v1045 = vsel %vm1044, %v1025, %v1043
          %vm1046 = vcmask 1046534
          %v1047 = vsel %vm1046, %v1026, %v1045
          %vm1048 = vcmask 1047559
          %v1049 = vsel %vm1048, %v1027, %v1047
          %1051 = vst [vmem:[#allocation2] sm:$0xff] %v1049
        $region40: #{tpu_custom_call.1} parent=27 // pred_fallthru
          _
        %v1052 = vld [vmem:[#allocation2] sm:$0xff]
        %v1053 = vld [vmem:[%s173] sm:$0xff]
        %v1054 = vld [vmem:[%s173 + $0x8] sm:$0xff]
        %v1055 = vld [vmem:[%s173 + $0x10] sm:$0xff]
        %v1056 = vld [vmem:[%s173 + $0x18] sm:$0xff]
        %v1057 = vld [vmem:[%s173 + $0x20] sm:$0xff]
        %v1058 = vld [vmem:[%s173 + $0x28] sm:$0xff]
        %v1059 = vld [vmem:[%s173 + $0x30] sm:$0xff]
        %v1060 = vld [vmem:[%s173 + $0x38] sm:$0xff]
        %v1061 = vld [vmem:[%s173 + $0x40] sm:$0xff]
        %v1062 = vld [vmem:[%s173 + $0x48] sm:$0xff]
        %v1063 = vld [vmem:[%s173 + $0x50] sm:$0xff]
        %v1064 = vld [vmem:[%s173 + $0x58] sm:$0xff]
        %v1065 = vld [vmem:[%s173 + $0x60] sm:$0xff]
        %v1066 = vld [vmem:[%s173 + $0x68] sm:$0xff]
        %v1067 = vld [vmem:[%s173 + $0x70] sm:$0xff]
        %v1068 = vld [vmem:[%s173 + $0x78] sm:$0xff]
        %v1069 = vld [vmem:[%s182] sm:$0x1]
        %v1071 = vperm.slane %v1069, 0
        %1073 = vmatpush.msra.mxu0 %v1068
        %1074 = vmatpush.msra.mxu0 %v1067
        %1075 = vmatpush.msra.mxu0 %v1066
        %1076 = vmatpush.msra.mxu0 %v1065
        %1077 = vmatpush.msra.mxu0 %v1064
        %1078 = vmatpush.msra.mxu0 %v1063
        %1079 = vmatpush.msra.mxu0 %v1062
        %1080 = vmatpush.msra.mxu0 %v1061
        %1081 = vmatpush.msra.mxu0 %v1060
        %1082 = vmatpush.msra.mxu0 %v1059
        %1083 = vmatpush.msra.mxu0 %v1058
        %1084 = vmatpush.msra.mxu0 %v1057
        %1085 = vmatpush.msra.mxu0 %v1056
        %1086 = vmatpush.msra.mxu0 %v1055
        %1087 = vmatpush.msra.mxu0 %v1054
        %1088 = vmatpush.msra.mxu0 %v1053
        %1089 = vmatmul.f32.gmra.mxu0 %v1052
        %v1090 = vpop.f32.mrf.mxu0
        %v1091 = vadd.f32 %v1071, %v1090
        %1092 = vdwg.mxu0
        %1093 = vst [vmem:[%s207] sm:$0xff] %v1091
        %s1094 = sand.u32 %s92, 1
        %s1095 = scalar_lea.sflag [#allocation9], %s1094
        %s1096 = sand.u32 %s92, 1
        %s1097 = smul.addr %s1096, 8
        %s1098 = scalar_lea.vmem [#allocation12], %s1097
        // Predicated region
        $region169: #{tpu_custom_call.1} parent=27 // pred_check
          %p1099 = pneg %p102
        $region170: #{tpu_custom_call.1} parent=27 // pred_check_branch
          %1101 = sbr.rel (%p1099) target = $region172
        $region171: #{tpu_custom_call.1} parent=27 // pred_region
          %1103 = vsyncadd %s1095, 0
          %s1104 = smul.addr %s32, 8
          %s1105 = scalar_lea.hbm %s4, %s1104
          %s1107 = sshll.u32 %s1098, 4
          %s1108 = int_to_ptr.vmem [resolvable:$true] %s1107
          %s1109 = sshll.u32 %s1105, 4
          %s1110 = int_to_ptr.hbm [resolvable:$true] %s1109
          %1112 = dma.vmem_to_hbm [thread:$0]  %s1108, 128, %s1110, %s1095
        $region172: #{tpu_custom_call.1} parent=27 // pred_fallthru
          _
      $region28: #{tpu_custom_call.1} parent=5 // pred_fallthru
        _
      %p1113 = scmp.le.s32.totalorder 2, %s27
      // Predicated region
      $region173: #{tpu_custom_call.1} parent=5 // pred_check
        %p1114 = pneg %p1113
      $region174: #{tpu_custom_call.1} parent=5 // pred_check_branch
        %1116 = sbr.rel (%p1114) target = $region176
      $region175: #{tpu_custom_call.1} parent=5 // pred_region
        %s1117 = ssub.s32 %s27, 2
        // Predicated region
        $region177: #{tpu_custom_call.1} parent=175 // pred_check
          %p1118 = pneg %p108
        $region178: #{tpu_custom_call.1} parent=175 // pred_check_branch
          %1120 = sbr.rel (%p1118) target = $region180
        $region179: #{tpu_custom_call.1} parent=175 // pred_region
          %s1121 = sand.u32 %s93, 1
          %s1122 = scalar_lea.sflag [#allocation9], %s1121
          %s1123 = sand.u32 %s93, 1
          %s1124 = smul.addr %s1123, 8
          %s1125 = scalar_lea.vmem [#allocation12], %s1124
          %1127 = dma.done %s1122, 128
        $region180: #{tpu_custom_call.1} parent=175 // pred_fallthru
          _
      $region176: #{tpu_custom_call.1} parent=5 // pred_fallthru
        _
    $region6: #{tpu_custom_call.1} parent=1 // loop_footer
      %s31 = sadd.s32 1, %s27
    $region7: #{tpu_custom_call.1} parent=1 // loop_footer_branch
      %26 = sbr.rel target = $region3
    $region8: #{tpu_custom_call.1} parent=1 // loop_exit
      _
    %1128 = vsyncpa [#allocation8], 1
    %s1129 = scalar_lea.sflag [#allocation8], 1
    %1130 = vsyncpa %s1129, 1
    %1131 = vsyncpa [#allocation11], 1
    %s1132 = scalar_lea.sflag [#allocation11], 1
    %1133 = vsyncpa %s1132, 1
    %1134 = vsyncpa [#allocation9], 1
    %s1135 = scalar_lea.sflag [#allocation9], 1
    %1136 = vsyncpa %s1135, 1
  %1137 = vsyncmov [#allocation4]
  %s1138 = vpop.sfrf %1137
  %p1139 = scmp.eq.s32.totalorder %s1138, 0
  %p1140 = pneg %p1139
  %1142 = shalt.err (%p1140)
  %s1143 = scalar_lea.sflag [#allocation4], 1
  %1144 = vsyncmov %s1143
  %s1145 = vpop.sfrf %1144
  %p1146 = scmp.eq.s32.totalorder %s1145, 0
  %p1147 = pneg %p1146
  %1149 = shalt.err (%p1147)
  %s1150 = scalar_lea.sflag [#allocation4], 2
  %1151 = vsyncmov %s1150
  %s1152 = vpop.sfrf %1151
  %p1153 = scmp.eq.s32.totalorder %s1152, 0
  %p1154 = pneg %p1153
  %1156 = shalt.err (%p1154)
  %s1157 = scalar_lea.sflag [#allocation4], 3
  %1158 = vsyncmov %s1157
  %s1159 = vpop.sfrf %1158
  %p1160 = scmp.eq.s32.totalorder %s1159, 0
  %p1161 = pneg %p1160
  %1163 = shalt.err (%p1161)
  %s1164 = scalar_lea.sflag [#allocation4], 4
  %1165 = vsyncmov %s1164
  %s1166 = vpop.sfrf %1165
  %p1167 = scmp.eq.s32.totalorder %s1166, 0
  %p1168 = pneg %p1167
  %1170 = shalt.err (%p1168)
  %s1171 = scalar_lea.sflag [#allocation4], 5
  %1172 = vsyncmov %s1171
  %s1173 = vpop.sfrf %1172
  %p1174 = scmp.eq.s32.totalorder %s1173, 0
  %p1175 = pneg %p1174
  %1177 = shalt.err (%p1175)
  %s1178 = scalar_lea.sflag [#allocation4], 6
  %1179 = vsyncmov %s1178
  %s1180 = vpop.sfrf %1179
  %p1181 = scmp.eq.s32.totalorder %s1180, 0
  %p1182 = pneg %p1181
  %1184 = shalt.err (%p1182)
  %s1185 = scalar_lea.sflag [#allocation4], 7
  %1186 = vsyncmov %s1185
  %s1187 = vpop.sfrf %1186
  %p1188 = scmp.eq.s32.totalorder %s1187, 0
  %p1189 = pneg %p1188
  %1191 = shalt.err (%p1189)
  %s1192 = scalar_lea.sflag [#allocation4], 8
  %1193 = vsyncmov %s1192
  %s1194 = vpop.sfrf %1193
  %p1195 = scmp.eq.s32.totalorder %s1194, 0
  %p1196 = pneg %p1195
  %1198 = shalt.err (%p1196)
  %s1199 = scalar_lea.sflag [#allocation4], 9
  %1200 = vsyncmov %s1199
  %s1201 = vpop.sfrf %1200
  %p1202 = scmp.eq.s32.totalorder %s1201, 0
  %p1203 = pneg %p1202
  %1205 = shalt.err (%p1203)
  %s1206 = scalar_lea.sflag [#allocation4], 10
  %1207 = vsyncmov %s1206
  %s1208 = vpop.sfrf %1207
  %p1209 = scmp.eq.s32.totalorder %s1208, 0
  %p1210 = pneg %p1209
  %1212 = shalt.err (%p1210)
  %s1213 = scalar_lea.sflag [#allocation4], 11
  %1214 = vsyncmov %s1213
  %s1215 = vpop.sfrf %1214
  %p1216 = scmp.eq.s32.totalorder %s1215, 0
  %p1217 = pneg %p1216
  %1219 = shalt.err (%p1217)
  %s1220 = scalar_lea.sflag [#allocation4], 12
  %1221 = vsyncmov %s1220
  %s1222 = vpop.sfrf %1221
  %p1223 = scmp.eq.s32.totalorder %s1222, 0
  %p1224 = pneg %p1223
  %1226 = shalt.err (%p1224)
  %s1227 = scalar_lea.sflag [#allocation4], 13
  %1228 = vsyncmov %s1227
  %s1229 = vpop.sfrf %1228
  %p1230 = scmp.eq.s32.totalorder %s1229, 0
  %p1231 = pneg %p1230
  %1233 = shalt.err (%p1231)
  %s1234 = scalar_lea.sflag [#allocation4], 14
  %1235 = vsyncmov %s1234
  %s1236 = vpop.sfrf %1235
  %p1237 = scmp.eq.s32.totalorder %s1236, 0
  %p1238 = pneg %p1237
  %1240 = shalt.err (%p1238)
  %s1241 = scalar_lea.sflag [#allocation4], 15
  %1242 = vsyncmov %s1241
  %s1243 = vpop.sfrf %1242
  %p1244 = scmp.eq.s32.totalorder %s1243, 0
  %p1245 = pneg %p1244
  %1247 = shalt.err (%p1245)
  %s1248 = scalar_lea.sflag [#allocation4], 16
  %1249 = vsyncmov %s1248
  %s1250 = vpop.sfrf %1249
  %p1251 = scmp.eq.s32.totalorder %s1250, 0
  %p1252 = pneg %p1251
  %1254 = shalt.err (%p1252)
  %s1255 = scalar_lea.sflag [#allocation4], 17
  %1256 = vsyncmov %s1255
  %s1257 = vpop.sfrf %1256
  %p1258 = scmp.eq.s32.totalorder %s1257, 0
  %p1259 = pneg %p1258
  %1261 = shalt.err (%p1259)
  %s1262 = scalar_lea.sflag [#allocation4], 18
  %1263 = vsyncmov %s1262
  %s1264 = vpop.sfrf %1263
  %p1265 = scmp.eq.s32.totalorder %s1264, 0
  %p1266 = pneg %p1265
  %1268 = shalt.err (%p1266)
  %s1269 = scalar_lea.sflag [#allocation4], 19
  %1270 = vsyncmov %s1269
  %s1271 = vpop.sfrf %1270
  %p1272 = scmp.eq.s32.totalorder %s1271, 0
  %p1273 = pneg %p1272
  %1275 = shalt.err (%p1273)
  %s1276 = scalar_lea.sflag [#allocation4], 20
  %1277 = vsyncmov %s1276
  %s1278 = vpop.sfrf %1277
  %p1279 = scmp.eq.s32.totalorder %s1278, 0
  %p1280 = pneg %p1279
  %1282 = shalt.err (%p1280)
  %s1283 = scalar_lea.sflag [#allocation4], 21
  %1284 = vsyncmov %s1283
  %s1285 = vpop.sfrf %1284
  %p1286 = scmp.eq.s32.totalorder %s1285, 0
  %p1287 = pneg %p1286
  %1289 = shalt.err (%p1287)
  %s1290 = scalar_lea.sflag [#allocation4], 22
  %1291 = vsyncmov %s1290
  %s1292 = vpop.sfrf %1291
  %p1293 = scmp.eq.s32.totalorder %s1292, 0
  %p1294 = pneg %p1293
  %1296 = shalt.err (%p1294)
  %s1297 = scalar_lea.sflag [#allocation4], 23
  %1298 = vsyncmov %s1297
  %s1299 = vpop.sfrf %1298
  %p1300 = scmp.eq.s32.totalorder %s1299, 0
  %p1301 = pneg %p1300
  %1303 = shalt.err (%p1301)
  %s1304 = scalar_lea.sflag [#allocation4], 24
  %1305 = vsyncmov %s1304
  %s1306 = vpop.sfrf %1305
  %p1307 = scmp.eq.s32.totalorder %s1306, 0
  %p1308 = pneg %p1307
  %1310 = shalt.err (%p1308)
  %s1311 = scalar_lea.sflag [#allocation4], 25
  %1312 = vsyncmov %s1311
  %s1313 = vpop.sfrf %1312
  %p1314 = scmp.eq.s32.totalorder %s1313, 0
  %p1315 = pneg %p1314
  %1317 = shalt.err (%p1315)
  %s1318 = scalar_lea.sflag [#allocation4], 26
  %1319 = vsyncmov %s1318
  %s1320 = vpop.sfrf %1319
  %p1321 = scmp.eq.s32.totalorder %s1320, 0
  %p1322 = pneg %p1321
  %1324 = shalt.err (%p1322)
  %s1325 = scalar_lea.sflag [#allocation4], 27
  %1326 = vsyncmov %s1325
  %s1327 = vpop.sfrf %1326
  %p1328 = scmp.eq.s32.totalorder %s1327, 0
  %p1329 = pneg %p1328
  %1331 = shalt.err (%p1329)
  %s1332 = scalar_lea.sflag [#allocation4], 28
  %1333 = vsyncmov %s1332
  %s1334 = vpop.sfrf %1333
  %p1335 = scmp.eq.s32.totalorder %s1334, 0
  %p1336 = pneg %p1335
  %1338 = shalt.err (%p1336)
  %s1339 = scalar_lea.sflag [#allocation4], 29
  %1340 = vsyncmov %s1339
  %s1341 = vpop.sfrf %1340
  %p1342 = scmp.eq.s32.totalorder %s1341, 0
  %p1343 = pneg %p1342
  %1345 = shalt.err (%p1343)
  %s1346 = scalar_lea.sflag [#allocation4], 30
  %1347 = vsyncmov %s1346
  %s1348 = vpop.sfrf %1347
  %p1349 = scmp.eq.s32.totalorder %s1348, 0
  %p1350 = pneg %p1349
  %1352 = shalt.err (%p1350)
  %s1353 = scalar_lea.sflag [#allocation4], 31
  %1354 = vsyncmov %s1353
  %s1355 = vpop.sfrf %1354
  %p1356 = scmp.eq.s32.totalorder %s1355, 0
  %p1357 = pneg %p1356
  %1359 = shalt.err (%p1357)

</llo_original>
